<compile_context>
chip_gen: v5e
topology: v5e:2x2
jax: 0.10.0
libtpu: 0.0.40
codegen_flags: <defaults>
</compile_context>

<pallas_src>
import functools

import jax
import jax.numpy as jnp
import numpy as np
from jax.experimental import pallas as pl
from jax.experimental.pallas import tpu as pltpu


# ----------------------------------------------------------------------------------
# math helpers
# ----------------------------------------------------------------------------------
def _layer_norm(x, gamma, beta, eps=1e-5):
    # x: (L, D); gamma/beta: (1, D)
    mean = jnp.mean(x, axis=-1, keepdims=True)
    var = jnp.mean((x - mean) ** 2, axis=-1, keepdims=True)
    return (x - mean) * jax.lax.rsqrt(var + eps) * gamma + beta


def _flash_attention(q, kT_ref, v_ref, mask_fn, num_heads, wo, bo, block_k):
    """Head-batched attention over cached (pre-transposed) K / V with online softmax.

    q:      (Tq, D) f32 (query rows of this tile)
    kT_ref: (H, dh, Tk) bf16 VMEM scratch (K cache, pre-transposed per head)
    v_ref:  (H, Tk, dh) bf16 VMEM scratch (V cache)
    mask_fn(k0, bk) -> additive f32 mask broadcastable to (Tq, bk) (0 keep, -1e9 mask)
    wo: (D, D) bf16; bo: (1, D) f32.
    """
    Tq, D = q.shape
    H = num_heads
    dh = D // H
    Tk = kT_ref.shape[2]
    bf16 = jnp.bfloat16
    scale = jnp.float32(1.0 / np.sqrt(dh))

    # Fold the 1/sqrt(dh) scale into Q (Tq*D multiply instead of H*Tq*Tk score scaling).
    qh = pltpu.einshape("qhd->hqd", (q * scale).reshape(Tq, H, dh)).astype(bf16)

    m = jnp.full((H, Tq, 1), -jnp.inf, jnp.float32)
    l = jnp.zeros((H, Tq, 1), jnp.float32)
    acc = jnp.zeros((H, Tq, dh), jnp.float32)

    nk = Tk // block_k
    # Static unroll (chunk count is compile-time known and small at these sizes).
    # TODO(synk): switch to lax.fori_loop(..., unroll=True) carries for very long Tk.
    for ki in range(nk):
        k0 = ki * block_k
        kc = kT_ref[:, :, k0:k0 + block_k]        # (H, dh, bk) bf16, pre-transposed
        vc = v_ref[:, k0:k0 + block_k, :]         # (H, bk, dh) bf16
        s = jnp.einsum("hqd,hdk->hqk", qh, kc,
                       preferred_element_type=jnp.float32)         # (H, Tq, bk)
        s = s + mask_fn(k0, block_k)[None]
        m_new = jnp.maximum(m, jnp.max(s, axis=-1, keepdims=True))
        alpha = jnp.exp(m - m_new)
        p = jnp.exp(s - m_new)
        l = alpha * l + jnp.sum(p, axis=-1, keepdims=True)
        acc = alpha * acc + jnp.einsum("hqk,hkd->hqd", p.astype(bf16), vc,
                                       preferred_element_type=jnp.float32)
        m = m_new

    # approx reciprocal goes to the EUP slot (~free); ~2^-12 rel. error per row.
    o = acc * pl.reciprocal(l, approx=True)
    o = pltpu.einshape("hqd->qhd", o).reshape(Tq, D)
    return jnp.dot(o.astype(bf16), wo, preferred_element_type=jnp.float32) + bo


# ----------------------------------------------------------------------------------
# Pallas kernel: one (batch element, query tile) per grid step
# ----------------------------------------------------------------------------------
def decoder_block_kernel(
        x_ref, enc_ref, tmask_ref, mmask_ref,
        n1g_ref, n1b_ref, wqkv1_ref, bqkv1_ref, wo1_ref, bo1_ref,
        n2g_ref, n2b_ref, wq2_ref, bq2_ref, wkv2_ref, bkv2_ref, wo2_ref, bo2_ref,
        n3g_ref, n3b_ref, wf1_ref, bf1_ref, wf2_ref, bf2_ref,
        out_ref,
        kT1_sc, v1_sc, kT2_sc, v2_sc,
        *, num_heads, block_q, block_k_self, block_k_cross):
    T, D = x_ref.shape[1], x_ref.shape[2]
    S = enc_ref.shape[1]
    H = num_heads
    dh = D // H
    f32 = jnp.float32
    bf16 = jnp.bfloat16
    neg = jnp.float32(-1e9)

    qi = pl.program_id(1)
    q0 = pl.multiple_of(qi * block_q, block_q)

    n1g, n1b = n1g_ref[...], n1b_ref[...]

    # ---- K/V caches: built once per batch element, reused for every query tile ----
    @pl.when(qi == 0)
    def _build_kv():
        # self-attn K/V from the pre-normed full target sequence
        x_full = x_ref[0].astype(f32)                              # (T, D)
        xn_full = _layer_norm(x_full, n1g, n1b)
        kv = jnp.dot(xn_full.astype(bf16), wqkv1_ref[:, D:],
                     preferred_element_type=f32) + bqkv1_ref[:, D:]
        k, v = kv[:, :D], kv[:, D:]
        kT1_sc[...] = k.T.reshape(H, dh, T).astype(bf16)           # (H, dh, T)
        v1_sc[...] = pltpu.einshape("khd->hkd", v.reshape(T, H, dh)).astype(bf16)

        # cross-attn K/V from the (un-normed) encoder output
        enc = enc_ref[0].astype(f32)                               # (S, D)
        kv2 = jnp.dot(enc.astype(bf16), wkv2_ref[...],
                      preferred_element_type=f32) + bkv2_ref[...]
        k2, v2 = kv2[:, :D], kv2[:, D:]
        kT2_sc[...] = k2.T.reshape(H, dh, S).astype(bf16)          # (H, dh, S)
        v2_sc[...] = pltpu.einshape("shd->hsd", v2.reshape(S, H, dh)).astype(bf16)

    tmask = tmask_ref[0]                       # (1, T)  1 = valid key
    mmask = mmask_ref[0]                       # (1, S)  1 = valid key

    # --- self-attention sublayer (pre-norm, causal) ---
    x_q = x_ref[0, pl.ds(q0, block_q), :].astype(f32)              # residual base
    xn_q = _layer_norm(x_q, n1g, n1b)
    q1 = jnp.dot(xn_q.astype(bf16), wqkv1_ref[:, :D],
                 preferred_element_type=f32) + bqkv1_ref[:, :D]

    def self_mask(k0, bk):
        row = q0 + jax.lax.broadcasted_iota(jnp.int32, (block_q, bk), 0)
        col = k0 + jax.lax.broadcasted_iota(jnp.int32, (block_q, bk), 1)
        keep = (row >= col) & (tmask[:, k0:k0 + bk] > 0.0)
        return jnp.where(keep, 0.0, neg)

    sa = _flash_attention(q1, kT1_sc, v1_sc, self_mask, H,
                          wo1_ref[...], bo1_ref[...], block_k_self)
    x = x_q + sa          # dropout1 = identity (eval)

    # --- cross-attention sublayer (pre-norm, keys/values from encoder) ---
    xn = _layer_norm(x, n2g_ref[...], n2b_ref[...])
    q2 = jnp.dot(xn.astype(bf16), wq2_ref[...],
                 preferred_element_type=f32) + bq2_ref[...]

    def cross_mask(k0, bk):
        return jnp.where(mmask[:, k0:k0 + bk] > 0.0, 0.0, neg)

    ca = _flash_attention(q2, kT2_sc, v2_sc, cross_mask, H,
                          wo2_ref[...], bo2_ref[...], block_k_cross)
    x = x + ca            # dropout2 = identity (eval)

    # --- feed-forward sublayer (pre-norm, Linear -> ReLU -> Linear) ---
    xn = _layer_norm(x, n3g_ref[...], n3b_ref[...])
    h = jnp.maximum(
        jnp.dot(xn.astype(bf16), wf1_ref[...],
                preferred_element_type=f32) + bf1_ref[...], 0.0)
    f = jnp.dot(h.astype(bf16), wf2_ref[...],
                preferred_element_type=f32) + bf2_ref[...]
    x = x + f             # dropout3 = identity (eval)

    out_ref[0] = x.astype(out_ref.dtype)


# ----------------------------------------------------------------------------------
# wrapper
# ----------------------------------------------------------------------------------
def _vmem_capacity_bytes():
    try:
        return int(pltpu.get_tpu_info().vmem_capacity_bytes)
    except Exception:
        return 128 * 1024 * 1024


def _divisor_tile(total, pref):
    # TODO(synk): pad ragged sequences to a tile multiple instead of collapsing.
    if pref >= total or total % pref != 0:
        return total
    return pref


def _single_buffer_kwargs():
    # Grid-invariant weights never change block index -> double-buffering them only
    # wastes VMEM; single-buffer when the jax version supports pipeline_mode.
    try:
        pl.BlockSpec((8, 128), lambda i: (0, 0), pipeline_mode=pl.Buffered(1))
        return {"pipeline_mode": pl.Buffered(1)}
    except Exception:
        return {}


def transformer_decoder_block(x, enc, tgt_mask, mem_mask, params, num_heads,
                              block_q=None, block_k=512):
    """x: (B, T, D) f32; enc: (B, S, D) f32; masks: (B, 1, L) f32 (1=valid, 0=pad)."""
    B, T, D = x.shape
    S = enc.shape[1]
    assert D % num_heads == 0
    dh = D // num_heads

    (n1g, n1b,
     wq1, bq1, wk1, bk1, wv1, bv1, wo1, bo1,
     n2g, n2b,
     wq2, bq2, wk2, bk2, wv2, bv2, wo2, bo2,
     n3g, n3b,
     wf1, bf1, wf2, bf2) = params

    # Pack + cast weights once on the host side (free XLA ops outside the kernel).
    wdt = jnp.bfloat16
    wqkv1 = jnp.concatenate([wq1, wk1, wv1], axis=1).astype(wdt)   # (D, 3D)
    bqkv1 = jnp.concatenate([bq1, bk1, bv1], axis=1)               # (1, 3D) f32
    wkv2 = jnp.concatenate([wk2, wv2], axis=1).astype(wdt)         # (D, 2D)
    bkv2 = jnp.concatenate([bk2, bv2], axis=1)                     # (1, 2D) f32
    packed = [n1g, n1b, wqkv1, bqkv1, wo1.astype(wdt), bo1,
              n2g, n2b, wq2.astype(wdt), bq2, wkv2, bkv2, wo2.astype(wdt), bo2,
              n3g, n3b, wf1.astype(wdt), bf1, wf2.astype(wdt), bf2]

    # Activations travel as bf16 (half the DMA bytes / VMEM residency); layer-norm
    # statistics are still computed in f32 inside the kernel.
    x_bf = x.astype(jnp.bfloat16)
    enc_bf = enc.astype(jnp.bfloat16)

    # Generation-aware limits: ~80% of physical VMEM (<= ~51 MiB on v7x's 64 MiB,
    # ~100 MiB on v5e/v6e's 128 MiB), bigger query tiles where VMEM allows.
    vmem_cap = _vmem_capacity_bytes()
    vmem_limit = min(int(vmem_cap * 0.8), 100 * 1024 * 1024)
    if block_q is None:
        block_q = 256 if vmem_cap >= (100 << 20) else 128

    block_q = _divisor_tile(T, block_q)
    block_k_self = _divisor_tile(T, block_k)
    block_k_cross = _divisor_tile(S, block_k)
    num_q = T // block_q

    buf1 = _single_buffer_kwargs()

    def weight_spec(shape):
        return pl.BlockSpec(shape, lambda b, q: (0,) * len(shape), **buf1)

    # x / enc use a constant-per-batch block index, so Pallas DMAs them once per
    # batch element (not once per query tile).
    in_specs = [
        pl.BlockSpec((1, T, D), lambda b, q: (b, 0, 0)),   # x (queries + SA K/V source)
        pl.BlockSpec((1, S, D), lambda b, q: (b, 0, 0)),   # encoder_output
        pl.BlockSpec((1, 1, T), lambda b, q: (b, 0, 0)),   # tgt_padding_mask
        pl.BlockSpec((1, 1, S), lambda b, q: (b, 0, 0)),   # memory_padding_mask
    ] + [weight_spec(p.shape) for p in packed]

    out_spec = pl.BlockSpec((1, block_q, D), lambda b, q: (b, q, 0))

    kernel = functools.partial(decoder_block_kernel, num_heads=num_heads,
                               block_q=block_q, block_k_self=block_k_self,
                               block_k_cross=block_k_cross)
    return pl.pallas_call(
        kernel,
        out_shape=jax.ShapeDtypeStruct((B, T, D), jnp.float32),
        grid_spec=pltpu.PrefetchScalarGridSpec(
            num_scalar_prefetch=0,
            grid=(B, num_q),
            in_specs=in_specs,
            out_specs=out_spec,
            scratch_shapes=[
                pltpu.VMEM((num_heads, dh, T), jnp.bfloat16),   # self-attn K^T cache
                pltpu.VMEM((num_heads, T, dh), jnp.bfloat16),   # self-attn V cache
                pltpu.VMEM((num_heads, dh, S), jnp.bfloat16),   # cross-attn K^T cache
                pltpu.VMEM((num_heads, S, dh), jnp.bfloat16),   # cross-attn V cache
            ],
        ),
        compiler_params=pltpu.CompilerParams(
            # q axis carries the per-batch K/V scratch -> must be "arbitrary";
            # batch stays "parallel" for megacore sharding.
            dimension_semantics=("parallel", "arbitrary"),
            vmem_limit_bytes=vmem_limit,
        ),
    )(x_bf, enc_bf, tgt_mask, mem_mask, *packed)


# ----------------------------------------------------------------------------------
# plain-JAX f32 reference (per-head loop) for the correctness check
# ----------------------------------------------------------------------------------
def _mha_ref(q_in, k_in, v_in, wq, bq, wk, bk, wv, bv, wo, bo,
             key_mask, num_heads, causal):
    Tq, D = q_in.shape
    Tk = k_in.shape[0]
    dh = D // num_heads
    scale = jnp.float32(1.0 / np.sqrt(dh))
    neg_inf = jnp.float32(-1e9)
    q = jnp.dot(q_in, wq) + bq
    k = jnp.dot(k_in, wk) + bk
    v = jnp.dot(v_in, wv) + bv
    heads = []
    for h in range(num_heads):
        qh = q[:, h * dh:(h + 1) * dh]
        kh = k[:, h * dh:(h + 1) * dh]
        vh = v[:, h * dh:(h + 1) * dh]
        s = jnp.dot(qh, kh.T) * scale
        s = jnp.where(key_mask > 0, s, neg_inf)
        if causal:
            ri = jax.lax.broadcasted_iota(jnp.int32, (Tq, Tk), 0)
            ci = jax.lax.broadcasted_iota(jnp.int32, (Tq, Tk), 1)
            s = jnp.where(ri >= ci, s, neg_inf)
        s = s - jnp.max(s, axis=-1, keepdims=True)
        p = jnp.exp(s)
        p = p / jnp.sum(p, axis=-1, keepdims=True)
        heads.append(jnp.dot(p, vh))
    concat = jnp.concatenate(heads, axis=-1)
    return jnp.dot(concat, wo) + bo


def reference_block(x, enc, tgt_mask, mem_mask, params, num_heads):
    (n1g, n1b,
     wq1, bq1, wk1, bk1, wv1, bv1, wo1, bo1,
     n2g, n2b,
     wq2, bq2, wk2, bk2, wv2, bv2, wo2, bo2,
     n3g, n3b,
     wf1, bf1, wf2, bf2) = params
    outs = []
    for b in range(x.shape[0]):
        xb, eb = x[b], enc[b]
        tm, mm = tgt_mask[b], mem_mask[b]
        xn = _layer_norm(xb, n1g, n1b)
        xb = xb + _mha_ref(xn, xn, xn, wq1, bq1, wk1, bk1, wv1, bv1, wo1, bo1,
                           tm, num_heads, True)
        xn = _layer_norm(xb, n2g, n2b)
        xb = xb + _mha_ref(xn, eb, eb, wq2, bq2, wk2, bk2, wv2, bv2, wo2, bo2,
                           mm, num_heads, False)
        xn = _layer_norm(xb, n3g, n3b)
        h = jnp.maximum(jnp.dot(xn, wf1) + bf1, 0.0)
        xb = xb + jnp.dot(h, wf2) + bf2
        outs.append(xb)
    return jnp.stack(outs, axis=0)


# ----------------------------------------------------------------------------------
def make_params(key, d_model, dim_ff):
    keys = iter(jax.random.split(key, 64))

    def lin(fin, fout):
        w = jax.random.normal(next(keys), (fin, fout), jnp.float32) / np.sqrt(fin)
        b = jax.random.normal(next(keys), (1, fout), jnp.float32) * 0.02
        return w, b

    def norm():
        return jnp.ones((1, d_model), jnp.float32), jnp.zeros((1, d_model), jnp.float32)

    n1g, n1b = norm()
    wq1, bq1 = lin(d_model, d_model)
    wk1, bk1 = lin(d_model, d_model)
    wv1, bv1 = lin(d_model, d_model)
    wo1, bo1 = lin(d_model, d_model)
    n2g, n2b = norm()
    wq2, bq2 = lin(d_model, d_model)
    wk2, bk2 = lin(d_model, d_model)
    wv2, bv2 = lin(d_model, d_model)
    wo2, bo2 = lin(d_model, d_model)
    n3g, n3b = norm()
    wf1, bf1 = lin(d_model, dim_ff)
    wf2, bf2 = lin(dim_ff, d_model)
    return [n1g, n1b,
            wq1, bq1, wk1, bk1, wv1, bv1, wo1, bo1,
            n2g, n2b,
            wq2, bq2, wk2, bk2, wv2, bv2, wo2, bo2,
            n3g, n3b,
            wf1, bf1, wf2, bf2]


if __name__ == "__main__":
    B, T, S, D, H, FF = 2, 8, 8, 32, 4, 64

    key = jax.random.PRNGKey(0)
    kx, ke, kp = jax.random.split(key, 3)
    x = jax.random.normal(kx, (B, T, D), jnp.float32)
    enc = jax.random.normal(ke, (B, S, D), jnp.float32)

    # padding masks: 1 = valid token, 0 = padded key position
    tgt_mask = jnp.ones((B, 1, T), jnp.float32)
    mem_mask = jnp.ones((B, 1, S), jnp.float32).at[1, 0, S - 1].set(0.0)

    params = make_params(kp, D, FF)

    out = transformer_decoder_block(x, enc, tgt_mask, mem_mask, params, num_heads=H)
    out = jax.block_until_ready(out)

    ref = reference_block(x, enc, tgt_mask, mem_mask, params, num_heads=H)
    # bf16 activations/weights + online softmax + approx reciprocal in the kernel
    # vs. the f32 reference: loose-but-meaningful tolerance.
    np.testing.assert_allclose(np.asarray(out), np.asarray(ref), rtol=5e-2, atol=5e-2)

    print("KERNEL_OK")
</pallas_src>

<mosaic_0001>
module attributes {stable_mosaic.version = 11 : i64} {
  func.func @decoder_block_kernel(%arg0: i32, %arg1: i32, %arg2: memref<1x8x32xbf16, #tpu.memory_space<vmem>>, %arg3: memref<1x8x32xbf16, #tpu.memory_space<vmem>>, %arg4: memref<1x1x8xf32, #tpu.memory_space<vmem>>, %arg5: memref<1x1x8xf32, #tpu.memory_space<vmem>>, %arg6: memref<1x32xf32, #tpu.memory_space<vmem>>, %arg7: memref<1x32xf32, #tpu.memory_space<vmem>>, %arg8: memref<32x96xbf16, #tpu.memory_space<vmem>>, %arg9: memref<1x96xf32, #tpu.memory_space<vmem>>, %arg10: memref<32x32xbf16, #tpu.memory_space<vmem>>, %arg11: memref<1x32xf32, #tpu.memory_space<vmem>>, %arg12: memref<1x32xf32, #tpu.memory_space<vmem>>, %arg13: memref<1x32xf32, #tpu.memory_space<vmem>>, %arg14: memref<32x32xbf16, #tpu.memory_space<vmem>>, %arg15: memref<1x32xf32, #tpu.memory_space<vmem>>, %arg16: memref<32x64xbf16, #tpu.memory_space<vmem>>, %arg17: memref<1x64xf32, #tpu.memory_space<vmem>>, %arg18: memref<32x32xbf16, #tpu.memory_space<vmem>>, %arg19: memref<1x32xf32, #tpu.memory_space<vmem>>, %arg20: memref<1x32xf32, #tpu.memory_space<vmem>>, %arg21: memref<1x32xf32, #tpu.memory_space<vmem>>, %arg22: memref<32x64xbf16, #tpu.memory_space<vmem>>, %arg23: memref<1x64xf32, #tpu.memory_space<vmem>>, %arg24: memref<64x32xbf16, #tpu.memory_space<vmem>>, %arg25: memref<1x32xf32, #tpu.memory_space<vmem>>, %arg26: memref<1x8x32xf32, #tpu.memory_space<vmem>>, %arg27: memref<4x8x8xbf16, #tpu.memory_space<vmem>>, %arg28: memref<4x8x8xbf16, #tpu.memory_space<vmem>>, %arg29: memref<4x8x8xbf16, #tpu.memory_space<vmem>>, %arg30: memref<4x8x8xbf16, #tpu.memory_space<vmem>>) attributes {dimension_semantics = [#tpu.dimension_semantics<parallel>, #tpu.dimension_semantics<arbitrary>], iteration_bounds = array<i64: 2, 1>, scalar_prefetch = 0 : i64, scratch_operands = 4 : i64, tpu.core_type = #tpu.core_type<tc>, window_params = [{transform_indices = @transform_0, window_bounds = array<i64: 1, 8, 32>}, {transform_indices = @transform_1, window_bounds = array<i64: 1, 8, 32>}, {transform_indices = @transform_2, window_bounds = array<i64: 1, 1, 8>}, {transform_indices = @transform_3, window_bounds = array<i64: 1, 1, 8>}, {pipeline_mode = #tpu.pipeline_mode<synchronous>, transform_indices = @transform_4, window_bounds = array<i64: 1, 32>}, {pipeline_mode = #tpu.pipeline_mode<synchronous>, transform_indices = @transform_5, window_bounds = array<i64: 1, 32>}, {pipeline_mode = #tpu.pipeline_mode<synchronous>, transform_indices = @transform_6, window_bounds = array<i64: 32, 96>}, {pipeline_mode = #tpu.pipeline_mode<synchronous>, transform_indices = @transform_7, window_bounds = array<i64: 1, 96>}, {pipeline_mode = #tpu.pipeline_mode<synchronous>, transform_indices = @transform_8, window_bounds = array<i64: 32, 32>}, {pipeline_mode = #tpu.pipeline_mode<synchronous>, transform_indices = @transform_9, window_bounds = array<i64: 1, 32>}, {pipeline_mode = #tpu.pipeline_mode<synchronous>, transform_indices = @transform_10, window_bounds = array<i64: 1, 32>}, {pipeline_mode = #tpu.pipeline_mode<synchronous>, transform_indices = @transform_11, window_bounds = array<i64: 1, 32>}, {pipeline_mode = #tpu.pipeline_mode<synchronous>, transform_indices = @transform_12, window_bounds = array<i64: 32, 32>}, {pipeline_mode = #tpu.pipeline_mode<synchronous>, transform_indices = @transform_13, window_bounds = array<i64: 1, 32>}, {pipeline_mode = #tpu.pipeline_mode<synchronous>, transform_indices = @transform_14, window_bounds = array<i64: 32, 64>}, {pipeline_mode = #tpu.pipeline_mode<synchronous>, transform_indices = @transform_15, window_bounds = array<i64: 1, 64>}, {pipeline_mode = #tpu.pipeline_mode<synchronous>, transform_indices = @transform_16, window_bounds = array<i64: 32, 32>}, {pipeline_mode = #tpu.pipeline_mode<synchronous>, transform_indices = @transform_17, window_bounds = array<i64: 1, 32>}, {pipeline_mode = #tpu.pipeline_mode<synchronous>, transform_indices = @transform_18, window_bounds = array<i64: 1, 32>}, {pipeline_mode = #tpu.pipeline_mode<synchronous>, transform_indices = @transform_19, window_bounds = array<i64: 1, 32>}, {pipeline_mode = #tpu.pipeline_mode<synchronous>, transform_indices = @transform_20, window_bounds = array<i64: 32, 64>}, {pipeline_mode = #tpu.pipeline_mode<synchronous>, transform_indices = @transform_21, window_bounds = array<i64: 1, 64>}, {pipeline_mode = #tpu.pipeline_mode<synchronous>, transform_indices = @transform_22, window_bounds = array<i64: 64, 32>}, {pipeline_mode = #tpu.pipeline_mode<synchronous>, transform_indices = @transform_23, window_bounds = array<i64: 1, 32>}, {transform_indices = @transform_24, window_bounds = array<i64: 1, 8, 32>}]} {
    %c8_i32 = arith.constant 8 : i32
    %0 = arith.muli %arg1, %c8_i32 : i32
    %1 = tpu.assume_multiple %0, 8 : i32
    %c0 = arith.constant 0 : index
    %c0_0 = arith.constant 0 : index
    %2 = vector.load %arg6[%c0, %c0_0] : memref<1x32xf32, #tpu.memory_space<vmem>>, vector<1x32xf32>
    %c0_1 = arith.constant 0 : index
    %c0_2 = arith.constant 0 : index
    %3 = vector.load %arg7[%c0_1, %c0_2] : memref<1x32xf32, #tpu.memory_space<vmem>>, vector<1x32xf32>
    %c0_i32 = arith.constant 0 : i32
    %4 = arith.cmpi eq, %arg1, %c0_i32 : i32
    %5 = arith.extui %4 : i1 to i32
    %c0_i32_3 = arith.constant 0 : i32
    %6 = arith.cmpi ne, %5, %c0_i32_3 : i32
    scf.if %6 {
      %c0_103 = arith.constant 0 : index
      %c0_104 = arith.constant 0 : index
      %c0_105 = arith.constant 0 : index
      %220 = vector.load %arg2[%c0_103, %c0_104, %c0_105] : memref<1x8x32xbf16, #tpu.memory_space<vmem>>, vector<1x8x32xbf16>
      %221 = vector.shape_cast %220 : vector<1x8x32xbf16> to vector<8x32xbf16>
      %222 = arith.extf %221 : vector<8x32xbf16> to vector<8x32xf32>
      %cst_106 = arith.constant dense<0.000000e+00> : vector<8xf32>
      %223 = vector.multi_reduction <add>, %222, %cst_106 [1] : vector<8x32xf32> to vector<8xf32>
      %224 = vector.shape_cast %223 : vector<8xf32> to vector<8x1xf32>
      %cst_107 = arith.constant 3.200000e+01 : f32
      %225 = vector.broadcast %cst_107 : f32 to vector<8x1xf32>
      %226 = arith.divf %224, %225 : vector<8x1xf32>
      %227 = vector.broadcast %226 : vector<8x1xf32> to vector<8x32xf32>
      %228 = arith.subf %222, %227 : vector<8x32xf32>
      %229 = arith.mulf %228, %228 : vector<8x32xf32>
      %cst_108 = arith.constant dense<0.000000e+00> : vector<8xf32>
      %230 = vector.multi_reduction <add>, %229, %cst_108 [1] : vector<8x32xf32> to vector<8xf32>
      %231 = vector.shape_cast %230 : vector<8xf32> to vector<8x1xf32>
      %cst_109 = arith.constant 3.200000e+01 : f32
      %232 = vector.broadcast %cst_109 : f32 to vector<8x1xf32>
      %233 = arith.divf %231, %232 : vector<8x1xf32>
      %234 = vector.broadcast %226 : vector<8x1xf32> to vector<8x32xf32>
      %235 = arith.subf %222, %234 : vector<8x32xf32>
      %cst_110 = arith.constant 9.99999974E-6 : f32
      %236 = vector.broadcast %cst_110 : f32 to vector<8x1xf32>
      %237 = arith.addf %233, %236 : vector<8x1xf32>
      %238 = math.rsqrt %237 : vector<8x1xf32>
      %239 = vector.broadcast %238 : vector<8x1xf32> to vector<8x32xf32>
      %240 = arith.mulf %235, %239 : vector<8x32xf32>
      %241 = vector.broadcast %2 : vector<1x32xf32> to vector<8x32xf32>
      %242 = arith.mulf %240, %241 : vector<8x32xf32>
      %243 = vector.broadcast %3 : vector<1x32xf32> to vector<8x32xf32>
      %244 = arith.addf %242, %243 : vector<8x32xf32>
      %245 = arith.truncf %244 : vector<8x32xf32> to vector<8x32xbf16>
      %c0_111 = arith.constant 0 : index
      %c32 = arith.constant 32 : index
      %246 = vector.load %arg8[%c0_111, %c32] : memref<32x96xbf16, #tpu.memory_space<vmem>>, vector<32x64xbf16>
      %cst_112 = arith.constant dense<0.000000e+00> : vector<8x64xf32>
      %247 = tpu.matmul %245, %246, %cst_112 {dimension_numbers = #tpu.dot_dimension_numbers<[1], [0], [0], [1], [0, 0, 1, 1], [], []>} : vector<8x32xbf16>, vector<32x64xbf16>, vector<8x64xf32> -> vector<8x64xf32>
      %c0_113 = arith.constant 0 : index
      %c32_114 = arith.constant 32 : index
      %248 = vector.load %arg9[%c0_113, %c32_114] : memref<1x96xf32, #tpu.memory_space<vmem>>, vector<1x64xf32>
      %249 = vector.broadcast %248 : vector<1x64xf32> to vector<8x64xf32>
      %250 = arith.addf %247, %249 : vector<8x64xf32>
      %251 = vector.extract_strided_slice %250 {offsets = [0, 0], sizes = [8, 32], strides = [1, 1]} : vector<8x64xf32> to vector<8x32xf32>
      %252 = vector.extract_strided_slice %250 {offsets = [0, 32], sizes = [8, 32], strides = [1, 1]} : vector<8x64xf32> to vector<8x32xf32>
      %253 = tpu.transpose %251, [1, 0] : vector<8x32xf32> -> vector<32x8xf32>
      %254 = vector.shape_cast %253 : vector<32x8xf32> to vector<4x8x8xf32>
      %255 = arith.truncf %254 : vector<4x8x8xf32> to vector<4x8x8xbf16>
      %c0_115 = arith.constant 0 : index
      %c0_116 = arith.constant 0 : index
      %c0_117 = arith.constant 0 : index
      %256 = vector.load %arg27[%c0_115, %c0_116, %c0_117] : memref<4x8x8xbf16, #tpu.memory_space<vmem>>, vector<4x8x8xbf16>
      tpu.vector_store %arg27[%c0_115, %c0_116, %c0_117], %255 {strides = array<i32>} : memref<4x8x8xbf16, #tpu.memory_space<vmem>>, vector<4x8x8xbf16>,
      %257 = vector.shape_cast %252 : vector<8x32xf32> to vector<8x4x8xf32>
      %258 = tpu.transpose %257, [1, 0, 2] : vector<8x4x8xf32> -> vector<4x8x8xf32>
      %259 = arith.truncf %258 : vector<4x8x8xf32> to vector<4x8x8xbf16>
      %c0_118 = arith.constant 0 : index
      %c0_119 = arith.constant 0 : index
      %c0_120 = arith.constant 0 : index
      %260 = vector.load %arg28[%c0_118, %c0_119, %c0_120] : memref<4x8x8xbf16, #tpu.memory_space<vmem>>, vector<4x8x8xbf16>
      tpu.vector_store %arg28[%c0_118, %c0_119, %c0_120], %259 {strides = array<i32>} : memref<4x8x8xbf16, #tpu.memory_space<vmem>>, vector<4x8x8xbf16>,
      %c0_121 = arith.constant 0 : index
      %c0_122 = arith.constant 0 : index
      %c0_123 = arith.constant 0 : index
      %261 = vector.load %arg3[%c0_121, %c0_122, %c0_123] : memref<1x8x32xbf16, #tpu.memory_space<vmem>>, vector<1x8x32xbf16>
      %262 = vector.shape_cast %261 : vector<1x8x32xbf16> to vector<8x32xbf16>
      %263 = arith.extf %262 : vector<8x32xbf16> to vector<8x32xf32>
      %264 = arith.truncf %263 : vector<8x32xf32> to vector<8x32xbf16>
      %c0_124 = arith.constant 0 : index
      %c0_125 = arith.constant 0 : index
      %265 = vector.load %arg16[%c0_124, %c0_125] : memref<32x64xbf16, #tpu.memory_space<vmem>>, vector<32x64xbf16>
      %cst_126 = arith.constant dense<0.000000e+00> : vector<8x64xf32>
      %266 = tpu.matmul %264, %265, %cst_126 {dimension_numbers = #tpu.dot_dimension_numbers<[1], [0], [0], [1], [0, 0, 1, 1], [], []>} : vector<8x32xbf16>, vector<32x64xbf16>, vector<8x64xf32> -> vector<8x64xf32>
      %c0_127 = arith.constant 0 : index
      %c0_128 = arith.constant 0 : index
      %267 = vector.load %arg17[%c0_127, %c0_128] : memref<1x64xf32, #tpu.memory_space<vmem>>, vector<1x64xf32>
      %268 = vector.broadcast %267 : vector<1x64xf32> to vector<8x64xf32>
      %269 = arith.addf %266, %268 : vector<8x64xf32>
      %270 = vector.extract_strided_slice %269 {offsets = [0, 0], sizes = [8, 32], strides = [1, 1]} : vector<8x64xf32> to vector<8x32xf32>
      %271 = vector.extract_strided_slice %269 {offsets = [0, 32], sizes = [8, 32], strides = [1, 1]} : vector<8x64xf32> to vector<8x32xf32>
      %272 = tpu.transpose %270, [1, 0] : vector<8x32xf32> -> vector<32x8xf32>
      %273 = vector.shape_cast %272 : vector<32x8xf32> to vector<4x8x8xf32>
      %274 = arith.truncf %273 : vector<4x8x8xf32> to vector<4x8x8xbf16>
      %c0_129 = arith.constant 0 : index
      %c0_130 = arith.constant 0 : index
      %c0_131 = arith.constant 0 : index
      %275 = vector.load %arg29[%c0_129, %c0_130, %c0_131] : memref<4x8x8xbf16, #tpu.memory_space<vmem>>, vector<4x8x8xbf16>
      tpu.vector_store %arg29[%c0_129, %c0_130, %c0_131], %274 {strides = array<i32>} : memref<4x8x8xbf16, #tpu.memory_space<vmem>>, vector<4x8x8xbf16>,
      %276 = vector.shape_cast %271 : vector<8x32xf32> to vector<8x4x8xf32>
      %277 = tpu.transpose %276, [1, 0, 2] : vector<8x4x8xf32> -> vector<4x8x8xf32>
      %278 = arith.truncf %277 : vector<4x8x8xf32> to vector<4x8x8xbf16>
      %c0_132 = arith.constant 0 : index
      %c0_133 = arith.constant 0 : index
      %c0_134 = arith.constant 0 : index
      %279 = vector.load %arg30[%c0_132, %c0_133, %c0_134] : memref<4x8x8xbf16, #tpu.memory_space<vmem>>, vector<4x8x8xbf16>
      tpu.vector_store %arg30[%c0_132, %c0_133, %c0_134], %278 {strides = array<i32>} : memref<4x8x8xbf16, #tpu.memory_space<vmem>>, vector<4x8x8xbf16>,
    } else {
    }
    %c0_4 = arith.constant 0 : index
    %c0_5 = arith.constant 0 : index
    %c0_6 = arith.constant 0 : index
    %7 = vector.load %arg4[%c0_4, %c0_5, %c0_6] : memref<1x1x8xf32, #tpu.memory_space<vmem>>, vector<1x1x8xf32>
    %8 = vector.shape_cast %7 : vector<1x1x8xf32> to vector<1x8xf32>
    %c0_7 = arith.constant 0 : index
    %c0_8 = arith.constant 0 : index
    %c0_9 = arith.constant 0 : index
    %9 = vector.load %arg5[%c0_7, %c0_8, %c0_9] : memref<1x1x8xf32, #tpu.memory_space<vmem>>, vector<1x1x8xf32>
    %10 = vector.shape_cast %9 : vector<1x1x8xf32> to vector<1x8xf32>
    %c0_10 = arith.constant 0 : index
    %11 = arith.index_cast %1 : i32 to index
    %c0_11 = arith.constant 0 : index
    %12 = vector.load %arg2[%c0_10, %11, %c0_11] : memref<1x8x32xbf16, #tpu.memory_space<vmem>>, vector<1x8x32xbf16>
    %13 = vector.shape_cast %12 : vector<1x8x32xbf16> to vector<8x32xbf16>
    %14 = arith.extf %13 : vector<8x32xbf16> to vector<8x32xf32>
    %cst = arith.constant dense<0.000000e+00> : vector<8xf32>
    %15 = vector.multi_reduction <add>, %14, %cst [1] : vector<8x32xf32> to vector<8xf32>
    %16 = vector.shape_cast %15 : vector<8xf32> to vector<8x1xf32>
    %cst_12 = arith.constant 3.200000e+01 : f32
    %17 = vector.broadcast %cst_12 : f32 to vector<8x1xf32>
    %18 = arith.divf %16, %17 : vector<8x1xf32>
    %19 = vector.broadcast %18 : vector<8x1xf32> to vector<8x32xf32>
    %20 = arith.subf %14, %19 : vector<8x32xf32>
    %21 = arith.mulf %20, %20 : vector<8x32xf32>
    %cst_13 = arith.constant dense<0.000000e+00> : vector<8xf32>
    %22 = vector.multi_reduction <add>, %21, %cst_13 [1] : vector<8x32xf32> to vector<8xf32>
    %23 = vector.shape_cast %22 : vector<8xf32> to vector<8x1xf32>
    %cst_14 = arith.constant 3.200000e+01 : f32
    %24 = vector.broadcast %cst_14 : f32 to vector<8x1xf32>
    %25 = arith.divf %23, %24 : vector<8x1xf32>
    %26 = vector.broadcast %18 : vector<8x1xf32> to vector<8x32xf32>
    %27 = arith.subf %14, %26 : vector<8x32xf32>
    %cst_15 = arith.constant 9.99999974E-6 : f32
    %28 = vector.broadcast %cst_15 : f32 to vector<8x1xf32>
    %29 = arith.addf %25, %28 : vector<8x1xf32>
    %30 = math.rsqrt %29 : vector<8x1xf32>
    %31 = vector.broadcast %30 : vector<8x1xf32> to vector<8x32xf32>
    %32 = arith.mulf %27, %31 : vector<8x32xf32>
    %33 = vector.broadcast %2 : vector<1x32xf32> to vector<8x32xf32>
    %34 = arith.mulf %32, %33 : vector<8x32xf32>
    %35 = vector.broadcast %3 : vector<1x32xf32> to vector<8x32xf32>
    %36 = arith.addf %34, %35 : vector<8x32xf32>
    %37 = arith.truncf %36 : vector<8x32xf32> to vector<8x32xbf16>
    %c0_16 = arith.constant 0 : index
    %c0_17 = arith.constant 0 : index
    %38 = vector.load %arg8[%c0_16, %c0_17] : memref<32x96xbf16, #tpu.memory_space<vmem>>, vector<32x32xbf16>
    %cst_18 = arith.constant dense<0.000000e+00> : vector<8x32xf32>
    %39 = tpu.matmul %37, %38, %cst_18 {dimension_numbers = #tpu.dot_dimension_numbers<[1], [0], [0], [1], [0, 0, 1, 1], [], []>} : vector<8x32xbf16>, vector<32x32xbf16>, vector<8x32xf32> -> vector<8x32xf32>
    %c0_19 = arith.constant 0 : index
    %c0_20 = arith.constant 0 : index
    %40 = vector.load %arg9[%c0_19, %c0_20] : memref<1x96xf32, #tpu.memory_space<vmem>>, vector<1x32xf32>
    %41 = vector.broadcast %40 : vector<1x32xf32> to vector<8x32xf32>
    %42 = arith.addf %39, %41 : vector<8x32xf32>
    %c0_21 = arith.constant 0 : index
    %c0_22 = arith.constant 0 : index
    %43 = vector.load %arg10[%c0_21, %c0_22] : memref<32x32xbf16, #tpu.memory_space<vmem>>, vector<32x32xbf16>
    %c0_23 = arith.constant 0 : index
    %c0_24 = arith.constant 0 : index
    %44 = vector.load %arg11[%c0_23, %c0_24] : memref<1x32xf32, #tpu.memory_space<vmem>>, vector<1x32xf32>
    %cst_25 = arith.constant 0.353553385 : f32
    %45 = vector.broadcast %cst_25 : f32 to vector<8x32xf32>
    %46 = arith.mulf %42, %45 : vector<8x32xf32>
    %47 = vector.shape_cast %46 : vector<8x32xf32> to vector<8x4x8xf32>
    %48 = tpu.transpose %47, [1, 0, 2] : vector<8x4x8xf32> -> vector<4x8x8xf32>
    %49 = arith.truncf %48 : vector<4x8x8xf32> to vector<4x8x8xbf16>
    %cst_26 = arith.constant 0xFF800000 : f32
    %50 = vector.broadcast %cst_26 : f32 to vector<4x8x1xf32>
    %cst_27 = arith.constant 0.000000e+00 : f32
    %51 = vector.broadcast %cst_27 : f32 to vector<4x8x1xf32>
    %cst_28 = arith.constant 0.000000e+00 : f32
    %52 = vector.broadcast %cst_28 : f32 to vector<4x8x8xf32>
    %c0_29 = arith.constant 0 : index
    %c0_30 = arith.constant 0 : index
    %c0_31 = arith.constant 0 : index
    %53 = vector.load %arg27[%c0_29, %c0_30, %c0_31] : memref<4x8x8xbf16, #tpu.memory_space<vmem>>, vector<4x8x8xbf16>
    %c0_32 = arith.constant 0 : index
    %c0_33 = arith.constant 0 : index
    %c0_34 = arith.constant 0 : index
    %54 = vector.load %arg28[%c0_32, %c0_33, %c0_34] : memref<4x8x8xbf16, #tpu.memory_space<vmem>>, vector<4x8x8xbf16>
    "tpu.trace_start"() <{level = 10 : i32, message = "hqd,hdk->hqk"}> : () -> ()
    %cst_35 = arith.constant dense<0.000000e+00> : vector<4x8x8xf32>
    %55 = tpu.matmul %49, %53, %cst_35 {dimension_numbers = #tpu.dot_dimension_numbers<[2], [1], [1], [2], [0, 0, 0, 1, 1, 2], [0], [0]>} : vector<4x8x8xbf16>, vector<4x8x8xbf16>, vector<4x8x8xf32> -> vector<4x8x8xf32>
    "tpu.trace_stop"() : () -> ()
    %56 = tpu.iota {dimensions = array<i32: 0>} : vector<8x8xi32>
    %57 = vector.broadcast %1 : i32 to vector<8x8xi32>
    %58 = arith.addi %57, %56 : vector<8x8xi32>
    %59 = tpu.iota {dimensions = array<i32: 1>} : vector<8x8xi32>
    %c0_i32_36 = arith.constant 0 : i32
    %60 = vector.broadcast %c0_i32_36 : i32 to vector<8x8xi32>
    %61 = arith.addi %60, %59 : vector<8x8xi32>
    %62 = arith.cmpi sge, %58, %61 : vector<8x8xi32>
    %cst_37 = arith.constant 0.000000e+00 : f32
    %63 = vector.broadcast %cst_37 : f32 to vector<1x8xf32>
    %64 = arith.cmpf ogt, %8, %63 : vector<1x8xf32>
    %65 = vector.broadcast %64 : vector<1x8xi1> to vector<8x8xi1>
    %66 = arith.andi %62, %65 : vector<8x8xi1>
    %cst_38 = arith.constant 0.000000e+00 : f32
    %cst_39 = arith.constant -1.000000e+09 : f32
    %67 = vector.broadcast %cst_38 : f32 to vector<8x8xf32>
    %68 = vector.broadcast %cst_39 : f32 to vector<8x8xf32>
    %69 = arith.select %66, %67, %68 : vector<8x8xi1>, vector<8x8xf32>
    %70 = vector.shape_cast %69 : vector<8x8xf32> to vector<1x8x8xf32>
    %71 = vector.broadcast %70 : vector<1x8x8xf32> to vector<4x8x8xf32>
    %72 = arith.addf %55, %71 : vector<4x8x8xf32>
    %cst_40 = arith.constant dense<0xFF800000> : vector<4x8xf32>
    %73 = vector.multi_reduction <maximumf>, %72, %cst_40 [2] : vector<4x8x8xf32> to vector<4x8xf32>
    %74 = vector.shape_cast %73 : vector<4x8xf32> to vector<4x8x1xf32>
    %75 = arith.maximumf %50, %74 : vector<4x8x1xf32>
    %76 = arith.subf %50, %75 : vector<4x8x1xf32>
    %77 = math.exp %76 : vector<4x8x1xf32>
    %78 = vector.broadcast %75 : vector<4x8x1xf32> to vector<4x8x8xf32>
    %79 = arith.subf %72, %78 : vector<4x8x8xf32>
    %80 = math.exp %79 : vector<4x8x8xf32>
    %81 = arith.mulf %77, %51 : vector<4x8x1xf32>
    %cst_41 = arith.constant dense<0.000000e+00> : vector<4x8xf32>
    %82 = vector.multi_reduction <add>, %80, %cst_41 [2] : vector<4x8x8xf32> to vector<4x8xf32>
    %83 = vector.shape_cast %82 : vector<4x8xf32> to vector<4x8x1xf32>
    %84 = arith.addf %81, %83 : vector<4x8x1xf32>
    %85 = vector.broadcast %77 : vector<4x8x1xf32> to vector<4x8x8xf32>
    %86 = arith.mulf %85, %52 : vector<4x8x8xf32>
    %87 = arith.truncf %80 : vector<4x8x8xf32> to vector<4x8x8xbf16>
    "tpu.trace_start"() <{level = 10 : i32, message = "hqk,hkd->hqd"}> : () -> ()
    %cst_42 = arith.constant dense<0.000000e+00> : vector<4x8x8xf32>
    %88 = tpu.matmul %87, %54, %cst_42 {dimension_numbers = #tpu.dot_dimension_numbers<[2], [1], [1], [2], [0, 0, 0, 1, 1, 2], [0], [0]>} : vector<4x8x8xbf16>, vector<4x8x8xbf16>, vector<4x8x8xf32> -> vector<4x8x8xf32>
    "tpu.trace_stop"() : () -> ()
    %89 = arith.addf %86, %88 : vector<4x8x8xf32>
    %90 = tpu.reciprocal %84 {approx = true} : vector<4x8x1xf32> -> vector<4x8x1xf32>
    %91 = vector.broadcast %90 : vector<4x8x1xf32> to vector<4x8x8xf32>
    %92 = arith.mulf %89, %91 : vector<4x8x8xf32>
    %93 = tpu.transpose %92, [1, 0, 2] : vector<4x8x8xf32> -> vector<8x4x8xf32>
    %94 = vector.shape_cast %93 : vector<8x4x8xf32> to vector<8x32xf32>
    %95 = arith.truncf %94 : vector<8x32xf32> to vector<8x32xbf16>
    %cst_43 = arith.constant dense<0.000000e+00> : vector<8x32xf32>
    %96 = tpu.matmul %95, %43, %cst_43 {dimension_numbers = #tpu.dot_dimension_numbers<[1], [0], [0], [1], [0, 0, 1, 1], [], []>} : vector<8x32xbf16>, vector<32x32xbf16>, vector<8x32xf32> -> vector<8x32xf32>
    %97 = vector.broadcast %44 : vector<1x32xf32> to vector<8x32xf32>
    %98 = arith.addf %96, %97 : vector<8x32xf32>
    %99 = arith.addf %14, %98 : vector<8x32xf32>
    %c0_44 = arith.constant 0 : index
    %c0_45 = arith.constant 0 : index
    %100 = vector.load %arg12[%c0_44, %c0_45] : memref<1x32xf32, #tpu.memory_space<vmem>>, vector<1x32xf32>
    %c0_46 = arith.constant 0 : index
    %c0_47 = arith.constant 0 : index
    %101 = vector.load %arg13[%c0_46, %c0_47] : memref<1x32xf32, #tpu.memory_space<vmem>>, vector<1x32xf32>
    %cst_48 = arith.constant dense<0.000000e+00> : vector<8xf32>
    %102 = vector.multi_reduction <add>, %99, %cst_48 [1] : vector<8x32xf32> to vector<8xf32>
    %103 = vector.shape_cast %102 : vector<8xf32> to vector<8x1xf32>
    %cst_49 = arith.constant 3.200000e+01 : f32
    %104 = vector.broadcast %cst_49 : f32 to vector<8x1xf32>
    %105 = arith.divf %103, %104 : vector<8x1xf32>
    %106 = vector.broadcast %105 : vector<8x1xf32> to vector<8x32xf32>
    %107 = arith.subf %99, %106 : vector<8x32xf32>
    %108 = arith.mulf %107, %107 : vector<8x32xf32>
    %cst_50 = arith.constant dense<0.000000e+00> : vector<8xf32>
    %109 = vector.multi_reduction <add>, %108, %cst_50 [1] : vector<8x32xf32> to vector<8xf32>
    %110 = vector.shape_cast %109 : vector<8xf32> to vector<8x1xf32>
    %cst_51 = arith.constant 3.200000e+01 : f32
    %111 = vector.broadcast %cst_51 : f32 to vector<8x1xf32>
    %112 = arith.divf %110, %111 : vector<8x1xf32>
    %113 = vector.broadcast %105 : vector<8x1xf32> to vector<8x32xf32>
    %114 = arith.subf %99, %113 : vector<8x32xf32>
    %cst_52 = arith.constant 9.99999974E-6 : f32
    %115 = vector.broadcast %cst_52 : f32 to vector<8x1xf32>
    %116 = arith.addf %112, %115 : vector<8x1xf32>
    %117 = math.rsqrt %116 : vector<8x1xf32>
    %118 = vector.broadcast %117 : vector<8x1xf32> to vector<8x32xf32>
    %119 = arith.mulf %114, %118 : vector<8x32xf32>
    %120 = vector.broadcast %100 : vector<1x32xf32> to vector<8x32xf32>
    %121 = arith.mulf %119, %120 : vector<8x32xf32>
    %122 = vector.broadcast %101 : vector<1x32xf32> to vector<8x32xf32>
    %123 = arith.addf %121, %122 : vector<8x32xf32>
    %124 = arith.truncf %123 : vector<8x32xf32> to vector<8x32xbf16>
    %c0_53 = arith.constant 0 : index
    %c0_54 = arith.constant 0 : index
    %125 = vector.load %arg14[%c0_53, %c0_54] : memref<32x32xbf16, #tpu.memory_space<vmem>>, vector<32x32xbf16>
    %cst_55 = arith.constant dense<0.000000e+00> : vector<8x32xf32>
    %126 = tpu.matmul %124, %125, %cst_55 {dimension_numbers = #tpu.dot_dimension_numbers<[1], [0], [0], [1], [0, 0, 1, 1], [], []>} : vector<8x32xbf16>, vector<32x32xbf16>, vector<8x32xf32> -> vector<8x32xf32>
    %c0_56 = arith.constant 0 : index
    %c0_57 = arith.constant 0 : index
    %127 = vector.load %arg15[%c0_56, %c0_57] : memref<1x32xf32, #tpu.memory_space<vmem>>, vector<1x32xf32>
    %128 = vector.broadcast %127 : vector<1x32xf32> to vector<8x32xf32>
    %129 = arith.addf %126, %128 : vector<8x32xf32>
    %c0_58 = arith.constant 0 : index
    %c0_59 = arith.constant 0 : index
    %130 = vector.load %arg18[%c0_58, %c0_59] : memref<32x32xbf16, #tpu.memory_space<vmem>>, vector<32x32xbf16>
    %c0_60 = arith.constant 0 : index
    %c0_61 = arith.constant 0 : index
    %131 = vector.load %arg19[%c0_60, %c0_61] : memref<1x32xf32, #tpu.memory_space<vmem>>, vector<1x32xf32>
    %cst_62 = arith.constant 0.353553385 : f32
    %132 = vector.broadcast %cst_62 : f32 to vector<8x32xf32>
    %133 = arith.mulf %129, %132 : vector<8x32xf32>
    %134 = vector.shape_cast %133 : vector<8x32xf32> to vector<8x4x8xf32>
    %135 = tpu.transpose %134, [1, 0, 2] : vector<8x4x8xf32> -> vector<4x8x8xf32>
    %136 = arith.truncf %135 : vector<4x8x8xf32> to vector<4x8x8xbf16>
    %cst_63 = arith.constant 0xFF800000 : f32
    %137 = vector.broadcast %cst_63 : f32 to vector<4x8x1xf32>
    %cst_64 = arith.constant 0.000000e+00 : f32
    %138 = vector.broadcast %cst_64 : f32 to vector<4x8x1xf32>
    %cst_65 = arith.constant 0.000000e+00 : f32
    %139 = vector.broadcast %cst_65 : f32 to vector<4x8x8xf32>
    %c0_66 = arith.constant 0 : index
    %c0_67 = arith.constant 0 : index
    %c0_68 = arith.constant 0 : index
    %140 = vector.load %arg29[%c0_66, %c0_67, %c0_68] : memref<4x8x8xbf16, #tpu.memory_space<vmem>>, vector<4x8x8xbf16>
    %c0_69 = arith.constant 0 : index
    %c0_70 = arith.constant 0 : index
    %c0_71 = arith.constant 0 : index
    %141 = vector.load %arg30[%c0_69, %c0_70, %c0_71] : memref<4x8x8xbf16, #tpu.memory_space<vmem>>, vector<4x8x8xbf16>
    "tpu.trace_start"() <{level = 10 : i32, message = "hqd,hdk->hqk"}> : () -> ()
    %cst_72 = arith.constant dense<0.000000e+00> : vector<4x8x8xf32>
    %142 = tpu.matmul %136, %140, %cst_72 {dimension_numbers = #tpu.dot_dimension_numbers<[2], [1], [1], [2], [0, 0, 0, 1, 1, 2], [0], [0]>} : vector<4x8x8xbf16>, vector<4x8x8xbf16>, vector<4x8x8xf32> -> vector<4x8x8xf32>
    %cst_73 = arith.constant 0.000000e+00 : f32
    "tpu.trace_stop"() : () -> ()
    %143 = vector.broadcast %cst_73 : f32 to vector<1x8xf32>
    %144 = arith.cmpf ogt, %10, %143 : vector<1x8xf32>
    %cst_74 = arith.constant 0.000000e+00 : f32
    %cst_75 = arith.constant -1.000000e+09 : f32
    %145 = vector.broadcast %cst_74 : f32 to vector<1x8xf32>
    %146 = vector.broadcast %cst_75 : f32 to vector<1x8xf32>
    %147 = arith.select %144, %145, %146 : vector<1x8xi1>, vector<1x8xf32>
    %148 = vector.shape_cast %147 : vector<1x8xf32> to vector<1x1x8xf32>
    %149 = vector.broadcast %148 : vector<1x1x8xf32> to vector<4x8x8xf32>
    %150 = arith.addf %142, %149 : vector<4x8x8xf32>
    %cst_76 = arith.constant dense<0xFF800000> : vector<4x8xf32>
    %151 = vector.multi_reduction <maximumf>, %150, %cst_76 [2] : vector<4x8x8xf32> to vector<4x8xf32>
    %152 = vector.shape_cast %151 : vector<4x8xf32> to vector<4x8x1xf32>
    %153 = arith.maximumf %137, %152 : vector<4x8x1xf32>
    %154 = arith.subf %137, %153 : vector<4x8x1xf32>
    %155 = math.exp %154 : vector<4x8x1xf32>
    %156 = vector.broadcast %153 : vector<4x8x1xf32> to vector<4x8x8xf32>
    %157 = arith.subf %150, %156 : vector<4x8x8xf32>
    %158 = math.exp %157 : vector<4x8x8xf32>
    %159 = arith.mulf %155, %138 : vector<4x8x1xf32>
    %cst_77 = arith.constant dense<0.000000e+00> : vector<4x8xf32>
    %160 = vector.multi_reduction <add>, %158, %cst_77 [2] : vector<4x8x8xf32> to vector<4x8xf32>
    %161 = vector.shape_cast %160 : vector<4x8xf32> to vector<4x8x1xf32>
    %162 = arith.addf %159, %161 : vector<4x8x1xf32>
    %163 = vector.broadcast %155 : vector<4x8x1xf32> to vector<4x8x8xf32>
    %164 = arith.mulf %163, %139 : vector<4x8x8xf32>
    %165 = arith.truncf %158 : vector<4x8x8xf32> to vector<4x8x8xbf16>
    "tpu.trace_start"() <{level = 10 : i32, message = "hqk,hkd->hqd"}> : () -> ()
    %cst_78 = arith.constant dense<0.000000e+00> : vector<4x8x8xf32>
    %166 = tpu.matmul %165, %141, %cst_78 {dimension_numbers = #tpu.dot_dimension_numbers<[2], [1], [1], [2], [0, 0, 0, 1, 1, 2], [0], [0]>} : vector<4x8x8xbf16>, vector<4x8x8xbf16>, vector<4x8x8xf32> -> vector<4x8x8xf32>
    "tpu.trace_stop"() : () -> ()
    %167 = arith.addf %164, %166 : vector<4x8x8xf32>
    %168 = tpu.reciprocal %162 {approx = true} : vector<4x8x1xf32> -> vector<4x8x1xf32>
    %169 = vector.broadcast %168 : vector<4x8x1xf32> to vector<4x8x8xf32>
    %170 = arith.mulf %167, %169 : vector<4x8x8xf32>
    %171 = tpu.transpose %170, [1, 0, 2] : vector<4x8x8xf32> -> vector<8x4x8xf32>
    %172 = vector.shape_cast %171 : vector<8x4x8xf32> to vector<8x32xf32>
    %173 = arith.truncf %172 : vector<8x32xf32> to vector<8x32xbf16>
    %cst_79 = arith.constant dense<0.000000e+00> : vector<8x32xf32>
    %174 = tpu.matmul %173, %130, %cst_79 {dimension_numbers = #tpu.dot_dimension_numbers<[1], [0], [0], [1], [0, 0, 1, 1], [], []>} : vector<8x32xbf16>, vector<32x32xbf16>, vector<8x32xf32> -> vector<8x32xf32>
    %175 = vector.broadcast %131 : vector<1x32xf32> to vector<8x32xf32>
    %176 = arith.addf %174, %175 : vector<8x32xf32>
    %177 = arith.addf %99, %176 : vector<8x32xf32>
    %c0_80 = arith.constant 0 : index
    %c0_81 = arith.constant 0 : index
    %178 = vector.load %arg20[%c0_80, %c0_81] : memref<1x32xf32, #tpu.memory_space<vmem>>, vector<1x32xf32>
    %c0_82 = arith.constant 0 : index
    %c0_83 = arith.constant 0 : index
    %179 = vector.load %arg21[%c0_82, %c0_83] : memref<1x32xf32, #tpu.memory_space<vmem>>, vector<1x32xf32>
    %cst_84 = arith.constant dense<0.000000e+00> : vector<8xf32>
    %180 = vector.multi_reduction <add>, %177, %cst_84 [1] : vector<8x32xf32> to vector<8xf32>
    %181 = vector.shape_cast %180 : vector<8xf32> to vector<8x1xf32>
    %cst_85 = arith.constant 3.200000e+01 : f32
    %182 = vector.broadcast %cst_85 : f32 to vector<8x1xf32>
    %183 = arith.divf %181, %182 : vector<8x1xf32>
    %184 = vector.broadcast %183 : vector<8x1xf32> to vector<8x32xf32>
    %185 = arith.subf %177, %184 : vector<8x32xf32>
    %186 = arith.mulf %185, %185 : vector<8x32xf32>
    %cst_86 = arith.constant dense<0.000000e+00> : vector<8xf32>
    %187 = vector.multi_reduction <add>, %186, %cst_86 [1] : vector<8x32xf32> to vector<8xf32>
    %188 = vector.shape_cast %187 : vector<8xf32> to vector<8x1xf32>
    %cst_87 = arith.constant 3.200000e+01 : f32
    %189 = vector.broadcast %cst_87 : f32 to vector<8x1xf32>
    %190 = arith.divf %188, %189 : vector<8x1xf32>
    %191 = vector.broadcast %183 : vector<8x1xf32> to vector<8x32xf32>
    %192 = arith.subf %177, %191 : vector<8x32xf32>
    %cst_88 = arith.constant 9.99999974E-6 : f32
    %193 = vector.broadcast %cst_88 : f32 to vector<8x1xf32>
    %194 = arith.addf %190, %193 : vector<8x1xf32>
    %195 = math.rsqrt %194 : vector<8x1xf32>
    %196 = vector.broadcast %195 : vector<8x1xf32> to vector<8x32xf32>
    %197 = arith.mulf %192, %196 : vector<8x32xf32>
    %198 = vector.broadcast %178 : vector<1x32xf32> to vector<8x32xf32>
    %199 = arith.mulf %197, %198 : vector<8x32xf32>
    %200 = vector.broadcast %179 : vector<1x32xf32> to vector<8x32xf32>
    %201 = arith.addf %199, %200 : vector<8x32xf32>
    %202 = arith.truncf %201 : vector<8x32xf32> to vector<8x32xbf16>
    %c0_89 = arith.constant 0 : index
    %c0_90 = arith.constant 0 : index
    %203 = vector.load %arg22[%c0_89, %c0_90] : memref<32x64xbf16, #tpu.memory_space<vmem>>, vector<32x64xbf16>
    %cst_91 = arith.constant dense<0.000000e+00> : vector<8x64xf32>
    %204 = tpu.matmul %202, %203, %cst_91 {dimension_numbers = #tpu.dot_dimension_numbers<[1], [0], [0], [1], [0, 0, 1, 1], [], []>} : vector<8x32xbf16>, vector<32x64xbf16>, vector<8x64xf32> -> vector<8x64xf32>
    %c0_92 = arith.constant 0 : index
    %c0_93 = arith.constant 0 : index
    %205 = vector.load %arg23[%c0_92, %c0_93] : memref<1x64xf32, #tpu.memory_space<vmem>>, vector<1x64xf32>
    %206 = vector.broadcast %205 : vector<1x64xf32> to vector<8x64xf32>
    %207 = arith.addf %204, %206 : vector<8x64xf32>
    %cst_94 = arith.constant 0.000000e+00 : f32
    %208 = vector.broadcast %cst_94 : f32 to vector<8x64xf32>
    %209 = arith.maximumf %207, %208 : vector<8x64xf32>
    %210 = arith.truncf %209 : vector<8x64xf32> to vector<8x64xbf16>
    %c0_95 = arith.constant 0 : index
    %c0_96 = arith.constant 0 : index
    %211 = vector.load %arg24[%c0_95, %c0_96] : memref<64x32xbf16, #tpu.memory_space<vmem>>, vector<64x32xbf16>
    %cst_97 = arith.constant dense<0.000000e+00> : vector<8x32xf32>
    %212 = tpu.matmul %210, %211, %cst_97 {dimension_numbers = #tpu.dot_dimension_numbers<[1], [0], [0], [1], [0, 0, 1, 1], [], []>} : vector<8x64xbf16>, vector<64x32xbf16>, vector<8x32xf32> -> vector<8x32xf32>
    %c0_98 = arith.constant 0 : index
    %c0_99 = arith.constant 0 : index
    %213 = vector.load %arg25[%c0_98, %c0_99] : memref<1x32xf32, #tpu.memory_space<vmem>>, vector<1x32xf32>
    %214 = vector.broadcast %213 : vector<1x32xf32> to vector<8x32xf32>
    %215 = arith.addf %212, %214 : vector<8x32xf32>
    %216 = arith.addf %177, %215 : vector<8x32xf32>
    %c0_100 = arith.constant 0 : index
    %c0_101 = arith.constant 0 : index
    %c0_102 = arith.constant 0 : index
    %217 = vector.load %arg26[%c0_100, %c0_101, %c0_102] : memref<1x8x32xf32, #tpu.memory_space<vmem>>, vector<1x8x32xf32>
    %218 = vector.shape_cast %217 : vector<1x8x32xf32> to vector<8x32xf32>
    %219 = vector.shape_cast %216 : vector<8x32xf32> to vector<1x8x32xf32>
    tpu.vector_store %arg26[%c0_100, %c0_101, %c0_102], %219 {strides = array<i32>} : memref<1x8x32xf32, #tpu.memory_space<vmem>>, vector<1x8x32xf32>,
    return
  }
  func.func @transform_0(%arg0: i32, %arg1: i32) -> (i32, i32, i32) {
    %c0_i32 = arith.constant 0 : i32
    %c0_i32_0 = arith.constant 0 : i32
    %c0_i32_1 = arith.constant 0 : i32
    return %arg0, %c0_i32, %c0_i32_0 : i32, i32, i32
  }
  func.func @transform_1(%arg0: i32, %arg1: i32) -> (i32, i32, i32) {
    %c0_i32 = arith.constant 0 : i32
    %c0_i32_0 = arith.constant 0 : i32
    %c0_i32_1 = arith.constant 0 : i32
    return %arg0, %c0_i32, %c0_i32_0 : i32, i32, i32
  }
  func.func @transform_2(%arg0: i32, %arg1: i32) -> (i32, i32, i32) {
    %c0_i32 = arith.constant 0 : i32
    %c0_i32_0 = arith.constant 0 : i32
    %c0_i32_1 = arith.constant 0 : i32
    return %arg0, %c0_i32, %c0_i32_0 : i32, i32, i32
  }
  func.func @transform_3(%arg0: i32, %arg1: i32) -> (i32, i32, i32) {
    %c0_i32 = arith.constant 0 : i32
    %c0_i32_0 = arith.constant 0 : i32
    %c0_i32_1 = arith.constant 0 : i32
    return %arg0, %c0_i32, %c0_i32_0 : i32, i32, i32
  }
  func.func @transform_4(%arg0: i32, %arg1: i32) -> (i32, i32) {
    %c0_i32 = arith.constant 0 : i32
    %c0_i32_0 = arith.constant 0 : i32
    %c0_i32_1 = arith.constant 0 : i32
    return %c0_i32, %c0_i32_0 : i32, i32
  }
  func.func @transform_5(%arg0: i32, %arg1: i32) -> (i32, i32) {
    %c0_i32 = arith.constant 0 : i32
    %c0_i32_0 = arith.constant 0 : i32
    %c0_i32_1 = arith.constant 0 : i32
    return %c0_i32, %c0_i32_0 : i32, i32
  }
  func.func @transform_6(%arg0: i32, %arg1: i32) -> (i32, i32) {
    %c0_i32 = arith.constant 0 : i32
    %c0_i32_0 = arith.constant 0 : i32
    %c0_i32_1 = arith.constant 0 : i32
    return %c0_i32, %c0_i32_0 : i32, i32
  }
  func.func @transform_7(%arg0: i32, %arg1: i32) -> (i32, i32) {
    %c0_i32 = arith.constant 0 : i32
    %c0_i32_0 = arith.constant 0 : i32
    %c0_i32_1 = arith.constant 0 : i32
    return %c0_i32, %c0_i32_0 : i32, i32
  }
  func.func @transform_8(%arg0: i32, %arg1: i32) -> (i32, i32) {
    %c0_i32 = arith.constant 0 : i32
    %c0_i32_0 = arith.constant 0 : i32
    %c0_i32_1 = arith.constant 0 : i32
    return %c0_i32, %c0_i32_0 : i32, i32
  }
  func.func @transform_9(%arg0: i32, %arg1: i32) -> (i32, i32) {
    %c0_i32 = arith.constant 0 : i32
    %c0_i32_0 = arith.constant 0 : i32
    %c0_i32_1 = arith.constant 0 : i32
    return %c0_i32, %c0_i32_0 : i32, i32
  }
  func.func @transform_10(%arg0: i32, %arg1: i32) -> (i32, i32) {
    %c0_i32 = arith.constant 0 : i32
    %c0_i32_0 = arith.constant 0 : i32
    %c0_i32_1 = arith.constant 0 : i32
    return %c0_i32, %c0_i32_0 : i32, i32
  }
  func.func @transform_11(%arg0: i32, %arg1: i32) -> (i32, i32) {
    %c0_i32 = arith.constant 0 : i32
    %c0_i32_0 = arith.constant 0 : i32
    %c0_i32_1 = arith.constant 0 : i32
    return %c0_i32, %c0_i32_0 : i32, i32
  }
  func.func @transform_12(%arg0: i32, %arg1: i32) -> (i32, i32) {
    %c0_i32 = arith.constant 0 : i32
    %c0_i32_0 = arith.constant 0 : i32
    %c0_i32_1 = arith.constant 0 : i32
    return %c0_i32, %c0_i32_0 : i32, i32
  }
  func.func @transform_13(%arg0: i32, %arg1: i32) -> (i32, i32) {
    %c0_i32 = arith.constant 0 : i32
    %c0_i32_0 = arith.constant 0 : i32
    %c0_i32_1 = arith.constant 0 : i32
    return %c0_i32, %c0_i32_0 : i32, i32
  }
  func.func @transform_14(%arg0: i32, %arg1: i32) -> (i32, i32) {
    %c0_i32 = arith.constant 0 : i32
    %c0_i32_0 = arith.constant 0 : i32
    %c0_i32_1 = arith.constant 0 : i32
    return %c0_i32, %c0_i32_0 : i32, i32
  }
  func.func @transform_15(%arg0: i32, %arg1: i32) -> (i32, i32) {
    %c0_i32 = arith.constant 0 : i32
    %c0_i32_0 = arith.constant 0 : i32
    %c0_i32_1 = arith.constant 0 : i32
    return %c0_i32, %c0_i32_0 : i32, i32
  }
  func.func @transform_16(%arg0: i32, %arg1: i32) -> (i32, i32) {
    %c0_i32 = arith.constant 0 : i32
    %c0_i32_0 = arith.constant 0 : i32
    %c0_i32_1 = arith.constant 0 : i32
    return %c0_i32, %c0_i32_0 : i32, i32
  }
  func.func @transform_17(%arg0: i32, %arg1: i32) -> (i32, i32) {
    %c0_i32 = arith.constant 0 : i32
    %c0_i32_0 = arith.constant 0 : i32
    %c0_i32_1 = arith.constant 0 : i32
    return %c0_i32, %c0_i32_0 : i32, i32
  }
  func.func @transform_18(%arg0: i32, %arg1: i32) -> (i32, i32) {
    %c0_i32 = arith.constant 0 : i32
    %c0_i32_0 = arith.constant 0 : i32
    %c0_i32_1 = arith.constant 0 : i32
    return %c0_i32, %c0_i32_0 : i32, i32
  }
  func.func @transform_19(%arg0: i32, %arg1: i32) -> (i32, i32) {
    %c0_i32 = arith.constant 0 : i32
    %c0_i32_0 = arith.constant 0 : i32
    %c0_i32_1 = arith.constant 0 : i32
    return %c0_i32, %c0_i32_0 : i32, i32
  }
  func.func @transform_20(%arg0: i32, %arg1: i32) -> (i32, i32) {
    %c0_i32 = arith.constant 0 : i32
    %c0_i32_0 = arith.constant 0 : i32
    %c0_i32_1 = arith.constant 0 : i32
    return %c0_i32, %c0_i32_0 : i32, i32
  }
  func.func @transform_21(%arg0: i32, %arg1: i32) -> (i32, i32) {
    %c0_i32 = arith.constant 0 : i32
    %c0_i32_0 = arith.constant 0 : i32
    %c0_i32_1 = arith.constant 0 : i32
    return %c0_i32, %c0_i32_0 : i32, i32
  }
  func.func @transform_22(%arg0: i32, %arg1: i32) -> (i32, i32) {
    %c0_i32 = arith.constant 0 : i32
    %c0_i32_0 = arith.constant 0 : i32
    %c0_i32_1 = arith.constant 0 : i32
    return %c0_i32, %c0_i32_0 : i32, i32
  }
  func.func @transform_23(%arg0: i32, %arg1: i32) -> (i32, i32) {
    %c0_i32 = arith.constant 0 : i32
    %c0_i32_0 = arith.constant 0 : i32
    %c0_i32_1 = arith.constant 0 : i32
    return %c0_i32, %c0_i32_0 : i32, i32
  }
  func.func @transform_24(%arg0: i32, %arg1: i32) -> (i32, i32, i32) {
    %c0_i32 = arith.constant 0 : i32
    %c0_i32_0 = arith.constant 0 : i32
    return %arg0, %arg1, %c0_i32 : i32, i32, i32
  }
}

</mosaic_0001>

<llo_original>
// kernel: tpu_custom_call.1
$region0: #{tpu_custom_call.1}
  #allocation0 [shape = 'u32[]', space=smem, size = 0x4, offset = 0x4, fixed_abs, tag = 'smem constant byte address 0x4 - core index']
  #allocation1 [shape = 'u32[72,128]{1,0:T(1,128)}', space=vmem, size = 0x9000, scoped, tag = 'internal scratch']
  #allocation2 [shape = 'bf16[4,8,8]{2,1,0:T(8,128)(2,1)}', space=vmem, size = 0x2000, scoped, tag = 'scratch operand']
  #allocation3 [shape = 'bf16[4,8,8]{2,1,0:T(8,128)(2,1)}', space=vmem, size = 0x2000, scoped, tag = 'scratch operand']
  #allocation4 [shape = 'bf16[4,8,8]{2,1,0:T(8,128)(2,1)}', space=vmem, size = 0x2000, scoped, tag = 'scratch operand']
  #allocation5 [shape = 'bf16[4,8,8]{2,1,0:T(8,128)(2,1)}', space=vmem, size = 0x2000, scoped, tag = 'scratch operand']
  %s0 = inlined_call_operand.hbm [shape: bf16[2,8,32], index: 0, kind: input, shape index: {}]
  %s1 = inlined_call_operand.hbm [shape: bf16[2,8,32], index: 1, kind: input, shape index: {}]
  %s2 = inlined_call_operand.hbm [shape: f32[2,1,8], index: 2, kind: input, shape index: {}]
  %s3 = inlined_call_operand.vmem [shape: f32[2,1,8], index: 3, kind: input, shape index: {}]
  %s4 = inlined_call_operand.vmem [shape: f32[1,32], index: 4, kind: input, shape index: {}]
  %s5 = inlined_call_operand.vmem [shape: f32[1,32], index: 5, kind: input, shape index: {}]
  %s6 = inlined_call_operand.vmem [shape: bf16[32,96], index: 6, kind: input, shape index: {}]
  %s7 = inlined_call_operand.vmem [shape: f32[1,96], index: 7, kind: input, shape index: {}]
  %s8 = inlined_call_operand.vmem [shape: bf16[32,32], index: 8, kind: input, shape index: {}]
  %s9 = inlined_call_operand.hbm [shape: f32[1,32], index: 9, kind: input, shape index: {}]
  %s10 = inlined_call_operand.hbm [shape: f32[1,32], index: 10, kind: input, shape index: {}]
  %s11 = inlined_call_operand.hbm [shape: f32[1,32], index: 11, kind: input, shape index: {}]
  %s12 = inlined_call_operand.vmem [shape: bf16[32,32], index: 12, kind: input, shape index: {}]
  %s13 = inlined_call_operand.hbm [shape: f32[1,32], index: 13, kind: input, shape index: {}]
  %s14 = inlined_call_operand.hbm [shape: bf16[32,64], index: 14, kind: input, shape index: {}]
  %s15 = inlined_call_operand.hbm [shape: f32[1,64], index: 15, kind: input, shape index: {}]
  %s16 = inlined_call_operand.hbm [shape: bf16[32,32], index: 16, kind: input, shape index: {}]
  %s17 = inlined_call_operand.hbm [shape: f32[1,32], index: 17, kind: input, shape index: {}]
  %s18 = inlined_call_operand.hbm [shape: f32[1,32], index: 18, kind: input, shape index: {}]
  %s19 = inlined_call_operand.hbm [shape: f32[1,32], index: 19, kind: input, shape index: {}]
  %s20 = inlined_call_operand.hbm [shape: bf16[32,64], index: 20, kind: input, shape index: {}]
  %s21 = inlined_call_operand.hbm [shape: f32[1,64], index: 21, kind: input, shape index: {}]
  %s22 = inlined_call_operand.vmem [shape: bf16[64,32], index: 22, kind: input, shape index: {}]
  %s23 = inlined_call_operand.vmem [shape: f32[1,32], index: 23, kind: input, shape index: {}]
  %s24 = inlined_call_operand.hbm [shape: f32[2,8,32], index: 24, kind: output, shape index: {}]
  %s25 = sld [smem:[#allocation0]]
  $region193: #{tpu_custom_call.1} parent=0
    _
  %s27 = ssub.s32 1, %s25
  %s28 = scalar_select 0, %s27, %s25
  $region1: #{tpu_custom_call.1} parent=0
    #allocation6 [shape = 'u8[4096]{0}', space=vmem, size = 0x1000, scoped, tag = 'input window, operand 0']
    #allocation7 [shape = 's32[2]{0}', space=sflag, size = 0x8, scoped, tag = 'scoped memory for tpu_custom_call.1']
    #allocation8 [shape = 's32[2]{0}', space=sflag, size = 0x8, scoped, tag = 'scoped memory for tpu_custom_call.1']
    #allocation9 [shape = 'u8[4096]{0}', space=vmem, size = 0x1000, scoped, tag = 'input window, operand 1']
    #allocation10 [shape = 's32[2]{0}', space=sflag, size = 0x8, scoped, tag = 'scoped memory for tpu_custom_call.1']
    #allocation11 [shape = 'u8[1024]{0}', space=vmem, size = 0x400, scoped, tag = 'input window, operand 2']
    #allocation12 [shape = 'u8[512]{0}', space=vmem, size = 0x400, scoped, tag = 'input window, operand 9, single buffered']
    #allocation13 [shape = 's32[1]{0}', space=sflag, size = 0x4, scoped, tag = 'scoped memory for tpu_custom_call.1']
    #allocation14 [shape = 'u8[512]{0}', space=vmem, size = 0x400, scoped, tag = 'input window, operand 10, single buffered']
    #allocation15 [shape = 'u8[512]{0}', space=vmem, size = 0x400, scoped, tag = 'input window, operand 11, single buffered']
    #allocation16 [shape = 's32[1]{0}', space=sflag, size = 0x4, scoped, tag = 'scoped memory for tpu_custom_call.1']
    #allocation17 [shape = 'u8[512]{0}', space=vmem, size = 0x400, scoped, tag = 'input window, operand 13, single buffered']
    #allocation18 [shape = 'u8[8192]{0}', space=vmem, size = 0x2000, scoped, tag = 'input window, operand 14, single buffered']
    #allocation19 [shape = 's32[1]{0}', space=sflag, size = 0x4, scoped, tag = 'scoped memory for tpu_custom_call.1']
    #allocation20 [shape = 'u8[512]{0}', space=vmem, size = 0x400, scoped, tag = 'input window, operand 15, single buffered']
    #allocation21 [shape = 'u8[8192]{0}', space=vmem, size = 0x2000, scoped, tag = 'input window, operand 16, single buffered']
    #allocation22 [shape = 's32[1]{0}', space=sflag, size = 0x4, scoped, tag = 'scoped memory for tpu_custom_call.1']
    #allocation23 [shape = 'u8[512]{0}', space=vmem, size = 0x400, scoped, tag = 'input window, operand 17, single buffered']
    #allocation24 [shape = 'u8[512]{0}', space=vmem, size = 0x400, scoped, tag = 'input window, operand 18, single buffered']
    #allocation25 [shape = 's32[1]{0}', space=sflag, size = 0x4, scoped, tag = 'scoped memory for tpu_custom_call.1']
    #allocation26 [shape = 'u8[512]{0}', space=vmem, size = 0x400, scoped, tag = 'input window, operand 19, single buffered']
    #allocation27 [shape = 'u8[8192]{0}', space=vmem, size = 0x2000, scoped, tag = 'input window, operand 20, single buffered']
    #allocation28 [shape = 's32[1]{0}', space=sflag, size = 0x4, scoped, tag = 'scoped memory for tpu_custom_call.1']
    #allocation29 [shape = 'u8[512]{0}', space=vmem, size = 0x400, scoped, tag = 'input window, operand 21, single buffered']
    #allocation30 [shape = 'u8[8192]{0}', space=vmem, size = 0x2000, scoped, tag = 'output window, operand 0']
    %29 = vsyncpa [#allocation7], 0
    %s30 = scalar_lea.sflag [#allocation7], 1
    %31 = vsyncpa %s30, 0
    %32 = vsyncpa [#allocation10], 0
    %s33 = scalar_lea.sflag [#allocation10], 1
    %34 = vsyncpa %s33, 0
    %35 = vsyncpa [#allocation13], 0
    %36 = vsyncpa [#allocation16], 0
    %37 = vsyncpa [#allocation19], 0
    %38 = vsyncpa [#allocation22], 0
    %39 = vsyncpa [#allocation25], 0
    %40 = vsyncpa [#allocation28], 0
    %41 = vsyncpa [#allocation8], 0
    %s42 = scalar_lea.sflag [#allocation8], 1
    %43 = vsyncpa %s42, 0
    loop: start=0, step=1, limit=4
    $region2: #{tpu_custom_call.1} parent=1 // loop_pre_header
      _
    $region3: #{tpu_custom_call.1} parent=1 // loop_header
      %s45 = sphi 0, %s49
      %p46 = scmp.ge.s32.totalorder %s45, 4
      %s52 = sphi 0, %s64
      %s53 = sphi 0, %s60
      %s54 = sphi 0, %s52
      %s55 = sphi 0, %s53
      %s56 = sphi 0, %s54
      %s57 = sphi 0, %s55
      %s67 = sphi 0, %s69
      %s70 = sphi 0, %s67
      %s71 = sphi 0, %s70
      %s87 = sphi 0, %s71
      %s93 = sphi 0, %s95
      %s96 = sphi 0, %s93
      %s97 = sphi 0, %s96
      %s113 = sphi 0, %s97
      %s119 = sphi 0, %s121
      %s122 = sphi 0, %s119
      %s123 = sphi 0, %s122
      %s139 = sphi 0, %s123
      %s145 = sphi 0, %s147
      %s148 = sphi 0, %s145
      %s149 = sphi 0, %s148
      %s165 = sphi 0, %s149
      %s169 = sphi 0, %s169
      %s171 = sphi 0, %s169
      %s172 = sphi 0, %s171
      %s186 = sphi 0, %s172
      %s190 = sphi 0, %s190
      %s192 = sphi 0, %s190
      %s193 = sphi 0, %s192
      %s207 = sphi 0, %s193
      %s211 = sphi 0, %s211
      %s213 = sphi 0, %s211
      %s214 = sphi 0, %s213
      %s228 = sphi 0, %s214
      %s232 = sphi 0, %s232
      %s234 = sphi 0, %s232
      %s235 = sphi 0, %s234
      %s249 = sphi 0, %s235
      %s253 = sphi 0, %s253
      %s255 = sphi 0, %s253
      %s256 = sphi 0, %s255
      %s270 = sphi 0, %s256
      %s274 = sphi 0, %s274
      %s276 = sphi 0, %s274
      %s277 = sphi 0, %s276
      %s291 = sphi 0, %s277
      %s295 = sphi 0, %s295
      %s297 = sphi 0, %s295
      %s298 = sphi 0, %s297
      %s312 = sphi 0, %s298
      %s316 = sphi 0, %s316
      %s318 = sphi 0, %s316
      %s319 = sphi 0, %s318
      %s333 = sphi 0, %s319
      %s337 = sphi 0, %s337
      %s339 = sphi 0, %s337
      %s340 = sphi 0, %s339
      %s354 = sphi 0, %s340
      %s358 = sphi 0, %s358
      %s360 = sphi 0, %s358
      %s361 = sphi 0, %s360
      %s375 = sphi 0, %s361
      %s379 = sphi 0, %s379
      %s381 = sphi 0, %s379
      %s382 = sphi 0, %s381
      %s396 = sphi 0, %s382
      %s400 = sphi 0, %s400
      %s402 = sphi 0, %s400
      %s403 = sphi 0, %s402
      %s417 = sphi 0, %s403
      %s421 = sphi 0, %s421
      %s423 = sphi 0, %s421
      %s424 = sphi 0, %s423
      %s438 = sphi 0, %s424
      %s442 = sphi 0, %s442
      %s444 = sphi 0, %s442
      %s445 = sphi 0, %s444
      %s459 = sphi 0, %s445
      %s463 = sphi 0, %s463
      %s465 = sphi 0, %s463
      %s466 = sphi 0, %s465
      %s480 = sphi 0, %s466
      %s484 = sphi 0, %s484
      %s486 = sphi 0, %s484
      %s487 = sphi 0, %s486
      %s501 = sphi 0, %s487
      %s505 = sphi 0, %s505
      %s507 = sphi 0, %s505
      %s508 = sphi 0, %s507
      %s522 = sphi 0, %s508
      %s526 = sphi 0, %s526
      %s528 = sphi 0, %s526
      %s529 = sphi 0, %s528
      %s543 = sphi 0, %s529
      %s547 = sphi 0, %s547
      %s549 = sphi 0, %s547
      %s550 = sphi 0, %s549
      %s564 = sphi 0, %s550
      %s568 = sphi 0, %s568
      %s570 = sphi 0, %s568
      %s571 = sphi 0, %s570
      %s585 = sphi 0, %s571
      %s593 = sphi 0, %s595
      %s596 = sphi 0, %s593
      %s597 = sphi 0, %s596
      %s613 = sphi 0, %s597
    $region4: #{tpu_custom_call.1} parent=1 // loop_header_branch
      %48 = sbr.rel (%p46) target = $region8
    $region5: #{tpu_custom_call.1} parent=1 // loop_body
      %s50 = ssub.s32 %s45, 1
      %s51 = ssub.s32 %s45, 2
      %s58 = sadd.s32 1, %s53
      %p59 = scmp.ge.s32.totalorder %s58, 1
      %s60 = scalar_select %p59, 0, %s58
      %s61 = sadd.s32 1, %s52
      %s62 = scalar_select %p59, %s61, %s52
      %p63 = scmp.ge.s32.totalorder %s62, 2
      %s64 = scalar_select %p63, 0, %s62
      %s65 = ssub.s32 %s52, %s64
      %p66 = scmp.eq.s32.totalorder %s65, 0
      %s68 = sadd.s32 %s67, 1
      %s69 = scalar_select %p66, %s67, %s68
      %p72 = pneg %p66
      %p73 = scmp.eq.s32.totalorder %s45, 1
      %p74 = por %p72, %p73
      %p75 = scmp.ne.s32.totalorder %s67, %s70
      %p76 = scmp.eq.s32.totalorder %s45, 0
      %p77 = por %p75, %p76
      %p78 = scmp.ne.s32.totalorder %s67, %s70
      %p79 = scmp.eq.s32.totalorder %s50, 1
      %p80 = por %p78, %p79
      %p81 = scmp.ne.s32.totalorder %s70, %s71
      %p82 = scmp.eq.s32.totalorder %s50, 0
      %p83 = por %p81, %p82
      %p84 = scmp.ne.s32.totalorder %s70, %s71
      %p85 = scmp.eq.s32.totalorder %s51, 1
      %p86 = por %p84, %p85
      %p88 = scmp.ne.s32.totalorder %s71, %s87
      %p89 = scmp.eq.s32.totalorder %s51, 0
      %p90 = por %p88, %p89
      %s91 = ssub.s32 %s52, %s64
      %p92 = scmp.eq.s32.totalorder %s91, 0
      %s94 = sadd.s32 %s93, 1
      %s95 = scalar_select %p92, %s93, %s94
      %p98 = pneg %p92
      %p99 = scmp.eq.s32.totalorder %s45, 1
      %p100 = por %p98, %p99
      %p101 = scmp.ne.s32.totalorder %s93, %s96
      %p102 = scmp.eq.s32.totalorder %s45, 0
      %p103 = por %p101, %p102
      %p104 = scmp.ne.s32.totalorder %s93, %s96
      %p105 = scmp.eq.s32.totalorder %s50, 1
      %p106 = por %p104, %p105
      %p107 = scmp.ne.s32.totalorder %s96, %s97
      %p108 = scmp.eq.s32.totalorder %s50, 0
      %p109 = por %p107, %p108
      %p110 = scmp.ne.s32.totalorder %s96, %s97
      %p111 = scmp.eq.s32.totalorder %s51, 1
      %p112 = por %p110, %p111
      %p114 = scmp.ne.s32.totalorder %s97, %s113
      %p115 = scmp.eq.s32.totalorder %s51, 0
      %p116 = por %p114, %p115
      %s117 = ssub.s32 %s52, %s64
      %p118 = scmp.eq.s32.totalorder %s117, 0
      %s120 = sadd.s32 %s119, 1
      %s121 = scalar_select %p118, %s119, %s120
      %p124 = pneg %p118
      %p125 = scmp.eq.s32.totalorder %s45, 1
      %p126 = por %p124, %p125
      %p127 = scmp.ne.s32.totalorder %s119, %s122
      %p128 = scmp.eq.s32.totalorder %s45, 0
      %p129 = por %p127, %p128
      %p130 = scmp.ne.s32.totalorder %s119, %s122
      %p131 = scmp.eq.s32.totalorder %s50, 1
      %p132 = por %p130, %p131
      %p133 = scmp.ne.s32.totalorder %s122, %s123
      %p134 = scmp.eq.s32.totalorder %s50, 0
      %p135 = por %p133, %p134
      %p136 = scmp.ne.s32.totalorder %s122, %s123
      %p137 = scmp.eq.s32.totalorder %s51, 1
      %p138 = por %p136, %p137
      %p140 = scmp.ne.s32.totalorder %s123, %s139
      %p141 = scmp.eq.s32.totalorder %s51, 0
      %p142 = por %p140, %p141
      %s143 = ssub.s32 %s52, %s64
      %p144 = scmp.eq.s32.totalorder %s143, 0
      %s146 = sadd.s32 %s145, 1
      %s147 = scalar_select %p144, %s145, %s146
      %p150 = pneg %p144
      %p151 = scmp.eq.s32.totalorder %s45, 1
      %p152 = por %p150, %p151
      %p153 = scmp.ne.s32.totalorder %s145, %s148
      %p154 = scmp.eq.s32.totalorder %s45, 0
      %p155 = por %p153, %p154
      %p156 = scmp.ne.s32.totalorder %s145, %s148
      %p157 = scmp.eq.s32.totalorder %s50, 1
      %p158 = por %p156, %p157
      %p159 = scmp.ne.s32.totalorder %s148, %s149
      %p160 = scmp.eq.s32.totalorder %s50, 0
      %p161 = por %p159, %p160
      %p162 = scmp.ne.s32.totalorder %s148, %s149
      %p163 = scmp.eq.s32.totalorder %s51, 1
      %p164 = por %p162, %p163
      %p166 = scmp.ne.s32.totalorder %s149, %s165
      %p167 = scmp.eq.s32.totalorder %s51, 0
      %p168 = por %p166, %p167
      %s170 = sadd.s32 %s169, 1
      %p173 = scmp.eq.s32.totalorder %s45, 1
      %p174 = scmp.ne.s32.totalorder %s169, %s171
      %p175 = scmp.eq.s32.totalorder %s45, 0
      %p176 = por %p174, %p175
      %p177 = scmp.ne.s32.totalorder %s169, %s171
      %p178 = scmp.eq.s32.totalorder %s50, 1
      %p179 = por %p177, %p178
      %p180 = scmp.ne.s32.totalorder %s171, %s172
      %p181 = scmp.eq.s32.totalorder %s50, 0
      %p182 = por %p180, %p181
      %p183 = scmp.ne.s32.totalorder %s171, %s172
      %p184 = scmp.eq.s32.totalorder %s51, 1
      %p185 = por %p183, %p184
      %p187 = scmp.ne.s32.totalorder %s172, %s186
      %p188 = scmp.eq.s32.totalorder %s51, 0
      %p189 = por %p187, %p188
      %s191 = sadd.s32 %s190, 1
      %p194 = scmp.eq.s32.totalorder %s45, 1
      %p195 = scmp.ne.s32.totalorder %s190, %s192
      %p196 = scmp.eq.s32.totalorder %s45, 0
      %p197 = por %p195, %p196
      %p198 = scmp.ne.s32.totalorder %s190, %s192
      %p199 = scmp.eq.s32.totalorder %s50, 1
      %p200 = por %p198, %p199
      %p201 = scmp.ne.s32.totalorder %s192, %s193
      %p202 = scmp.eq.s32.totalorder %s50, 0
      %p203 = por %p201, %p202
      %p204 = scmp.ne.s32.totalorder %s192, %s193
      %p205 = scmp.eq.s32.totalorder %s51, 1
      %p206 = por %p204, %p205
      %p208 = scmp.ne.s32.totalorder %s193, %s207
      %p209 = scmp.eq.s32.totalorder %s51, 0
      %p210 = por %p208, %p209
      %s212 = sadd.s32 %s211, 1
      %p215 = scmp.eq.s32.totalorder %s45, 1
      %p216 = scmp.ne.s32.totalorder %s211, %s213
      %p217 = scmp.eq.s32.totalorder %s45, 0
      %p218 = por %p216, %p217
      %p219 = scmp.ne.s32.totalorder %s211, %s213
      %p220 = scmp.eq.s32.totalorder %s50, 1
      %p221 = por %p219, %p220
      %p222 = scmp.ne.s32.totalorder %s213, %s214
      %p223 = scmp.eq.s32.totalorder %s50, 0
      %p224 = por %p222, %p223
      %p225 = scmp.ne.s32.totalorder %s213, %s214
      %p226 = scmp.eq.s32.totalorder %s51, 1
      %p227 = por %p225, %p226
      %p229 = scmp.ne.s32.totalorder %s214, %s228
      %p230 = scmp.eq.s32.totalorder %s51, 0
      %p231 = por %p229, %p230
      %s233 = sadd.s32 %s232, 1
      %p236 = scmp.eq.s32.totalorder %s45, 1
      %p237 = scmp.ne.s32.totalorder %s232, %s234
      %p238 = scmp.eq.s32.totalorder %s45, 0
      %p239 = por %p237, %p238
      %p240 = scmp.ne.s32.totalorder %s232, %s234
      %p241 = scmp.eq.s32.totalorder %s50, 1
      %p242 = por %p240, %p241
      %p243 = scmp.ne.s32.totalorder %s234, %s235
      %p244 = scmp.eq.s32.totalorder %s50, 0
      %p245 = por %p243, %p244
      %p246 = scmp.ne.s32.totalorder %s234, %s235
      %p247 = scmp.eq.s32.totalorder %s51, 1
      %p248 = por %p246, %p247
      %p250 = scmp.ne.s32.totalorder %s235, %s249
      %p251 = scmp.eq.s32.totalorder %s51, 0
      %p252 = por %p250, %p251
      %s254 = sadd.s32 %s253, 1
      %p257 = scmp.eq.s32.totalorder %s45, 1
      %p258 = scmp.ne.s32.totalorder %s253, %s255
      %p259 = scmp.eq.s32.totalorder %s45, 0
      %p260 = por %p258, %p259
      %p261 = scmp.ne.s32.totalorder %s253, %s255
      %p262 = scmp.eq.s32.totalorder %s50, 1
      %p263 = por %p261, %p262
      %p264 = scmp.ne.s32.totalorder %s255, %s256
      %p265 = scmp.eq.s32.totalorder %s50, 0
      %p266 = por %p264, %p265
      %p267 = scmp.ne.s32.totalorder %s255, %s256
      %p268 = scmp.eq.s32.totalorder %s51, 1
      %p269 = por %p267, %p268
      %p271 = scmp.ne.s32.totalorder %s256, %s270
      %p272 = scmp.eq.s32.totalorder %s51, 0
      %p273 = por %p271, %p272
      %s275 = sadd.s32 %s274, 1
      %p278 = scmp.eq.s32.totalorder %s45, 1
      %p279 = scmp.ne.s32.totalorder %s274, %s276
      %p280 = scmp.eq.s32.totalorder %s45, 0
      %p281 = por %p279, %p280
      %p282 = scmp.ne.s32.totalorder %s274, %s276
      %p283 = scmp.eq.s32.totalorder %s50, 1
      %p284 = por %p282, %p283
      %p285 = scmp.ne.s32.totalorder %s276, %s277
      %p286 = scmp.eq.s32.totalorder %s50, 0
      %p287 = por %p285, %p286
      %p288 = scmp.ne.s32.totalorder %s276, %s277
      %p289 = scmp.eq.s32.totalorder %s51, 1
      %p290 = por %p288, %p289
      %p292 = scmp.ne.s32.totalorder %s277, %s291
      %p293 = scmp.eq.s32.totalorder %s51, 0
      %p294 = por %p292, %p293
      %s296 = sadd.s32 %s295, 1
      %p299 = scmp.eq.s32.totalorder %s45, 1
      %p300 = scmp.ne.s32.totalorder %s295, %s297
      %p301 = scmp.eq.s32.totalorder %s45, 0
      %p302 = por %p300, %p301
      %p303 = scmp.ne.s32.totalorder %s295, %s297
      %p304 = scmp.eq.s32.totalorder %s50, 1
      %p305 = por %p303, %p304
      %p306 = scmp.ne.s32.totalorder %s297, %s298
      %p307 = scmp.eq.s32.totalorder %s50, 0
      %p308 = por %p306, %p307
      %p309 = scmp.ne.s32.totalorder %s297, %s298
      %p310 = scmp.eq.s32.totalorder %s51, 1
      %p311 = por %p309, %p310
      %p313 = scmp.ne.s32.totalorder %s298, %s312
      %p314 = scmp.eq.s32.totalorder %s51, 0
      %p315 = por %p313, %p314
      %s317 = sadd.s32 %s316, 1
      %p320 = scmp.eq.s32.totalorder %s45, 1
      %p321 = scmp.ne.s32.totalorder %s316, %s318
      %p322 = scmp.eq.s32.totalorder %s45, 0
      %p323 = por %p321, %p322
      %p324 = scmp.ne.s32.totalorder %s316, %s318
      %p325 = scmp.eq.s32.totalorder %s50, 1
      %p326 = por %p324, %p325
      %p327 = scmp.ne.s32.totalorder %s318, %s319
      %p328 = scmp.eq.s32.totalorder %s50, 0
      %p329 = por %p327, %p328
      %p330 = scmp.ne.s32.totalorder %s318, %s319
      %p331 = scmp.eq.s32.totalorder %s51, 1
      %p332 = por %p330, %p331
      %p334 = scmp.ne.s32.totalorder %s319, %s333
      %p335 = scmp.eq.s32.totalorder %s51, 0
      %p336 = por %p334, %p335
      %s338 = sadd.s32 %s337, 1
      %p341 = scmp.eq.s32.totalorder %s45, 1
      %p342 = scmp.ne.s32.totalorder %s337, %s339
      %p343 = scmp.eq.s32.totalorder %s45, 0
      %p344 = por %p342, %p343
      %p345 = scmp.ne.s32.totalorder %s337, %s339
      %p346 = scmp.eq.s32.totalorder %s50, 1
      %p347 = por %p345, %p346
      %p348 = scmp.ne.s32.totalorder %s339, %s340
      %p349 = scmp.eq.s32.totalorder %s50, 0
      %p350 = por %p348, %p349
      %p351 = scmp.ne.s32.totalorder %s339, %s340
      %p352 = scmp.eq.s32.totalorder %s51, 1
      %p353 = por %p351, %p352
      %p355 = scmp.ne.s32.totalorder %s340, %s354
      %p356 = scmp.eq.s32.totalorder %s51, 0
      %p357 = por %p355, %p356
      %s359 = sadd.s32 %s358, 1
      %p362 = scmp.eq.s32.totalorder %s45, 1
      %p363 = scmp.ne.s32.totalorder %s358, %s360
      %p364 = scmp.eq.s32.totalorder %s45, 0
      %p365 = por %p363, %p364
      %p366 = scmp.ne.s32.totalorder %s358, %s360
      %p367 = scmp.eq.s32.totalorder %s50, 1
      %p368 = por %p366, %p367
      %p369 = scmp.ne.s32.totalorder %s360, %s361
      %p370 = scmp.eq.s32.totalorder %s50, 0
      %p371 = por %p369, %p370
      %p372 = scmp.ne.s32.totalorder %s360, %s361
      %p373 = scmp.eq.s32.totalorder %s51, 1
      %p374 = por %p372, %p373
      %p376 = scmp.ne.s32.totalorder %s361, %s375
      %p377 = scmp.eq.s32.totalorder %s51, 0
      %p378 = por %p376, %p377
      %s380 = sadd.s32 %s379, 1
      %p383 = scmp.eq.s32.totalorder %s45, 1
      %p384 = scmp.ne.s32.totalorder %s379, %s381
      %p385 = scmp.eq.s32.totalorder %s45, 0
      %p386 = por %p384, %p385
      %p387 = scmp.ne.s32.totalorder %s379, %s381
      %p388 = scmp.eq.s32.totalorder %s50, 1
      %p389 = por %p387, %p388
      %p390 = scmp.ne.s32.totalorder %s381, %s382
      %p391 = scmp.eq.s32.totalorder %s50, 0
      %p392 = por %p390, %p391
      %p393 = scmp.ne.s32.totalorder %s381, %s382
      %p394 = scmp.eq.s32.totalorder %s51, 1
      %p395 = por %p393, %p394
      %p397 = scmp.ne.s32.totalorder %s382, %s396
      %p398 = scmp.eq.s32.totalorder %s51, 0
      %p399 = por %p397, %p398
      %s401 = sadd.s32 %s400, 1
      %p404 = scmp.eq.s32.totalorder %s45, 1
      %p405 = scmp.ne.s32.totalorder %s400, %s402
      %p406 = scmp.eq.s32.totalorder %s45, 0
      %p407 = por %p405, %p406
      %p408 = scmp.ne.s32.totalorder %s400, %s402
      %p409 = scmp.eq.s32.totalorder %s50, 1
      %p410 = por %p408, %p409
      %p411 = scmp.ne.s32.totalorder %s402, %s403
      %p412 = scmp.eq.s32.totalorder %s50, 0
      %p413 = por %p411, %p412
      %p414 = scmp.ne.s32.totalorder %s402, %s403
      %p415 = scmp.eq.s32.totalorder %s51, 1
      %p416 = por %p414, %p415
      %p418 = scmp.ne.s32.totalorder %s403, %s417
      %p419 = scmp.eq.s32.totalorder %s51, 0
      %p420 = por %p418, %p419
      %s422 = sadd.s32 %s421, 1
      %p425 = scmp.eq.s32.totalorder %s45, 1
      %p426 = scmp.ne.s32.totalorder %s421, %s423
      %p427 = scmp.eq.s32.totalorder %s45, 0
      %p428 = por %p426, %p427
      %p429 = scmp.ne.s32.totalorder %s421, %s423
      %p430 = scmp.eq.s32.totalorder %s50, 1
      %p431 = por %p429, %p430
      %p432 = scmp.ne.s32.totalorder %s423, %s424
      %p433 = scmp.eq.s32.totalorder %s50, 0
      %p434 = por %p432, %p433
      %p435 = scmp.ne.s32.totalorder %s423, %s424
      %p436 = scmp.eq.s32.totalorder %s51, 1
      %p437 = por %p435, %p436
      %p439 = scmp.ne.s32.totalorder %s424, %s438
      %p440 = scmp.eq.s32.totalorder %s51, 0
      %p441 = por %p439, %p440
      %s443 = sadd.s32 %s442, 1
      %p446 = scmp.eq.s32.totalorder %s45, 1
      %p447 = scmp.ne.s32.totalorder %s442, %s444
      %p448 = scmp.eq.s32.totalorder %s45, 0
      %p449 = por %p447, %p448
      %p450 = scmp.ne.s32.totalorder %s442, %s444
      %p451 = scmp.eq.s32.totalorder %s50, 1
      %p452 = por %p450, %p451
      %p453 = scmp.ne.s32.totalorder %s444, %s445
      %p454 = scmp.eq.s32.totalorder %s50, 0
      %p455 = por %p453, %p454
      %p456 = scmp.ne.s32.totalorder %s444, %s445
      %p457 = scmp.eq.s32.totalorder %s51, 1
      %p458 = por %p456, %p457
      %p460 = scmp.ne.s32.totalorder %s445, %s459
      %p461 = scmp.eq.s32.totalorder %s51, 0
      %p462 = por %p460, %p461
      %s464 = sadd.s32 %s463, 1
      %p467 = scmp.eq.s32.totalorder %s45, 1
      %p468 = scmp.ne.s32.totalorder %s463, %s465
      %p469 = scmp.eq.s32.totalorder %s45, 0
      %p470 = por %p468, %p469
      %p471 = scmp.ne.s32.totalorder %s463, %s465
      %p472 = scmp.eq.s32.totalorder %s50, 1
      %p473 = por %p471, %p472
      %p474 = scmp.ne.s32.totalorder %s465, %s466
      %p475 = scmp.eq.s32.totalorder %s50, 0
      %p476 = por %p474, %p475
      %p477 = scmp.ne.s32.totalorder %s465, %s466
      %p478 = scmp.eq.s32.totalorder %s51, 1
      %p479 = por %p477, %p478
      %p481 = scmp.ne.s32.totalorder %s466, %s480
      %p482 = scmp.eq.s32.totalorder %s51, 0
      %p483 = por %p481, %p482
      %s485 = sadd.s32 %s484, 1
      %p488 = scmp.eq.s32.totalorder %s45, 1
      %p489 = scmp.ne.s32.totalorder %s484, %s486
      %p490 = scmp.eq.s32.totalorder %s45, 0
      %p491 = por %p489, %p490
      %p492 = scmp.ne.s32.totalorder %s484, %s486
      %p493 = scmp.eq.s32.totalorder %s50, 1
      %p494 = por %p492, %p493
      %p495 = scmp.ne.s32.totalorder %s486, %s487
      %p496 = scmp.eq.s32.totalorder %s50, 0
      %p497 = por %p495, %p496
      %p498 = scmp.ne.s32.totalorder %s486, %s487
      %p499 = scmp.eq.s32.totalorder %s51, 1
      %p500 = por %p498, %p499
      %p502 = scmp.ne.s32.totalorder %s487, %s501
      %p503 = scmp.eq.s32.totalorder %s51, 0
      %p504 = por %p502, %p503
      %s506 = sadd.s32 %s505, 1
      %p509 = scmp.eq.s32.totalorder %s45, 1
      %p510 = scmp.ne.s32.totalorder %s505, %s507
      %p511 = scmp.eq.s32.totalorder %s45, 0
      %p512 = por %p510, %p511
      %p513 = scmp.ne.s32.totalorder %s505, %s507
      %p514 = scmp.eq.s32.totalorder %s50, 1
      %p515 = por %p513, %p514
      %p516 = scmp.ne.s32.totalorder %s507, %s508
      %p517 = scmp.eq.s32.totalorder %s50, 0
      %p518 = por %p516, %p517
      %p519 = scmp.ne.s32.totalorder %s507, %s508
      %p520 = scmp.eq.s32.totalorder %s51, 1
      %p521 = por %p519, %p520
      %p523 = scmp.ne.s32.totalorder %s508, %s522
      %p524 = scmp.eq.s32.totalorder %s51, 0
      %p525 = por %p523, %p524
      %s527 = sadd.s32 %s526, 1
      %p530 = scmp.eq.s32.totalorder %s45, 1
      %p531 = scmp.ne.s32.totalorder %s526, %s528
      %p532 = scmp.eq.s32.totalorder %s45, 0
      %p533 = por %p531, %p532
      %p534 = scmp.ne.s32.totalorder %s526, %s528
      %p535 = scmp.eq.s32.totalorder %s50, 1
      %p536 = por %p534, %p535
      %p537 = scmp.ne.s32.totalorder %s528, %s529
      %p538 = scmp.eq.s32.totalorder %s50, 0
      %p539 = por %p537, %p538
      %p540 = scmp.ne.s32.totalorder %s528, %s529
      %p541 = scmp.eq.s32.totalorder %s51, 1
      %p542 = por %p540, %p541
      %p544 = scmp.ne.s32.totalorder %s529, %s543
      %p545 = scmp.eq.s32.totalorder %s51, 0
      %p546 = por %p544, %p545
      %s548 = sadd.s32 %s547, 1
      %p551 = scmp.eq.s32.totalorder %s45, 1
      %p552 = scmp.ne.s32.totalorder %s547, %s549
      %p553 = scmp.eq.s32.totalorder %s45, 0
      %p554 = por %p552, %p553
      %p555 = scmp.ne.s32.totalorder %s547, %s549
      %p556 = scmp.eq.s32.totalorder %s50, 1
      %p557 = por %p555, %p556
      %p558 = scmp.ne.s32.totalorder %s549, %s550
      %p559 = scmp.eq.s32.totalorder %s50, 0
      %p560 = por %p558, %p559
      %p561 = scmp.ne.s32.totalorder %s549, %s550
      %p562 = scmp.eq.s32.totalorder %s51, 1
      %p563 = por %p561, %p562
      %p565 = scmp.ne.s32.totalorder %s550, %s564
      %p566 = scmp.eq.s32.totalorder %s51, 0
      %p567 = por %p565, %p566
      %s569 = sadd.s32 %s568, 1
      %p572 = scmp.eq.s32.totalorder %s45, 1
      %p573 = scmp.ne.s32.totalorder %s568, %s570
      %p574 = scmp.eq.s32.totalorder %s45, 0
      %p575 = por %p573, %p574
      %p576 = scmp.ne.s32.totalorder %s568, %s570
      %p577 = scmp.eq.s32.totalorder %s50, 1
      %p578 = por %p576, %p577
      %p579 = scmp.ne.s32.totalorder %s570, %s571
      %p580 = scmp.eq.s32.totalorder %s50, 0
      %p581 = por %p579, %p580
      %p582 = scmp.ne.s32.totalorder %s570, %s571
      %p583 = scmp.eq.s32.totalorder %s51, 1
      %p584 = por %p582, %p583
      %p586 = scmp.ne.s32.totalorder %s571, %s585
      %p587 = scmp.eq.s32.totalorder %s51, 0
      %p588 = por %p586, %p587
      %s589 = ssub.s32 %s52, %s64
      %s590 = ssub.s32 %s53, %s60
      %s591 = sor.u32 %s589, %s590
      %p592 = scmp.eq.s32.totalorder %s591, 0
      %s594 = sadd.s32 %s593, 1
      %s595 = scalar_select %p592, %s593, %s594
      %p598 = pneg %p592
      %p599 = scmp.eq.s32.totalorder %s45, 1
      %p600 = por %p598, %p599
      %p601 = scmp.ne.s32.totalorder %s593, %s596
      %p602 = scmp.eq.s32.totalorder %s45, 0
      %p603 = por %p601, %p602
      %p604 = scmp.ne.s32.totalorder %s593, %s596
      %p605 = scmp.eq.s32.totalorder %s50, 1
      %p606 = por %p604, %p605
      %p607 = scmp.ne.s32.totalorder %s596, %s597
      %p608 = scmp.eq.s32.totalorder %s50, 0
      %p609 = por %p607, %p608
      %p610 = scmp.ne.s32.totalorder %s596, %s597
      %p611 = scmp.eq.s32.totalorder %s51, 1
      %p612 = por %p610, %p611
      %p614 = scmp.ne.s32.totalorder %s597, %s613
      %p615 = scmp.eq.s32.totalorder %s51, 0
      %p616 = por %p614, %p615
      %p617 = scmp.le.s32.totalorder 1, %s45
      %p618 = scmp.lt.s32.totalorder %s45, 3
      %p619 = pnand %p617, %p618
      %p620 = pneg %p619
      // Predicated region
      $region9: #{tpu_custom_call.1} parent=5 // pred_check
        _
      $region10: #{tpu_custom_call.1} parent=5 // pred_check_branch
        %622 = sbr.rel (%p619) target = $region12
      $region11: #{tpu_custom_call.1} parent=5 // pred_region
        %s623 = ssub.s32 %s45, 1
        // Predicated region
        $region13: #{tpu_custom_call.1} parent=11 // pred_check
          %p624 = pneg %p182
        $region14: #{tpu_custom_call.1} parent=11 // pred_check_branch
          %626 = sbr.rel (%p624) target = $region16
        $region15: #{tpu_custom_call.1} parent=11 // pred_region
          _
        $region16: #{tpu_custom_call.1} parent=11 // pred_fallthru
          _
        // Predicated region
        $region17: #{tpu_custom_call.1} parent=11 // pred_check
          %p627 = pneg %p203
        $region18: #{tpu_custom_call.1} parent=11 // pred_check_branch
          %629 = sbr.rel (%p627) target = $region20
        $region19: #{tpu_custom_call.1} parent=11 // pred_region
          _
        $region20: #{tpu_custom_call.1} parent=11 // pred_fallthru
          _
        // Predicated region
        $region21: #{tpu_custom_call.1} parent=11 // pred_check
          %p630 = pneg %p224
        $region22: #{tpu_custom_call.1} parent=11 // pred_check_branch
          %632 = sbr.rel (%p630) target = $region24
        $region23: #{tpu_custom_call.1} parent=11 // pred_region
          _
        $region24: #{tpu_custom_call.1} parent=11 // pred_fallthru
          _
        // Predicated region
        $region25: #{tpu_custom_call.1} parent=11 // pred_check
          %p633 = pneg %p245
        $region26: #{tpu_custom_call.1} parent=11 // pred_check_branch
          %635 = sbr.rel (%p633) target = $region28
        $region27: #{tpu_custom_call.1} parent=11 // pred_region
          _
        $region28: #{tpu_custom_call.1} parent=11 // pred_fallthru
          _
        // Predicated region
        $region29: #{tpu_custom_call.1} parent=11 // pred_check
          %p636 = pneg %p266
        $region30: #{tpu_custom_call.1} parent=11 // pred_check_branch
          %638 = sbr.rel (%p636) target = $region32
        $region31: #{tpu_custom_call.1} parent=11 // pred_region
          _
        $region32: #{tpu_custom_call.1} parent=11 // pred_fallthru
          _
        // Predicated region
        $region33: #{tpu_custom_call.1} parent=11 // pred_check
          %p639 = pneg %p287
        $region34: #{tpu_custom_call.1} parent=11 // pred_check_branch
          %641 = sbr.rel (%p639) target = $region36
        $region35: #{tpu_custom_call.1} parent=11 // pred_region
          %643 = vsyncadd [#allocation13], 0
          %s645 = sshll.u32 %s9, 4
          %s646 = int_to_ptr.hbm [resolvable:$true] %s645
          %s647 = sshll.u32 [#allocation12], 4
          %s648 = int_to_ptr.vmem [resolvable:$true] %s647
          %650 = dma.hbm_to_vmem [thread:$0]  %s646, 16, %s648, [#allocation13]
        $region36: #{tpu_custom_call.1} parent=11 // pred_fallthru
          _
        // Predicated region
        $region37: #{tpu_custom_call.1} parent=11 // pred_check
          %p651 = pneg %p308
        $region38: #{tpu_custom_call.1} parent=11 // pred_check_branch
          %653 = sbr.rel (%p651) target = $region40
        $region39: #{tpu_custom_call.1} parent=11 // pred_region
          %655 = vsyncadd [#allocation13], 0
          %s657 = sshll.u32 %s10, 4
          %s658 = int_to_ptr.hbm [resolvable:$true] %s657
          %s659 = sshll.u32 [#allocation14], 4
          %s660 = int_to_ptr.vmem [resolvable:$true] %s659
          %662 = dma.hbm_to_vmem [thread:$0]  %s658, 16, %s660, [#allocation13]
        $region40: #{tpu_custom_call.1} parent=11 // pred_fallthru
          _
        // Predicated region
        $region41: #{tpu_custom_call.1} parent=11 // pred_check
          %p663 = pneg %p329
        $region42: #{tpu_custom_call.1} parent=11 // pred_check_branch
          %665 = sbr.rel (%p663) target = $region44
        $region43: #{tpu_custom_call.1} parent=11 // pred_region
          %667 = vsyncadd [#allocation16], 0
          %s669 = sshll.u32 %s11, 4
          %s670 = int_to_ptr.hbm [resolvable:$true] %s669
          %s671 = sshll.u32 [#allocation15], 4
          %s672 = int_to_ptr.vmem [resolvable:$true] %s671
          %674 = dma.hbm_to_vmem [thread:$0]  %s670, 16, %s672, [#allocation16]
        $region44: #{tpu_custom_call.1} parent=11 // pred_fallthru
          _
        // Predicated region
        $region45: #{tpu_custom_call.1} parent=11 // pred_check
          %p675 = pneg %p350
        $region46: #{tpu_custom_call.1} parent=11 // pred_check_branch
          %677 = sbr.rel (%p675) target = $region48
        $region47: #{tpu_custom_call.1} parent=11 // pred_region
          _
        $region48: #{tpu_custom_call.1} parent=11 // pred_fallthru
          _
        // Predicated region
        $region49: #{tpu_custom_call.1} parent=11 // pred_check
          %p678 = pneg %p371
        $region50: #{tpu_custom_call.1} parent=11 // pred_check_branch
          %680 = sbr.rel (%p678) target = $region52
        $region51: #{tpu_custom_call.1} parent=11 // pred_region
          %682 = vsyncadd [#allocation16], 0
          %s684 = sshll.u32 %s13, 4
          %s685 = int_to_ptr.hbm [resolvable:$true] %s684
          %s686 = sshll.u32 [#allocation17], 4
          %s687 = int_to_ptr.vmem [resolvable:$true] %s686
          %689 = dma.hbm_to_vmem [thread:$0]  %s685, 16, %s687, [#allocation16]
        $region52: #{tpu_custom_call.1} parent=11 // pred_fallthru
          _
        // Predicated region
        $region53: #{tpu_custom_call.1} parent=11 // pred_check
          %p690 = pneg %p392
        $region54: #{tpu_custom_call.1} parent=11 // pred_check_branch
          %692 = sbr.rel (%p690) target = $region56
        $region55: #{tpu_custom_call.1} parent=11 // pred_region
          %694 = vsyncadd [#allocation19], 0
          %s695 = sshll.u32 %s14, 4
          %s696 = int_to_ptr.hbm [resolvable:$true] %s695
          %s697 = sshll.u32 [#allocation18], 4
          %s698 = int_to_ptr.vmem [resolvable:$true] %s697
          %703 = dma.hbm_to_vmem [thread:$0]  %s696, 256, %s698, [#allocation19], 64, 64, 4
        $region56: #{tpu_custom_call.1} parent=11 // pred_fallthru
          _
        // Predicated region
        $region57: #{tpu_custom_call.1} parent=11 // pred_check
          %p704 = pneg %p413
        $region58: #{tpu_custom_call.1} parent=11 // pred_check_branch
          %706 = sbr.rel (%p704) target = $region60
        $region59: #{tpu_custom_call.1} parent=11 // pred_region
          %708 = vsyncadd [#allocation19], 0
          %s710 = sshll.u32 %s15, 4
          %s711 = int_to_ptr.hbm [resolvable:$true] %s710
          %s712 = sshll.u32 [#allocation20], 4
          %s713 = int_to_ptr.vmem [resolvable:$true] %s712
          %715 = dma.hbm_to_vmem [thread:$0]  %s711, 16, %s713, [#allocation19]
        $region60: #{tpu_custom_call.1} parent=11 // pred_fallthru
          _
        // Predicated region
        $region61: #{tpu_custom_call.1} parent=11 // pred_check
          %p716 = pneg %p434
        $region62: #{tpu_custom_call.1} parent=11 // pred_check_branch
          %718 = sbr.rel (%p716) target = $region64
        $region63: #{tpu_custom_call.1} parent=11 // pred_region
          %720 = vsyncadd [#allocation22], 0
          %s721 = sshll.u32 %s16, 4
          %s722 = int_to_ptr.hbm [resolvable:$true] %s721
          %s723 = sshll.u32 [#allocation21], 4
          %s724 = int_to_ptr.vmem [resolvable:$true] %s723
          %729 = dma.hbm_to_vmem [thread:$0]  %s722, 256, %s724, [#allocation22], 64, 64, 4
        $region64: #{tpu_custom_call.1} parent=11 // pred_fallthru
          _
        // Predicated region
        $region65: #{tpu_custom_call.1} parent=11 // pred_check
          %p730 = pneg %p455
        $region66: #{tpu_custom_call.1} parent=11 // pred_check_branch
          %732 = sbr.rel (%p730) target = $region68
        $region67: #{tpu_custom_call.1} parent=11 // pred_region
          %734 = vsyncadd [#allocation22], 0
          %s736 = sshll.u32 %s17, 4
          %s737 = int_to_ptr.hbm [resolvable:$true] %s736
          %s738 = sshll.u32 [#allocation23], 4
          %s739 = int_to_ptr.vmem [resolvable:$true] %s738
          %741 = dma.hbm_to_vmem [thread:$0]  %s737, 16, %s739, [#allocation22]
        $region68: #{tpu_custom_call.1} parent=11 // pred_fallthru
          _
        // Predicated region
        $region69: #{tpu_custom_call.1} parent=11 // pred_check
          %p742 = pneg %p476
        $region70: #{tpu_custom_call.1} parent=11 // pred_check_branch
          %744 = sbr.rel (%p742) target = $region72
        $region71: #{tpu_custom_call.1} parent=11 // pred_region
          %746 = vsyncadd [#allocation25], 0
          %s748 = sshll.u32 %s18, 4
          %s749 = int_to_ptr.hbm [resolvable:$true] %s748
          %s750 = sshll.u32 [#allocation24], 4
          %s751 = int_to_ptr.vmem [resolvable:$true] %s750
          %753 = dma.hbm_to_vmem [thread:$0]  %s749, 16, %s751, [#allocation25]
        $region72: #{tpu_custom_call.1} parent=11 // pred_fallthru
          _
        // Predicated region
        $region73: #{tpu_custom_call.1} parent=11 // pred_check
          %p754 = pneg %p497
        $region74: #{tpu_custom_call.1} parent=11 // pred_check_branch
          %756 = sbr.rel (%p754) target = $region76
        $region75: #{tpu_custom_call.1} parent=11 // pred_region
          %758 = vsyncadd [#allocation25], 0
          %s760 = sshll.u32 %s19, 4
          %s761 = int_to_ptr.hbm [resolvable:$true] %s760
          %s762 = sshll.u32 [#allocation26], 4
          %s763 = int_to_ptr.vmem [resolvable:$true] %s762
          %765 = dma.hbm_to_vmem [thread:$0]  %s761, 16, %s763, [#allocation25]
        $region76: #{tpu_custom_call.1} parent=11 // pred_fallthru
          _
        // Predicated region
        $region77: #{tpu_custom_call.1} parent=11 // pred_check
          %p766 = pneg %p518
        $region78: #{tpu_custom_call.1} parent=11 // pred_check_branch
          %768 = sbr.rel (%p766) target = $region80
        $region79: #{tpu_custom_call.1} parent=11 // pred_region
          %770 = vsyncadd [#allocation28], 0
          %s771 = sshll.u32 %s20, 4
          %s772 = int_to_ptr.hbm [resolvable:$true] %s771
          %s773 = sshll.u32 [#allocation27], 4
          %s774 = int_to_ptr.vmem [resolvable:$true] %s773
          %779 = dma.hbm_to_vmem [thread:$0]  %s772, 256, %s774, [#allocation28], 64, 64, 4
        $region80: #{tpu_custom_call.1} parent=11 // pred_fallthru
          _
        // Predicated region
        $region81: #{tpu_custom_call.1} parent=11 // pred_check
          %p780 = pneg %p539
        $region82: #{tpu_custom_call.1} parent=11 // pred_check_branch
          %782 = sbr.rel (%p780) target = $region84
        $region83: #{tpu_custom_call.1} parent=11 // pred_region
          %784 = vsyncadd [#allocation28], 0
          %s786 = sshll.u32 %s21, 4
          %s787 = int_to_ptr.hbm [resolvable:$true] %s786
          %s788 = sshll.u32 [#allocation29], 4
          %s789 = int_to_ptr.vmem [resolvable:$true] %s788
          %791 = dma.hbm_to_vmem [thread:$0]  %s787, 16, %s789, [#allocation28]
        $region84: #{tpu_custom_call.1} parent=11 // pred_fallthru
          _
        // Predicated region
        $region85: #{tpu_custom_call.1} parent=11 // pred_check
          %p792 = pneg %p560
        $region86: #{tpu_custom_call.1} parent=11 // pred_check_branch
          %794 = sbr.rel (%p792) target = $region88
        $region87: #{tpu_custom_call.1} parent=11 // pred_region
          _
        $region88: #{tpu_custom_call.1} parent=11 // pred_fallthru
          _
        // Predicated region
        $region89: #{tpu_custom_call.1} parent=11 // pred_check
          %p795 = pneg %p581
        $region90: #{tpu_custom_call.1} parent=11 // pred_check_branch
          %797 = sbr.rel (%p795) target = $region92
        $region91: #{tpu_custom_call.1} parent=11 // pred_region
          _
        $region92: #{tpu_custom_call.1} parent=11 // pred_fallthru
          _
      $region12: #{tpu_custom_call.1} parent=5 // pred_fallthru
        _
      %p798 = scmp.lt.s32.totalorder %s45, 2
      // Predicated region
      $region93: #{tpu_custom_call.1} parent=5 // pred_check
        %p799 = pneg %p798
      $region94: #{tpu_custom_call.1} parent=5 // pred_check_branch
        %801 = sbr.rel (%p799) target = $region96
      $region95: #{tpu_custom_call.1} parent=5 // pred_region
        // Predicated region
        $region97: #{tpu_custom_call.1} parent=95 // pred_check
          %p802 = pneg %p77
        $region98: #{tpu_custom_call.1} parent=95 // pred_check_branch
          %804 = sbr.rel (%p802) target = $region100
        $region99: #{tpu_custom_call.1} parent=95 // pred_region
          %s805 = sand.u32 %s67, 1
          %s806 = scalar_lea.sflag [#allocation7], %s805
          %s807 = sand.u32 %s67, 1
          %s808 = smul.addr %s807, 4
          %s809 = scalar_lea.vmem [#allocation6], %s808
          %811 = vsyncadd %s806, 0
          %s812 = smul.addr %s52, 4
          %s813 = scalar_lea.hbm %s0, %s812
          %s815 = sshll.u32 %s813, 4
          %s816 = int_to_ptr.hbm [resolvable:$true] %s815
          %s817 = sshll.u32 %s809, 4
          %s818 = int_to_ptr.vmem [resolvable:$true] %s817
          %820 = dma.hbm_to_vmem [thread:$0]  %s816, 64, %s818, %s806
        $region100: #{tpu_custom_call.1} parent=95 // pred_fallthru
          _
        // Predicated region
        $region101: #{tpu_custom_call.1} parent=95 // pred_check
          %p821 = pneg %p103
        $region102: #{tpu_custom_call.1} parent=95 // pred_check_branch
          %823 = sbr.rel (%p821) target = $region104
        $region103: #{tpu_custom_call.1} parent=95 // pred_region
          %s824 = sand.u32 %s45, 1
          %s825 = scalar_lea.sflag [#allocation10], %s824
          %s826 = sand.u32 %s93, 1
          %s827 = smul.addr %s826, 4
          %s828 = scalar_lea.vmem [#allocation9], %s827
          %830 = vsyncadd %s825, 0
          %s831 = smul.addr %s52, 4
          %s832 = scalar_lea.hbm %s1, %s831
          %s834 = sshll.u32 %s832, 4
          %s835 = int_to_ptr.hbm [resolvable:$true] %s834
          %s836 = sshll.u32 %s828, 4
          %s837 = int_to_ptr.vmem [resolvable:$true] %s836
          %839 = dma.hbm_to_vmem [thread:$0]  %s835, 64, %s837, %s825
        $region104: #{tpu_custom_call.1} parent=95 // pred_fallthru
          _
        // Predicated region
        $region105: #{tpu_custom_call.1} parent=95 // pred_check
          %p840 = pneg %p129
        $region106: #{tpu_custom_call.1} parent=95 // pred_check_branch
          %842 = sbr.rel (%p840) target = $region108
        $region107: #{tpu_custom_call.1} parent=95 // pred_region
          %s843 = sand.u32 %s45, 1
          %s844 = scalar_lea.sflag [#allocation10], %s843
          %s845 = sand.u32 %s119, 1
          %s846 = scalar_lea.vmem [#allocation11], %s845
          %848 = vsyncadd %s844, 0
          %s849 = scalar_lea.hbm %s2, %s52
          %s851 = sshll.u32 %s849, 4
          %s852 = int_to_ptr.hbm [resolvable:$true] %s851
          %s853 = sshll.u32 %s846, 4
          %s854 = int_to_ptr.vmem [resolvable:$true] %s853
          %856 = dma.hbm_to_vmem [thread:$0]  %s852, 16, %s854, %s844
        $region108: #{tpu_custom_call.1} parent=95 // pred_fallthru
          _
        // Predicated region
        $region109: #{tpu_custom_call.1} parent=95 // pred_check
          %p857 = pneg %p155
        $region110: #{tpu_custom_call.1} parent=95 // pred_check_branch
          %859 = sbr.rel (%p857) target = $region112
        $region111: #{tpu_custom_call.1} parent=95 // pred_region
          %p860 = scmp.lt.s32.totalorder %s52, 1
          %s861 = scalar_select %p860, %s52, 1
          %s862 = scalar_lea.vmem %s3, %s861
        $region112: #{tpu_custom_call.1} parent=95 // pred_fallthru
          _
      $region96: #{tpu_custom_call.1} parent=5 // pred_fallthru
        _
      %p863 = scmp.le.s32.totalorder 1, %s45
      %p864 = scmp.lt.s32.totalorder %s45, 3
      %p865 = pnand %p863, %p864
      %p866 = pneg %p865
      // Predicated region
      $region113: #{tpu_custom_call.1} parent=5 // pred_check
        _
      $region114: #{tpu_custom_call.1} parent=5 // pred_check_branch
        %868 = sbr.rel (%p865) target = $region116
      $region115: #{tpu_custom_call.1} parent=5 // pred_region
        %s869 = ssub.s32 %s45, 1
        %s870 = sand.u32 %s70, 1
        %s871 = scalar_lea.sflag [#allocation7], %s870
        %s872 = sand.u32 %s70, 1
        %s873 = smul.addr %s872, 4
        %s874 = scalar_lea.vmem [#allocation6], %s873
        // Predicated region
        $region117: #{tpu_custom_call.1} parent=115 // pred_check
          %p875 = pneg %p83
        $region118: #{tpu_custom_call.1} parent=115 // pred_check_branch
          %877 = sbr.rel (%p875) target = $region120
        $region119: #{tpu_custom_call.1} parent=115 // pred_region
          %879 = dma.done %s871, 64
        $region120: #{tpu_custom_call.1} parent=115 // pred_fallthru
          _
        %s880 = sand.u32 %s50, 1
        %s881 = scalar_lea.sflag [#allocation10], %s880
        %s882 = sand.u32 %s96, 1
        %s883 = smul.addr %s882, 4
        %s884 = scalar_lea.vmem [#allocation9], %s883
        // Predicated region
        $region121: #{tpu_custom_call.1} parent=115 // pred_check
          %p885 = pneg %p109
        $region122: #{tpu_custom_call.1} parent=115 // pred_check_branch
          %887 = sbr.rel (%p885) target = $region124
        $region123: #{tpu_custom_call.1} parent=115 // pred_region
          %889 = dma.done %s881, 64
        $region124: #{tpu_custom_call.1} parent=115 // pred_fallthru
          _
        %s890 = sand.u32 %s50, 1
        %s891 = scalar_lea.sflag [#allocation10], %s890
        %s892 = sand.u32 %s122, 1
        %s893 = scalar_lea.vmem [#allocation11], %s892
        // Predicated region
        $region125: #{tpu_custom_call.1} parent=115 // pred_check
          %p894 = pneg %p135
        $region126: #{tpu_custom_call.1} parent=115 // pred_check_branch
          %896 = sbr.rel (%p894) target = $region128
        $region127: #{tpu_custom_call.1} parent=115 // pred_region
          %898 = dma.done %s891, 16
        $region128: #{tpu_custom_call.1} parent=115 // pred_fallthru
          _
        // Predicated region
        $region129: #{tpu_custom_call.1} parent=115 // pred_check
          %p899 = pneg %p287
        $region130: #{tpu_custom_call.1} parent=115 // pred_check_branch
          %901 = sbr.rel (%p899) target = $region132
        $region131: #{tpu_custom_call.1} parent=115 // pred_region
          %903 = dma.done [#allocation13], 16
        $region132: #{tpu_custom_call.1} parent=115 // pred_fallthru
          _
        // Predicated region
        $region133: #{tpu_custom_call.1} parent=115 // pred_check
          %p904 = pneg %p308
        $region134: #{tpu_custom_call.1} parent=115 // pred_check_branch
          %906 = sbr.rel (%p904) target = $region136
        $region135: #{tpu_custom_call.1} parent=115 // pred_region
          %908 = dma.done [#allocation13], 16
        $region136: #{tpu_custom_call.1} parent=115 // pred_fallthru
          _
        // Predicated region
        $region137: #{tpu_custom_call.1} parent=115 // pred_check
          %p909 = pneg %p329
        $region138: #{tpu_custom_call.1} parent=115 // pred_check_branch
          %911 = sbr.rel (%p909) target = $region140
        $region139: #{tpu_custom_call.1} parent=115 // pred_region
          %913 = dma.done [#allocation16], 16
        $region140: #{tpu_custom_call.1} parent=115 // pred_fallthru
          _
        // Predicated region
        $region141: #{tpu_custom_call.1} parent=115 // pred_check
          %p914 = pneg %p371
        $region142: #{tpu_custom_call.1} parent=115 // pred_check_branch
          %916 = sbr.rel (%p914) target = $region144
        $region143: #{tpu_custom_call.1} parent=115 // pred_region
          %918 = dma.done [#allocation16], 16
        $region144: #{tpu_custom_call.1} parent=115 // pred_fallthru
          _
        // Predicated region
        $region145: #{tpu_custom_call.1} parent=115 // pred_check
          %p919 = pneg %p392
        $region146: #{tpu_custom_call.1} parent=115 // pred_check_branch
          %921 = sbr.rel (%p919) target = $region148
        $region147: #{tpu_custom_call.1} parent=115 // pred_region
          %923 = dma.done [#allocation19], 256
        $region148: #{tpu_custom_call.1} parent=115 // pred_fallthru
          _
        // Predicated region
        $region149: #{tpu_custom_call.1} parent=115 // pred_check
          %p924 = pneg %p413
        $region150: #{tpu_custom_call.1} parent=115 // pred_check_branch
          %926 = sbr.rel (%p924) target = $region152
        $region151: #{tpu_custom_call.1} parent=115 // pred_region
          %928 = dma.done [#allocation19], 16
        $region152: #{tpu_custom_call.1} parent=115 // pred_fallthru
          _
        // Predicated region
        $region153: #{tpu_custom_call.1} parent=115 // pred_check
          %p929 = pneg %p434
        $region154: #{tpu_custom_call.1} parent=115 // pred_check_branch
          %931 = sbr.rel (%p929) target = $region156
        $region155: #{tpu_custom_call.1} parent=115 // pred_region
          %933 = dma.done [#allocation22], 256
        $region156: #{tpu_custom_call.1} parent=115 // pred_fallthru
          _
        // Predicated region
        $region157: #{tpu_custom_call.1} parent=115 // pred_check
          %p934 = pneg %p455
        $region158: #{tpu_custom_call.1} parent=115 // pred_check_branch
          %936 = sbr.rel (%p934) target = $region160
        $region159: #{tpu_custom_call.1} parent=115 // pred_region
          %938 = dma.done [#allocation22], 16
        $region160: #{tpu_custom_call.1} parent=115 // pred_fallthru
          _
        // Predicated region
        $region161: #{tpu_custom_call.1} parent=115 // pred_check
          %p939 = pneg %p476
        $region162: #{tpu_custom_call.1} parent=115 // pred_check_branch
          %941 = sbr.rel (%p939) target = $region164
        $region163: #{tpu_custom_call.1} parent=115 // pred_region
          %943 = dma.done [#allocation25], 16
        $region164: #{tpu_custom_call.1} parent=115 // pred_fallthru
          _
        // Predicated region
        $region165: #{tpu_custom_call.1} parent=115 // pred_check
          %p944 = pneg %p497
        $region166: #{tpu_custom_call.1} parent=115 // pred_check_branch
          %946 = sbr.rel (%p944) target = $region168
        $region167: #{tpu_custom_call.1} parent=115 // pred_region
          %948 = dma.done [#allocation25], 16
        $region168: #{tpu_custom_call.1} parent=115 // pred_fallthru
          _
        // Predicated region
        $region169: #{tpu_custom_call.1} parent=115 // pred_check
          %p949 = pneg %p518
        $region170: #{tpu_custom_call.1} parent=115 // pred_check_branch
          %951 = sbr.rel (%p949) target = $region172
        $region171: #{tpu_custom_call.1} parent=115 // pred_region
          %953 = dma.done [#allocation28], 256
        $region172: #{tpu_custom_call.1} parent=115 // pred_fallthru
          _
        // Predicated region
        $region173: #{tpu_custom_call.1} parent=115 // pred_check
          %p954 = pneg %p539
        $region174: #{tpu_custom_call.1} parent=115 // pred_check_branch
          %956 = sbr.rel (%p954) target = $region176
        $region175: #{tpu_custom_call.1} parent=115 // pred_region
          %958 = dma.done [#allocation28], 16
        $region176: #{tpu_custom_call.1} parent=115 // pred_fallthru
          _
        %s959 = sand.u32 %s70, 1
        %s960 = scalar_lea.sflag [#allocation7], %s959
        %s961 = sand.u32 %s70, 1
        %s962 = smul.addr %s961, 4
        %s963 = scalar_lea.vmem [#allocation6], %s962
        %p964 = pneg %p83
        %p965 = pneg %p80
        %s966 = sand.u32 %s50, 1
        %s967 = scalar_lea.sflag [#allocation10], %s966
        %s968 = sand.u32 %s96, 1
        %s969 = smul.addr %s968, 4
        %s970 = scalar_lea.vmem [#allocation9], %s969
        %p971 = pneg %p109
        %p972 = pneg %p106
        %s973 = sand.u32 %s50, 1
        %s974 = scalar_lea.sflag [#allocation10], %s973
        %s975 = sand.u32 %s122, 1
        %s976 = scalar_lea.vmem [#allocation11], %s975
        %p977 = pneg %p135
        %p978 = pneg %p132
        %p979 = scmp.lt.s32.totalorder %s54, 1
        %s980 = scalar_select %p979, %s54, 1
        %s981 = scalar_lea.vmem %s3, %s980
        %p982 = pneg %p161
        %p983 = pneg %p158
        %p984 = pneg %p182
        %p985 = pneg %p179
        %p986 = pneg %p203
        %p987 = pneg %p200
        %p988 = pneg %p224
        %p989 = pneg %p221
        %p990 = pneg %p245
        %p991 = pneg %p242
        %p992 = pneg %p266
        %p993 = pneg %p263
        %p994 = pneg %p287
        %p995 = pneg %p284
        %p996 = pneg %p308
        %p997 = pneg %p305
        %p998 = pneg %p329
        %p999 = pneg %p326
        %p1000 = pneg %p350
        %p1001 = pneg %p347
        %p1002 = pneg %p371
        %p1003 = pneg %p368
        %p1004 = pneg %p392
        %p1005 = pneg %p389
        %p1006 = pneg %p413
        %p1007 = pneg %p410
        %p1008 = pneg %p434
        %p1009 = pneg %p431
        %p1010 = pneg %p455
        %p1011 = pneg %p452
        %p1012 = pneg %p476
        %p1013 = pneg %p473
        %p1014 = pneg %p497
        %p1015 = pneg %p494
        %p1016 = pneg %p518
        %p1017 = pneg %p515
        %p1018 = pneg %p539
        %p1019 = pneg %p536
        %p1020 = pneg %p560
        %p1021 = pneg %p557
        %p1022 = pneg %p581
        %p1023 = pneg %p578
        %p1024 = pneg %p609
        %p1025 = pneg %p606
        %s1026 = sand.u32 %s596, 1
        %s1027 = scalar_lea.sflag [#allocation8], %s1026
        %s1028 = sand.u32 %s596, 1
        %s1029 = smul.addr %s1028, 8
        %s1030 = scalar_lea.vmem [#allocation30], %s1029
        %p1031 = scmp.lt.s32.totalorder %s54, 1
        %s1032 = scalar_select %p1031, %s54, 1
        %s1033 = scalar_lea.vmem %s3, %s1032
        %s1035 = smul.u32 %s55, 8
        %v1036 = vld [vmem:[%s4] sm:$0x1]
        %v1037 = vld [vmem:[%s5] sm:$0x1]
        %p1038 = scmp.eq.s32.totalorder %s55, 0
        // Predicated region
        $region177: #{tpu_custom_call.1} parent=115 // pred_check
          %p1039 = pneg %p1038
        $region178: #{tpu_custom_call.1} parent=115 // pred_check_branch
          %1041 = sbr.rel (%p1039) target = $region180
        $region179: #{tpu_custom_call.1} parent=115 // pred_region
          %v1042 = vld [vmem:[%s874] sm:$0xf]
          %v1043 = vunpack.c.l.bf16 %v1042
          %vm1044 = vcmask 261120
          %v1045 = vsel %vm1044, %v1043, 0.0
          %1046 = vadd.xlane.f32.xlu0 %v1045
          %v1047 = vpop.xlane.xlu0 %1046
          %v1048 = vrcp.pop 32.0
          %v1049 = vmul.f32 32.0, %v1048
          %v1050 = vsub.f32 1.0, %v1049
          %v1051 = vmul.f32 %v1048, %v1050
          %v1052 = vadd.f32 %v1048, %v1051
          %vm1053 = vweird.f32 %v1048
          %v1054 = vsel %vm1053, %v1048, %v1052
          %v1055 = vmul.f32 %v1047, %v1054
          %v1056 = vsub.f32 %v1043, %v1055
          %v1057 = vmul.f32 %v1056, %v1056
          %v1058 = vsel %vm1044, %v1057, 0.0
          %1059 = vadd.xlane.f32.xlu0 %v1058
          %v1060 = vpop.xlane.xlu0 %1059
          %v1061 = vmul.f32 %v1060, %v1054
          %v1062 = vadd.f32 %v1061, 1e-05
          %v1063 = vrsqrt.pop %v1062
          %v1064 = vmul.f32 %v1063, %v1062
          %v1065 = vmul.f32 %v1064, %v1063
          %v1066 = vmul.f32 0.5, %v1065
          %v1067 = vsub.f32 1.5, %v1066
          %v1068 = vmul.f32 %v1063, %v1067
          %vm1069 = vweird.f32 %v1062
          %vm1070 = vweird.f32 %v1063
          %vm1071 = vmor %vm1069, %vm1070
          %v1072 = vsel %vm1071, %v1063, %v1068
          %v1073 = vmul.f32 %v1056, %v1072
          %v1075 = vperm.slane %v1036, 0
          %v1077 = vmul.f32 %v1073, %v1075
          %v1079 = vperm.slane %v1037, 0
          %v1081 = vadd.f32 %v1077, %v1079
          %v1082 = vpack.c.bf16 %v1081, %v1081
          %v1083 = vld [vmem:[%s6] sm:$0xf]
          %v1084 = vld [vmem:[%s6 + $0x4] sm:$0xf]
          %v1085 = vld [vmem:[%s6 + $0x8] sm:$0xf]
          %v1086 = vld [vmem:[%s6 + $0xc] sm:$0xf]
          %v1087 = vld [vmem:[%s7] sm:$0x1]
          %v1089 = vperm.slane %v1087, 0
          %v1094 = vunpack.c.l.b16 %v1083
          %v1095 = vunpack.c.l.b16 %v1084
          %v1096 = vunpack.c.l.b16 %v1085
          %v1097 = vunpack.c.l.b16 %v1086
          %v1098 = vpack.c.b16 %v1095, %v1094
          %v1099 = vpack.c.b16 %v1097, %v1096
          %1100 = vrot.lane.b32.xlu0 %v1098, 96
          %v1101 = vpop.permute.xlu0 %1100
          %1102 = vrot.lane.b32.xlu0 %v1099, 96
          %v1103 = vpop.permute.xlu0 %1102
          %1106 = vrot.lane.b32.xlu0 %v1089, 96
          %v1107 = vpop.permute.xlu0 %1106
          %v1110 = vsel %vm1044, %v1082, 0
          %1112 = vmatpush.bf16.msra.mxu0 0
          %1113 = vmatpush.bf16.msra.mxu0 0
          %1114 = vmatpush.bf16.msra.mxu0 0
          %1115 = vmatpush.bf16.msra.mxu0 0
          %1116 = vmatpush.bf16.msra.mxu0 0
          %1117 = vmatpush.bf16.msra.mxu0 0
          %1118 = vmatpush.bf16.msra.mxu0 %v1103
          %1119 = vmatpush.bf16.msra.mxu0 %v1101
          %1120 = vmatmul.bf16.gmra.mxu0 %v1110
          %v1121 = vpop.f32.mrf.mxu0
          %v1122 = vadd.f32 %v1107, %v1121
          %v1123 = vpop.f32.mrf.mxu0
          %1124 = vdwg.mxu0
          %1125 = vxpose.xlu0.b32.start [1/16] %v1122, 128
          %1126 = vxpose.xlu0.b32.cont [2/16] 0.0, 128
          %1127 = vxpose.xlu0.b32.cont [3/16] 0.0, 128
          %1128 = vxpose.xlu0.b32.cont [4/16] 0.0, 128
          %1129 = vxpose.xlu0.b32.cont [5/16] 0.0, 128
          %1130 = vxpose.xlu0.b32.cont [6/16] 0.0, 128
          %1131 = vxpose.xlu0.b32.cont [7/16] 0.0, 128
          %1132 = vxpose.xlu0.b32.cont [8/16] 0.0, 128
          %1133 = vxpose.xlu0.b32.cont [9/16] 0.0, 128
          %1134 = vxpose.xlu0.b32.cont [10/16] 0.0, 128
          %1135 = vxpose.xlu0.b32.cont [11/16] 0.0, 128
          %1136 = vxpose.xlu0.b32.cont [12/16] 0.0, 128
          %1137 = vxpose.xlu0.b32.cont [13/16] 0.0, 128
          %1138 = vxpose.xlu0.b32.cont [14/16] 0.0, 128
          %1139 = vxpose.xlu0.b32.cont [15/16] 0.0, 128
          %1140 = vxpose.xlu0.b32.end [16/16] 0.0, 128
          %v1141 = vpop.trf.xlu0
          %v1142 = vpop.trf.xlu0
          %v1143 = vpop.trf.xlu0
          %v1144 = vpop.trf.xlu0
          %v1145 = vpop.trf.xlu0
          %v1146 = vpop.trf.xlu0
          %v1147 = vpop.trf.xlu0
          %v1148 = vpop.trf.xlu0
          %v1149 = vpop.trf.xlu0
          %v1150 = vpop.trf.xlu0
          %v1151 = vpop.trf.xlu0
          %v1152 = vpop.trf.xlu0
          %v1153 = vpop.trf.xlu0
          %v1154 = vpop.trf.xlu0
          %v1155 = vpop.trf.xlu0
          %v1156 = vpop.trf.xlu0
          %v1157 = vpack.c.bf16 %v1141, %v1141
          %v1158 = vpack.c.bf16 %v1142, %v1142
          %v1159 = vpack.c.bf16 %v1143, %v1143
          %v1160 = vpack.c.bf16 %v1144, %v1144
          %vm1161 = vcmask 60416
          %1162 = vst.msk [vmem:[#allocation2] sm:$0xf] %vm1161, %v1157
          %1163 = vst.msk [vmem:[#allocation2 + $0x4] sm:$0xf] %vm1161, %v1158
          %1164 = vst.msk [vmem:[#allocation2 + $0x8] sm:$0xf] %vm1161, %v1159
          %1165 = vst.msk [vmem:[#allocation2 + $0xc] sm:$0xf] %vm1161, %v1160
          %1167 = vrot.lane.b32.xlu0 %v1122, 120
          %v1168 = vpop.permute.xlu0 %1167
          %1169 = vrot.lane.b32.xlu0 %v1122, 112
          %v1170 = vpop.permute.xlu0 %1169
          %1171 = vrot.lane.b32.xlu0 %v1122, 104
          %v1172 = vpop.permute.xlu0 %1171
          %1173 = vrot.lane.b32.xlu0 %v1122, 96
          %v1174 = vpop.permute.xlu0 %1173
          %1175 = vrot.lane.b32.xlu0 %v1168, 96
          %v1176 = vpop.permute.xlu0 %1175
          %1177 = vrot.lane.b32.xlu0 %v1170, 96
          %v1178 = vpop.permute.xlu0 %1177
          %1179 = vrot.lane.b32.xlu0 %v1172, 96
          %v1180 = vpop.permute.xlu0 %1179
          %v1185 = vrot.slane %v1178, 4
          %vm1186 = vcmask 1047556
          %v1187 = vsel %vm1186, %v1185, %v1174
          %v1188 = vrot.slane %v1174, 4
          %v1189 = vsel %vm1186, %v1178, %v1188
          %v1191 = vunpack.c.l.s4 1983009808
          %v1192 = vunpack.c.0.s8 %v1191
          %v1193 = vperm.slane %v1187, %v1192
          %v1195 = vunpack.c.l.s4 1983009808
          %v1196 = vunpack.c.0.s8 %v1195
          %v1197 = vperm.slane %v1189, %v1196
          %v1198 = vrot.slane %v1180, 4
          %v1199 = vsel %vm1186, %v1198, %v1176
          %v1200 = vrot.slane %v1176, 4
          %v1201 = vsel %vm1186, %v1180, %v1200
          %v1203 = vunpack.c.l.s4 1983009808
          %v1204 = vunpack.c.0.s8 %v1203
          %v1205 = vperm.slane %v1199, %v1204
          %v1207 = vunpack.c.l.s4 1983009808
          %v1208 = vunpack.c.0.s8 %v1207
          %v1209 = vperm.slane %v1201, %v1208
          %v1210 = vrot.slane %v1205, 4
          %v1211 = vsel %vm1186, %v1210, %v1193
          %v1212 = vrot.slane %v1193, 4
          %v1213 = vsel %vm1186, %v1205, %v1212
          %v1215 = vunpack.c.l.s4 1934713408
          %v1216 = vunpack.c.0.s8 %v1215
          %v1217 = vperm.slane %v1211, %v1216
          %v1219 = vunpack.c.l.s4 1934713408
          %v1220 = vunpack.c.0.s8 %v1219
          %v1221 = vperm.slane %v1213, %v1220
          %v1222 = vrot.slane %v1209, 4
          %v1223 = vsel %vm1186, %v1222, %v1197
          %v1224 = vrot.slane %v1197, 4
          %v1225 = vsel %vm1186, %v1209, %v1224
          %v1227 = vunpack.c.l.s4 1934713408
          %v1228 = vunpack.c.0.s8 %v1227
          %v1229 = vperm.slane %v1223, %v1228
          %v1231 = vunpack.c.l.s4 1934713408
          %v1232 = vunpack.c.0.s8 %v1231
          %v1233 = vperm.slane %v1225, %v1232
          %v1234 = vrot.slane %v1217, 4
          %v1235 = vsel %vm1186, 0.0, %v1234
          %v1236 = vrot.slane %v1221, 4
          %v1237 = vsel %vm1186, 0.0, %v1236
          %v1238 = vrot.slane %v1229, 4
          %v1239 = vsel %vm1186, 0.0, %v1238
          %v1240 = vrot.slane %v1233, 4
          %v1241 = vsel %vm1186, 0.0, %v1240
          %v1242 = vsel %vm1186, %v1236, %v1217
          %v1244 = vunpack.c.l.s4 1983009808
          %v1245 = vunpack.c.0.s8 %v1244
          %v1246 = vperm.slane %v1242, %v1245
          %v1247 = vrot.slane %v1237, 4
          %v1248 = vsel %vm1186, %v1247, %v1235
          %v1250 = vunpack.c.l.s4 1983009808
          %v1251 = vunpack.c.0.s8 %v1250
          %v1252 = vperm.slane %v1248, %v1251
          %v1253 = vsel %vm1186, %v1240, %v1229
          %v1255 = vunpack.c.l.s4 1983009808
          %v1256 = vunpack.c.0.s8 %v1255
          %v1257 = vperm.slane %v1253, %v1256
          %v1258 = vrot.slane %v1241, 4
          %v1259 = vsel %vm1186, %v1258, %v1239
          %v1261 = vunpack.c.l.s4 1983009808
          %v1262 = vunpack.c.0.s8 %v1261
          %v1263 = vperm.slane %v1259, %v1262
          %v1264 = vrot.slane %v1252, 4
          %v1265 = vsel %vm1186, %v1264, %v1246
          %v1266 = vrot.slane %v1246, 4
          %v1267 = vsel %vm1186, %v1252, %v1266
          %v1269 = vunpack.c.l.s4 1934713408
          %v1270 = vunpack.c.0.s8 %v1269
          %v1271 = vperm.slane %v1265, %v1270
          %v1273 = vunpack.c.l.s4 1934713408
          %v1274 = vunpack.c.0.s8 %v1273
          %v1275 = vperm.slane %v1267, %v1274
          %v1276 = vrot.slane %v1263, 4
          %v1277 = vsel %vm1186, %v1276, %v1257
          %v1278 = vrot.slane %v1257, 4
          %v1279 = vsel %vm1186, %v1263, %v1278
          %v1281 = vunpack.c.l.s4 1934713408
          %v1282 = vunpack.c.0.s8 %v1281
          %v1283 = vperm.slane %v1277, %v1282
          %v1285 = vunpack.c.l.s4 1934713408
          %v1286 = vunpack.c.0.s8 %v1285
          %v1287 = vperm.slane %v1279, %v1286
          %v1288 = vrot.slane %v1283, 4
          %v1289 = vsel %vm1186, %v1288, %v1271
          %v1290 = vrot.slane %v1271, 4
          %v1291 = vsel %vm1186, %v1283, %v1290
          %v1292 = vrot.slane %v1287, 4
          %v1293 = vsel %vm1186, %v1292, %v1275
          %v1294 = vrot.slane %v1275, 4
          %v1295 = vsel %vm1186, %v1287, %v1294
          %v1296 = vpack.c.bf16 %v1289, %v1289
          %v1297 = vpack.c.bf16 %v1291, %v1291
          %v1298 = vpack.c.bf16 %v1293, %v1293
          %v1299 = vpack.c.bf16 %v1295, %v1295
          %1300 = vst.msk [vmem:[#allocation3] sm:$0xf] %vm1161, %v1296
          %1301 = vst.msk [vmem:[#allocation3 + $0x4] sm:$0xf] %vm1161, %v1297
          %1302 = vst.msk [vmem:[#allocation3 + $0x8] sm:$0xf] %vm1161, %v1298
          %1303 = vst.msk [vmem:[#allocation3 + $0xc] sm:$0xf] %vm1161, %v1299
          %v1304 = vld [vmem:[%s884] sm:$0xf]
          %v1305 = vld [vmem:[#allocation18] sm:$0xf]
          %v1306 = vld [vmem:[#allocation18 + $0x4] sm:$0xf]
          %v1307 = vld [vmem:[#allocation18 + $0x8] sm:$0xf]
          %v1308 = vld [vmem:[#allocation18 + $0xc] sm:$0xf]
          %v1309 = vld [vmem:[#allocation20] sm:$0x1]
          %v1311 = vperm.slane %v1309, 0
          %v1317 = vunpack.c.l.b16 %v1305
          %v1318 = vunpack.c.l.b16 %v1306
          %v1319 = vunpack.c.l.b16 %v1307
          %v1320 = vunpack.c.l.b16 %v1308
          %v1321 = vpack.c.b16 %v1318, %v1317
          %v1322 = vpack.c.b16 %v1320, %v1319
          %v1326 = vsel %vm1044, %v1304, 0
          %1328 = vmatpush.bf16.msra.mxu0 0
          %1329 = vmatpush.bf16.msra.mxu0 0
          %1330 = vmatpush.bf16.msra.mxu0 0
          %1331 = vmatpush.bf16.msra.mxu0 0
          %1332 = vmatpush.bf16.msra.mxu0 0
          %1333 = vmatpush.bf16.msra.mxu0 0
          %1334 = vmatpush.bf16.msra.mxu0 %v1322
          %1335 = vmatpush.bf16.msra.mxu0 %v1321
          %1336 = vmatmul.bf16.gmra.mxu0 %v1326
          %v1337 = vpop.f32.mrf.mxu0
          %v1338 = vadd.f32 %v1311, %v1337
          %v1339 = vpop.f32.mrf.mxu0
          %1340 = vdwg.mxu0
          %1341 = vxpose.xlu0.b32.start [1/16] %v1338, 128
          %1342 = vxpose.xlu0.b32.cont [2/16] 0.0, 128
          %1343 = vxpose.xlu0.b32.cont [3/16] 0.0, 128
          %1344 = vxpose.xlu0.b32.cont [4/16] 0.0, 128
          %1345 = vxpose.xlu0.b32.cont [5/16] 0.0, 128
          %1346 = vxpose.xlu0.b32.cont [6/16] 0.0, 128
          %1347 = vxpose.xlu0.b32.cont [7/16] 0.0, 128
          %1348 = vxpose.xlu0.b32.cont [8/16] 0.0, 128
          %1349 = vxpose.xlu0.b32.cont [9/16] 0.0, 128
          %1350 = vxpose.xlu0.b32.cont [10/16] 0.0, 128
          %1351 = vxpose.xlu0.b32.cont [11/16] 0.0, 128
          %1352 = vxpose.xlu0.b32.cont [12/16] 0.0, 128
          %1353 = vxpose.xlu0.b32.cont [13/16] 0.0, 128
          %1354 = vxpose.xlu0.b32.cont [14/16] 0.0, 128
          %1355 = vxpose.xlu0.b32.cont [15/16] 0.0, 128
          %1356 = vxpose.xlu0.b32.end [16/16] 0.0, 128
          %v1357 = vpop.trf.xlu0
          %v1358 = vpop.trf.xlu0
          %v1359 = vpop.trf.xlu0
          %v1360 = vpop.trf.xlu0
          %v1361 = vpop.trf.xlu0
          %v1362 = vpop.trf.xlu0
          %v1363 = vpop.trf.xlu0
          %v1364 = vpop.trf.xlu0
          %v1365 = vpop.trf.xlu0
          %v1366 = vpop.trf.xlu0
          %v1367 = vpop.trf.xlu0
          %v1368 = vpop.trf.xlu0
          %v1369 = vpop.trf.xlu0
          %v1370 = vpop.trf.xlu0
          %v1371 = vpop.trf.xlu0
          %v1372 = vpop.trf.xlu0
          %v1373 = vpack.c.bf16 %v1357, %v1357
          %v1374 = vpack.c.bf16 %v1358, %v1358
          %v1375 = vpack.c.bf16 %v1359, %v1359
          %v1376 = vpack.c.bf16 %v1360, %v1360
          %1377 = vst.msk [vmem:[#allocation4] sm:$0xf] %vm1161, %v1373
          %1378 = vst.msk [vmem:[#allocation4 + $0x4] sm:$0xf] %vm1161, %v1374
          %1379 = vst.msk [vmem:[#allocation4 + $0x8] sm:$0xf] %vm1161, %v1375
          %1380 = vst.msk [vmem:[#allocation4 + $0xc] sm:$0xf] %vm1161, %v1376
          %1382 = vrot.lane.b32.xlu0 %v1338, 120
          %v1383 = vpop.permute.xlu0 %1382
          %1384 = vrot.lane.b32.xlu0 %v1338, 112
          %v1385 = vpop.permute.xlu0 %1384
          %1386 = vrot.lane.b32.xlu0 %v1338, 104
          %v1387 = vpop.permute.xlu0 %1386
          %1388 = vrot.lane.b32.xlu0 %v1338, 96
          %v1389 = vpop.permute.xlu0 %1388
          %1390 = vrot.lane.b32.xlu0 %v1383, 96
          %v1391 = vpop.permute.xlu0 %1390
          %1392 = vrot.lane.b32.xlu0 %v1385, 96
          %v1393 = vpop.permute.xlu0 %1392
          %1394 = vrot.lane.b32.xlu0 %v1387, 96
          %v1395 = vpop.permute.xlu0 %1394
          %v1400 = vrot.slane %v1393, 4
          %v1401 = vsel %vm1186, %v1400, %v1389
          %v1402 = vrot.slane %v1389, 4
          %v1403 = vsel %vm1186, %v1393, %v1402
          %v1405 = vunpack.c.l.s4 1983009808
          %v1406 = vunpack.c.0.s8 %v1405
          %v1407 = vperm.slane %v1401, %v1406
          %v1409 = vunpack.c.l.s4 1983009808
          %v1410 = vunpack.c.0.s8 %v1409
          %v1411 = vperm.slane %v1403, %v1410
          %v1412 = vrot.slane %v1395, 4
          %v1413 = vsel %vm1186, %v1412, %v1391
          %v1414 = vrot.slane %v1391, 4
          %v1415 = vsel %vm1186, %v1395, %v1414
          %v1417 = vunpack.c.l.s4 1983009808
          %v1418 = vunpack.c.0.s8 %v1417
          %v1419 = vperm.slane %v1413, %v1418
          %v1421 = vunpack.c.l.s4 1983009808
          %v1422 = vunpack.c.0.s8 %v1421
          %v1423 = vperm.slane %v1415, %v1422
          %v1424 = vrot.slane %v1419, 4
          %v1425 = vsel %vm1186, %v1424, %v1407
          %v1426 = vrot.slane %v1407, 4
          %v1427 = vsel %vm1186, %v1419, %v1426
          %v1429 = vunpack.c.l.s4 1934713408
          %v1430 = vunpack.c.0.s8 %v1429
          %v1431 = vperm.slane %v1425, %v1430
          %v1433 = vunpack.c.l.s4 1934713408
          %v1434 = vunpack.c.0.s8 %v1433
          %v1435 = vperm.slane %v1427, %v1434
          %v1436 = vrot.slane %v1423, 4
          %v1437 = vsel %vm1186, %v1436, %v1411
          %v1438 = vrot.slane %v1411, 4
          %v1439 = vsel %vm1186, %v1423, %v1438
          %v1441 = vunpack.c.l.s4 1934713408
          %v1442 = vunpack.c.0.s8 %v1441
          %v1443 = vperm.slane %v1437, %v1442
          %v1445 = vunpack.c.l.s4 1934713408
          %v1446 = vunpack.c.0.s8 %v1445
          %v1447 = vperm.slane %v1439, %v1446
          %v1448 = vrot.slane %v1431, 4
          %v1449 = vsel %vm1186, 0.0, %v1448
          %v1450 = vrot.slane %v1435, 4
          %v1451 = vsel %vm1186, 0.0, %v1450
          %v1452 = vrot.slane %v1443, 4
          %v1453 = vsel %vm1186, 0.0, %v1452
          %v1454 = vrot.slane %v1447, 4
          %v1455 = vsel %vm1186, 0.0, %v1454
          %v1456 = vsel %vm1186, %v1450, %v1431
          %v1458 = vunpack.c.l.s4 1983009808
          %v1459 = vunpack.c.0.s8 %v1458
          %v1460 = vperm.slane %v1456, %v1459
          %v1461 = vrot.slane %v1451, 4
          %v1462 = vsel %vm1186, %v1461, %v1449
          %v1464 = vunpack.c.l.s4 1983009808
          %v1465 = vunpack.c.0.s8 %v1464
          %v1466 = vperm.slane %v1462, %v1465
          %v1467 = vsel %vm1186, %v1454, %v1443
          %v1469 = vunpack.c.l.s4 1983009808
          %v1470 = vunpack.c.0.s8 %v1469
          %v1471 = vperm.slane %v1467, %v1470
          %v1472 = vrot.slane %v1455, 4
          %v1473 = vsel %vm1186, %v1472, %v1453
          %v1475 = vunpack.c.l.s4 1983009808
          %v1476 = vunpack.c.0.s8 %v1475
          %v1477 = vperm.slane %v1473, %v1476
          %v1478 = vrot.slane %v1466, 4
          %v1479 = vsel %vm1186, %v1478, %v1460
          %v1480 = vrot.slane %v1460, 4
          %v1481 = vsel %vm1186, %v1466, %v1480
          %v1483 = vunpack.c.l.s4 1934713408
          %v1484 = vunpack.c.0.s8 %v1483
          %v1485 = vperm.slane %v1479, %v1484
          %v1487 = vunpack.c.l.s4 1934713408
          %v1488 = vunpack.c.0.s8 %v1487
          %v1489 = vperm.slane %v1481, %v1488
          %v1490 = vrot.slane %v1477, 4
          %v1491 = vsel %vm1186, %v1490, %v1471
          %v1492 = vrot.slane %v1471, 4
          %v1493 = vsel %vm1186, %v1477, %v1492
          %v1495 = vunpack.c.l.s4 1934713408
          %v1496 = vunpack.c.0.s8 %v1495
          %v1497 = vperm.slane %v1491, %v1496
          %v1499 = vunpack.c.l.s4 1934713408
          %v1500 = vunpack.c.0.s8 %v1499
          %v1501 = vperm.slane %v1493, %v1500
          %v1502 = vrot.slane %v1497, 4
          %v1503 = vsel %vm1186, %v1502, %v1485
          %v1504 = vrot.slane %v1485, 4
          %v1505 = vsel %vm1186, %v1497, %v1504
          %v1506 = vrot.slane %v1501, 4
          %v1507 = vsel %vm1186, %v1506, %v1489
          %v1508 = vrot.slane %v1489, 4
          %v1509 = vsel %vm1186, %v1501, %v1508
          %v1510 = vpack.c.bf16 %v1503, %v1503
          %v1511 = vpack.c.bf16 %v1505, %v1505
          %v1512 = vpack.c.bf16 %v1507, %v1507
          %v1513 = vpack.c.bf16 %v1509, %v1509
          %1514 = vst.msk [vmem:[#allocation5] sm:$0xf] %vm1161, %v1510
          %1515 = vst.msk [vmem:[#allocation5 + $0x4] sm:$0xf] %vm1161, %v1511
          %1516 = vst.msk [vmem:[#allocation5 + $0x8] sm:$0xf] %vm1161, %v1512
          %1517 = vst.msk [vmem:[#allocation5 + $0xc] sm:$0xf] %vm1161, %v1513
        $region180: #{tpu_custom_call.1} parent=115 // pred_fallthru
          _
        %v1518 = vld [vmem:[%s893] sm:$0x1]
        %v1519 = vld [vmem:[%s1033] sm:$0x1]
        %s1520 = sshra.s32 %s1035, 3
        %s1521 = sand.u32 %s1035, 7
        %s1522 = smul.addr %s1520, 4
        %s1523 = scalar_lea.vmem %s874, %s1522 [#allocation6]
        %v1524 = vld [vmem:[%s1523] sm:$0xf]
        %v1525 = vunpack.c.l.bf16 %v1524
        %vm1526 = vcmask 261120
        %v1527 = vsel %vm1526, %v1525, 0.0
        %1528 = vadd.xlane.f32.xlu0 %v1527
        %v1529 = vpop.xlane.xlu0 %1528
        %v1530 = vrcp.pop 32.0
        %v1531 = vmul.f32 32.0, %v1530
        %v1532 = vsub.f32 1.0, %v1531
        %v1533 = vmul.f32 %v1530, %v1532
        %v1534 = vadd.f32 %v1530, %v1533
        %vm1535 = vweird.f32 %v1530
        %v1536 = vsel %vm1535, %v1530, %v1534
        %v1537 = vmul.f32 %v1529, %v1536
        %v1538 = vsub.f32 %v1525, %v1537
        %v1539 = vmul.f32 %v1538, %v1538
        %v1540 = vsel %vm1526, %v1539, 0.0
        %1541 = vadd.xlane.f32.xlu0 %v1540
        %v1542 = vpop.xlane.xlu0 %1541
        %v1543 = vmul.f32 %v1542, %v1536
        %v1544 = vadd.f32 %v1543, 1e-05
        %v1545 = vrsqrt.pop %v1544
        %v1546 = vmul.f32 %v1545, %v1544
        %v1547 = vmul.f32 %v1546, %v1545
        %v1548 = vmul.f32 0.5, %v1547
        %v1549 = vsub.f32 1.5, %v1548
        %v1550 = vmul.f32 %v1545, %v1549
        %vm1551 = vweird.f32 %v1544
        %vm1552 = vweird.f32 %v1545
        %vm1553 = vmor %vm1551, %vm1552
        %v1554 = vsel %vm1553, %v1545, %v1550
        %v1555 = vmul.f32 %v1538, %v1554
        %v1557 = vperm.slane %v1036, 0
        %v1559 = vmul.f32 %v1555, %v1557
        %v1561 = vperm.slane %v1037, 0
        %v1563 = vadd.f32 %v1559, %v1561
        %v1564 = vpack.c.bf16 %v1563, %v1563
        %v1565 = vld [vmem:[%s6] sm:$0xf]
        %v1566 = vld [vmem:[%s6 + $0x4] sm:$0xf]
        %v1567 = vld [vmem:[%s6 + $0x8] sm:$0xf]
        %v1568 = vld [vmem:[%s6 + $0xc] sm:$0xf]
        %v1569 = vld [vmem:[%s7] sm:$0x1]
        %v1571 = vperm.slane %v1569, 0
        %v1577 = vunpack.c.l.b16 %v1565
        %v1578 = vunpack.c.l.b16 %v1566
        %v1579 = vunpack.c.l.b16 %v1567
        %v1580 = vunpack.c.l.b16 %v1568
        %v1581 = vpack.c.b16 %v1578, %v1577
        %v1582 = vpack.c.b16 %v1580, %v1579
        %v1586 = vsel %vm1526, %v1564, 0
        %1588 = vmatpush.bf16.msra.mxu0 0
        %1589 = vmatpush.bf16.msra.mxu0 0
        %1590 = vmatpush.bf16.msra.mxu0 0
        %1591 = vmatpush.bf16.msra.mxu0 0
        %1592 = vmatpush.bf16.msra.mxu0 0
        %1593 = vmatpush.bf16.msra.mxu0 0
        %1594 = vmatpush.bf16.msra.mxu0 %v1582
        %1595 = vmatpush.bf16.msra.mxu0 %v1581
        %1596 = vmatmul.bf16.gmra.mxu0 %v1586
        %v1597 = vpop.f32.mrf.mxu0
        %v1598 = vadd.f32 %v1571, %v1597
        %v1599 = vpop.f32.mrf.mxu0
        %1600 = vdwg.mxu0
        %v1601 = vld [vmem:[%s8] sm:$0xf]
        %v1602 = vld [vmem:[%s8 + $0x4] sm:$0xf]
        %v1603 = vld [vmem:[%s8 + $0x8] sm:$0xf]
        %v1604 = vld [vmem:[%s8 + $0xc] sm:$0xf]
        %v1605 = vld [vmem:[#allocation12] sm:$0x1]
        %v1606 = vmul.f32 %v1598, 0.35355338
        %1608 = vrot.lane.b32.xlu0 %v1606, 120
        %v1609 = vpop.permute.xlu0 %1608
        %1611 = vrot.lane.b32.xlu0 %v1606, 112
        %v1612 = vpop.permute.xlu0 %1611
        %1614 = vrot.lane.b32.xlu0 %v1606, 104
        %v1615 = vpop.permute.xlu0 %1614
        %v1617 = vrot.slane %v1612, 4
        %vm1618 = vcmask 1047556
        %v1619 = vsel %vm1618, %v1617, %v1606
        %v1620 = vrot.slane %v1606, 4
        %v1621 = vsel %vm1618, %v1612, %v1620
        %v1623 = vunpack.c.l.s4 1983009808
        %v1624 = vunpack.c.0.s8 %v1623
        %v1625 = vperm.slane %v1619, %v1624
        %v1627 = vunpack.c.l.s4 1983009808
        %v1628 = vunpack.c.0.s8 %v1627
        %v1629 = vperm.slane %v1621, %v1628
        %v1630 = vrot.slane %v1615, 4
        %v1631 = vsel %vm1618, %v1630, %v1609
        %v1632 = vrot.slane %v1609, 4
        %v1633 = vsel %vm1618, %v1615, %v1632
        %v1635 = vunpack.c.l.s4 1983009808
        %v1636 = vunpack.c.0.s8 %v1635
        %v1637 = vperm.slane %v1631, %v1636
        %v1639 = vunpack.c.l.s4 1983009808
        %v1640 = vunpack.c.0.s8 %v1639
        %v1641 = vperm.slane %v1633, %v1640
        %v1642 = vrot.slane %v1637, 4
        %v1643 = vsel %vm1618, %v1642, %v1625
        %v1644 = vrot.slane %v1625, 4
        %v1645 = vsel %vm1618, %v1637, %v1644
        %v1647 = vunpack.c.l.s4 1934713408
        %v1648 = vunpack.c.0.s8 %v1647
        %v1649 = vperm.slane %v1643, %v1648
        %v1651 = vunpack.c.l.s4 1934713408
        %v1652 = vunpack.c.0.s8 %v1651
        %v1653 = vperm.slane %v1645, %v1652
        %v1654 = vrot.slane %v1641, 4
        %v1655 = vsel %vm1618, %v1654, %v1629
        %v1656 = vrot.slane %v1629, 4
        %v1657 = vsel %vm1618, %v1641, %v1656
        %v1659 = vunpack.c.l.s4 1934713408
        %v1660 = vunpack.c.0.s8 %v1659
        %v1661 = vperm.slane %v1655, %v1660
        %v1663 = vunpack.c.l.s4 1934713408
        %v1664 = vunpack.c.0.s8 %v1663
        %v1665 = vperm.slane %v1657, %v1664
        %v1666 = vrot.slane %v1649, 4
        %v1667 = vsel %vm1618, 0.0, %v1666
        %v1668 = vrot.slane %v1653, 4
        %v1669 = vsel %vm1618, 0.0, %v1668
        %v1670 = vrot.slane %v1661, 4
        %v1671 = vsel %vm1618, 0.0, %v1670
        %v1672 = vrot.slane %v1665, 4
        %v1673 = vsel %vm1618, 0.0, %v1672
        %v1674 = vsel %vm1618, %v1668, %v1649
        %v1676 = vunpack.c.l.s4 1983009808
        %v1677 = vunpack.c.0.s8 %v1676
        %v1678 = vperm.slane %v1674, %v1677
        %v1679 = vrot.slane %v1669, 4
        %v1680 = vsel %vm1618, %v1679, %v1667
        %v1682 = vunpack.c.l.s4 1983009808
        %v1683 = vunpack.c.0.s8 %v1682
        %v1684 = vperm.slane %v1680, %v1683
        %v1685 = vsel %vm1618, %v1672, %v1661
        %v1687 = vunpack.c.l.s4 1983009808
        %v1688 = vunpack.c.0.s8 %v1687
        %v1689 = vperm.slane %v1685, %v1688
        %v1690 = vrot.slane %v1673, 4
        %v1691 = vsel %vm1618, %v1690, %v1671
        %v1693 = vunpack.c.l.s4 1983009808
        %v1694 = vunpack.c.0.s8 %v1693
        %v1695 = vperm.slane %v1691, %v1694
        %v1696 = vrot.slane %v1684, 4
        %v1697 = vsel %vm1618, %v1696, %v1678
        %v1698 = vrot.slane %v1678, 4
        %v1699 = vsel %vm1618, %v1684, %v1698
        %v1701 = vunpack.c.l.s4 1934713408
        %v1702 = vunpack.c.0.s8 %v1701
        %v1703 = vperm.slane %v1697, %v1702
        %v1705 = vunpack.c.l.s4 1934713408
        %v1706 = vunpack.c.0.s8 %v1705
        %v1707 = vperm.slane %v1699, %v1706
        %v1708 = vrot.slane %v1695, 4
        %v1709 = vsel %vm1618, %v1708, %v1689
        %v1710 = vrot.slane %v1689, 4
        %v1711 = vsel %vm1618, %v1695, %v1710
        %v1713 = vunpack.c.l.s4 1934713408
        %v1714 = vunpack.c.0.s8 %v1713
        %v1715 = vperm.slane %v1709, %v1714
        %v1717 = vunpack.c.l.s4 1934713408
        %v1718 = vunpack.c.0.s8 %v1717
        %v1719 = vperm.slane %v1711, %v1718
        %v1720 = vrot.slane %v1715, 4
        %v1721 = vsel %vm1618, %v1720, %v1703
        %v1722 = vrot.slane %v1703, 4
        %v1723 = vsel %vm1618, %v1715, %v1722
        %v1724 = vrot.slane %v1719, 4
        %v1725 = vsel %vm1618, %v1724, %v1707
        %v1726 = vrot.slane %v1707, 4
        %v1727 = vsel %vm1618, %v1719, %v1726
        %v1728 = vpack.c.bf16 %v1721, %v1721
        %v1729 = vpack.c.bf16 %v1723, %v1723
        %v1730 = vpack.c.bf16 %v1725, %v1725
        %v1731 = vpack.c.bf16 %v1727, %v1727
        %v1732 = vld [vmem:[#allocation2] sm:$0xf]
        %v1733 = vld [vmem:[#allocation2 + $0x4] sm:$0xf]
        %v1734 = vld [vmem:[#allocation2 + $0x8] sm:$0xf]
        %v1735 = vld [vmem:[#allocation2 + $0xc] sm:$0xf]
        %v1736 = vld [vmem:[#allocation3] sm:$0xf]
        %v1737 = vld [vmem:[#allocation3 + $0x4] sm:$0xf]
        %v1738 = vld [vmem:[#allocation3 + $0x8] sm:$0xf]
        %v1739 = vld [vmem:[#allocation3 + $0xc] sm:$0xf]
        %v1740 = vlaneseq
        %v1741 = vshrl.u32 %v1740, 7
        %v1742 = vstv %s1035
        %v1743 = vadd.s32 %v1742, %v1741
        %v1744 = vlaneseq
        %v1745 = vand.u32 %v1744, 127
        %vm1746 = vcmp.ge.s32.totalorder %v1743, %v1745
        %vm1747 = vcmp.gt.f32.partialorder %v1518, 0.0
        %v1748 = vsel %vm1747, 1, 0
        %v1749 = vperm.slane %v1748, 0
        %vm1750 = vcmp.eq.s32.totalorder %v1749, 1
        %vm1751 = vmand %vm1746, %vm1750
        %v1752 = vsel %vm1751, 0.0, -1e+09
        %vm1753 = vcmask 64512
        %v1755 = vsel %vm1753, %v1728, 0
        %vm1757 = vcmask 1043456
        %v1759 = vsel %vm1757, %v1732, 0
        %1761 = vmatpush.bf16.msra.mxu0 0
        %1762 = vmatpush.bf16.msra.mxu0 0
        %1763 = vmatpush.bf16.msra.mxu0 0
        %1764 = vmatpush.bf16.msra.mxu0 0
        %1765 = vmatpush.bf16.msra.mxu0 0
        %1766 = vmatpush.bf16.msra.mxu0 0
        %1767 = vmatpush.bf16.msra.mxu0 0
        %1768 = vmatpush.bf16.msra.mxu0 %v1759
        %1769 = vmatmul.bf16.gmra.mxu0 %v1755
        %v1770 = vpop.f32.mrf.mxu0
        %v1771 = vadd.f32 %v1752, %v1770
        %v1772 = vpop.f32.mrf.mxu0
        %1773 = vdwg.mxu0
        %v1775 = vsel %vm1753, %v1729, 0
        %v1778 = vsel %vm1757, %v1733, 0
        %1780 = vmatpush.bf16.msra.mxu0 0
        %1781 = vmatpush.bf16.msra.mxu0 0
        %1782 = vmatpush.bf16.msra.mxu0 0
        %1783 = vmatpush.bf16.msra.mxu0 0
        %1784 = vmatpush.bf16.msra.mxu0 0
        %1785 = vmatpush.bf16.msra.mxu0 0
        %1786 = vmatpush.bf16.msra.mxu0 0
        %1787 = vmatpush.bf16.msra.mxu0 %v1778
        %1788 = vmatmul.bf16.gmra.mxu0 %v1775
        %v1789 = vpop.f32.mrf.mxu0
        %v1790 = vadd.f32 %v1752, %v1789
        %v1791 = vpop.f32.mrf.mxu0
        %1792 = vdwg.mxu0
        %v1794 = vsel %vm1753, %v1730, 0
        %v1797 = vsel %vm1757, %v1734, 0
        %1799 = vmatpush.bf16.msra.mxu0 0
        %1800 = vmatpush.bf16.msra.mxu0 0
        %1801 = vmatpush.bf16.msra.mxu0 0
        %1802 = vmatpush.bf16.msra.mxu0 0
        %1803 = vmatpush.bf16.msra.mxu0 0
        %1804 = vmatpush.bf16.msra.mxu0 0
        %1805 = vmatpush.bf16.msra.mxu0 0
        %1806 = vmatpush.bf16.msra.mxu0 %v1797
        %1807 = vmatmul.bf16.gmra.mxu0 %v1794
        %v1808 = vpop.f32.mrf.mxu0
        %v1809 = vadd.f32 %v1752, %v1808
        %v1810 = vpop.f32.mrf.mxu0
        %1811 = vdwg.mxu0
        %v1813 = vsel %vm1753, %v1731, 0
        %v1816 = vsel %vm1757, %v1735, 0
        %1818 = vmatpush.bf16.msra.mxu0 0
        %1819 = vmatpush.bf16.msra.mxu0 0
        %1820 = vmatpush.bf16.msra.mxu0 0
        %1821 = vmatpush.bf16.msra.mxu0 0
        %1822 = vmatpush.bf16.msra.mxu0 0
        %1823 = vmatpush.bf16.msra.mxu0 0
        %1824 = vmatpush.bf16.msra.mxu0 0
        %1825 = vmatpush.bf16.msra.mxu0 %v1816
        %1826 = vmatmul.bf16.gmra.mxu0 %v1813
        %v1827 = vpop.f32.mrf.mxu0
        %v1828 = vadd.f32 %v1752, %v1827
        %v1829 = vpop.f32.mrf.mxu0
        %1830 = vdwg.mxu0
        %v1831 = vsel %vm1753, %v1771, -inf
        %1832 = vmax.xlane.f32.xlu0 %v1831
        %v1833 = vpop.xlane.xlu0 %1832
        %v1834 = vsel %vm1753, %v1790, -inf
        %1835 = vmax.xlane.f32.xlu0 %v1834
        %v1836 = vpop.xlane.xlu0 %1835
        %v1837 = vsel %vm1753, %v1809, -inf
        %1838 = vmax.xlane.f32.xlu0 %v1837
        %v1839 = vpop.xlane.xlu0 %1838
        %v1840 = vsel %vm1753, %v1828, -inf
        %1841 = vmax.xlane.f32.xlu0 %v1840
        %v1842 = vpop.xlane.xlu0 %1841
        %v1843 = vsub.f32 -inf, %v1833
        %v1844 = vsub.f32 -inf, %v1836
        %v1845 = vsub.f32 -inf, %v1839
        %v1846 = vsub.f32 -inf, %v1842
        %v1847 = vmul.f32 %v1843, 1.442695
        %v1848 = vpow.pop %v1847
        %v1849 = vmul.f32 %v1844, 1.442695
        %v1850 = vpow.pop %v1849
        %v1851 = vmul.f32 %v1845, 1.442695
        %v1852 = vpow.pop %v1851
        %v1853 = vmul.f32 %v1846, 1.442695
        %v1854 = vpow.pop %v1853
        %v1855 = vsub.f32 %v1771, %v1833
        %v1856 = vsub.f32 %v1790, %v1836
        %v1857 = vsub.f32 %v1809, %v1839
        %v1858 = vsub.f32 %v1828, %v1842
        %v1859 = vmul.f32 %v1855, 1.442695
        %v1860 = vpow.pop %v1859
        %v1861 = vmul.f32 %v1856, 1.442695
        %v1862 = vpow.pop %v1861
        %v1863 = vmul.f32 %v1857, 1.442695
        %v1864 = vpow.pop %v1863
        %v1865 = vmul.f32 %v1858, 1.442695
        %v1866 = vpow.pop %v1865
        %v1867 = vmul.f32 %v1848, 0.0
        %v1868 = vmul.f32 %v1850, 0.0
        %v1869 = vmul.f32 %v1852, 0.0
        %v1870 = vmul.f32 %v1854, 0.0
        %v1871 = vsel %vm1753, %v1860, 0.0
        %1872 = vadd.xlane.f32.xlu0 %v1871
        %v1873 = vpop.xlane.xlu0 %1872
        %v1874 = vsel %vm1753, %v1862, 0.0
        %1875 = vadd.xlane.f32.xlu0 %v1874
        %v1876 = vpop.xlane.xlu0 %1875
        %v1877 = vsel %vm1753, %v1864, 0.0
        %1878 = vadd.xlane.f32.xlu0 %v1877
        %v1879 = vpop.xlane.xlu0 %1878
        %v1880 = vsel %vm1753, %v1866, 0.0
        %1881 = vadd.xlane.f32.xlu0 %v1880
        %v1882 = vpop.xlane.xlu0 %1881
        %v1883 = vadd.f32 %v1867, %v1873
        %v1884 = vadd.f32 %v1868, %v1876
        %v1885 = vadd.f32 %v1869, %v1879
        %v1886 = vadd.f32 %v1870, %v1882
        %v1887 = vpack.c.bf16 %v1860, %v1860
        %v1888 = vpack.c.bf16 %v1862, %v1862
        %v1889 = vpack.c.bf16 %v1864, %v1864
        %v1890 = vpack.c.bf16 %v1866, %v1866
        %v1892 = vsel %vm1753, %v1887, 0
        %v1895 = vsel %vm1757, %v1736, 0
        %1897 = vmatpush.bf16.msra.mxu0 0
        %1898 = vmatpush.bf16.msra.mxu0 0
        %1899 = vmatpush.bf16.msra.mxu0 0
        %1900 = vmatpush.bf16.msra.mxu0 0
        %1901 = vmatpush.bf16.msra.mxu0 0
        %1902 = vmatpush.bf16.msra.mxu0 0
        %1903 = vmatpush.bf16.msra.mxu0 0
        %1904 = vmatpush.bf16.msra.mxu0 %v1895
        %1905 = vmatmul.bf16.gmra.mxu0 %v1892
        %v1906 = vpop.f32.mrf.mxu0
        %v1907 = vadd.f32 0.0, %v1906
        %v1908 = vpop.f32.mrf.mxu0
        %1909 = vdwg.mxu0
        %v1911 = vsel %vm1753, %v1888, 0
        %v1914 = vsel %vm1757, %v1737, 0
        %1916 = vmatpush.bf16.msra.mxu0 0
        %1917 = vmatpush.bf16.msra.mxu0 0
        %1918 = vmatpush.bf16.msra.mxu0 0
        %1919 = vmatpush.bf16.msra.mxu0 0
        %1920 = vmatpush.bf16.msra.mxu0 0
        %1921 = vmatpush.bf16.msra.mxu0 0
        %1922 = vmatpush.bf16.msra.mxu0 0
        %1923 = vmatpush.bf16.msra.mxu0 %v1914
        %1924 = vmatmul.bf16.gmra.mxu0 %v1911
        %v1925 = vpop.f32.mrf.mxu0
        %v1926 = vadd.f32 0.0, %v1925
        %v1927 = vpop.f32.mrf.mxu0
        %1928 = vdwg.mxu0
        %v1930 = vsel %vm1753, %v1889, 0
        %v1933 = vsel %vm1757, %v1738, 0
        %1935 = vmatpush.bf16.msra.mxu0 0
        %1936 = vmatpush.bf16.msra.mxu0 0
        %1937 = vmatpush.bf16.msra.mxu0 0
        %1938 = vmatpush.bf16.msra.mxu0 0
        %1939 = vmatpush.bf16.msra.mxu0 0
        %1940 = vmatpush.bf16.msra.mxu0 0
        %1941 = vmatpush.bf16.msra.mxu0 0
        %1942 = vmatpush.bf16.msra.mxu0 %v1933
        %1943 = vmatmul.bf16.gmra.mxu0 %v1930
        %v1944 = vpop.f32.mrf.mxu0
        %v1945 = vadd.f32 0.0, %v1944
        %v1946 = vpop.f32.mrf.mxu0
        %1947 = vdwg.mxu0
        %v1949 = vsel %vm1753, %v1890, 0
        %v1952 = vsel %vm1757, %v1739, 0
        %1954 = vmatpush.bf16.msra.mxu0 0
        %1955 = vmatpush.bf16.msra.mxu0 0
        %1956 = vmatpush.bf16.msra.mxu0 0
        %1957 = vmatpush.bf16.msra.mxu0 0
        %1958 = vmatpush.bf16.msra.mxu0 0
        %1959 = vmatpush.bf16.msra.mxu0 0
        %1960 = vmatpush.bf16.msra.mxu0 0
        %1961 = vmatpush.bf16.msra.mxu0 %v1952
        %1962 = vmatmul.bf16.gmra.mxu0 %v1949
        %v1963 = vpop.f32.mrf.mxu0
        %v1964 = vadd.f32 0.0, %v1963
        %v1965 = vpop.f32.mrf.mxu0
        %1966 = vdwg.mxu0
        %v1967 = vadd.f32 %v1867, %v1907
        %v1968 = vadd.f32 %v1868, %v1926
        %v1969 = vadd.f32 %v1869, %v1945
        %v1970 = vadd.f32 %v1870, %v1964
        %v1971 = vrcp.pop %v1883
        %v1972 = vrcp.pop %v1884
        %v1973 = vrcp.pop %v1885
        %v1974 = vrcp.pop %v1886
        %v1975 = vmul.f32 %v1967, %v1971
        %v1976 = vmul.f32 %v1968, %v1972
        %v1977 = vmul.f32 %v1969, %v1973
        %v1978 = vmul.f32 %v1970, %v1974
        %v1979 = vrot.slane %v1977, 4
        %v1980 = vsel %vm1618, %v1979, %v1975
        %v1981 = vrot.slane %v1975, 4
        %v1982 = vsel %vm1618, %v1977, %v1981
        %v1984 = vunpack.c.l.s4 1983009808
        %v1985 = vunpack.c.0.s8 %v1984
        %v1986 = vperm.slane %v1980, %v1985
        %v1988 = vunpack.c.l.s4 1983009808
        %v1989 = vunpack.c.0.s8 %v1988
        %v1990 = vperm.slane %v1982, %v1989
        %v1991 = vrot.slane %v1978, 4
        %v1992 = vsel %vm1618, %v1991, %v1976
        %v1993 = vrot.slane %v1976, 4
        %v1994 = vsel %vm1618, %v1978, %v1993
        %v1996 = vunpack.c.l.s4 1983009808
        %v1997 = vunpack.c.0.s8 %v1996
        %v1998 = vperm.slane %v1992, %v1997
        %v2000 = vunpack.c.l.s4 1983009808
        %v2001 = vunpack.c.0.s8 %v2000
        %v2002 = vperm.slane %v1994, %v2001
        %v2003 = vrot.slane %v1998, 4
        %v2004 = vsel %vm1618, %v2003, %v1986
        %v2005 = vrot.slane %v1986, 4
        %v2006 = vsel %vm1618, %v1998, %v2005
        %v2008 = vunpack.c.l.s4 1934713408
        %v2009 = vunpack.c.0.s8 %v2008
        %v2010 = vperm.slane %v2004, %v2009
        %v2012 = vunpack.c.l.s4 1934713408
        %v2013 = vunpack.c.0.s8 %v2012
        %v2014 = vperm.slane %v2006, %v2013
        %v2015 = vrot.slane %v2002, 4
        %v2016 = vsel %vm1618, %v2015, %v1990
        %v2017 = vrot.slane %v1990, 4
        %v2018 = vsel %vm1618, %v2002, %v2017
        %v2020 = vunpack.c.l.s4 1934713408
        %v2021 = vunpack.c.0.s8 %v2020
        %v2022 = vperm.slane %v2016, %v2021
        %v2024 = vunpack.c.l.s4 1934713408
        %v2025 = vunpack.c.0.s8 %v2024
        %v2026 = vperm.slane %v2018, %v2025
        %v2027 = vrot.slane %v2010, 4
        %v2028 = vsel %vm1618, 0.0, %v2027
        %v2029 = vrot.slane %v2014, 4
        %v2030 = vsel %vm1618, 0.0, %v2029
        %v2031 = vrot.slane %v2022, 4
        %v2032 = vsel %vm1618, 0.0, %v2031
        %v2033 = vrot.slane %v2026, 4
        %v2034 = vsel %vm1618, 0.0, %v2033
        %v2035 = vsel %vm1618, %v2029, %v2010
        %v2037 = vunpack.c.l.s4 1983009808
        %v2038 = vunpack.c.0.s8 %v2037
        %v2039 = vperm.slane %v2035, %v2038
        %v2040 = vrot.slane %v2030, 4
        %v2041 = vsel %vm1618, %v2040, %v2028
        %v2043 = vunpack.c.l.s4 1983009808
        %v2044 = vunpack.c.0.s8 %v2043
        %v2045 = vperm.slane %v2041, %v2044
        %v2046 = vsel %vm1618, %v2033, %v2022
        %v2048 = vunpack.c.l.s4 1983009808
        %v2049 = vunpack.c.0.s8 %v2048
        %v2050 = vperm.slane %v2046, %v2049
        %v2051 = vrot.slane %v2034, 4
        %v2052 = vsel %vm1618, %v2051, %v2032
        %v2054 = vunpack.c.l.s4 1983009808
        %v2055 = vunpack.c.0.s8 %v2054
        %v2056 = vperm.slane %v2052, %v2055
        %v2057 = vrot.slane %v2045, 4
        %v2058 = vsel %vm1618, %v2057, %v2039
        %v2059 = vrot.slane %v2039, 4
        %v2060 = vsel %vm1618, %v2045, %v2059
        %v2062 = vunpack.c.l.s4 1934713408
        %v2063 = vunpack.c.0.s8 %v2062
        %v2064 = vperm.slane %v2058, %v2063
        %v2066 = vunpack.c.l.s4 1934713408
        %v2067 = vunpack.c.0.s8 %v2066
        %v2068 = vperm.slane %v2060, %v2067
        %v2069 = vrot.slane %v2056, 4
        %v2070 = vsel %vm1618, %v2069, %v2050
        %v2071 = vrot.slane %v2050, 4
        %v2072 = vsel %vm1618, %v2056, %v2071
        %v2074 = vunpack.c.l.s4 1934713408
        %v2075 = vunpack.c.0.s8 %v2074
        %v2076 = vperm.slane %v2070, %v2075
        %v2078 = vunpack.c.l.s4 1934713408
        %v2079 = vunpack.c.0.s8 %v2078
        %v2080 = vperm.slane %v2072, %v2079
        %v2081 = vrot.slane %v2076, 4
        %v2082 = vsel %vm1618, %v2081, %v2064
        %v2083 = vrot.slane %v2064, 4
        %v2084 = vsel %vm1618, %v2076, %v2083
        %v2085 = vrot.slane %v2080, 4
        %v2086 = vsel %vm1618, %v2085, %v2068
        %v2087 = vrot.slane %v2068, 4
        %v2088 = vsel %vm1618, %v2080, %v2087
        %2090 = vrot.lane.b32.xlu0 %v2084, 8
        %v2091 = vpop.permute.xlu0 %2090
        %2094 = vrot.lane.b32.xlu0 %v2086, 16
        %v2095 = vpop.permute.xlu0 %2094
        %2098 = vrot.lane.b32.xlu0 %v2088, 24
        %v2099 = vpop.permute.xlu0 %2098
        %v2101 = vsel %vm1753, %v2082, %v2091
        %vm2102 = vcmask 130048
        %v2103 = vsel %vm2102, %v2101, %v2095
        %vm2104 = vcmask 195584
        %v2105 = vsel %vm2104, %v2103, %v2099
        %v2106 = vpack.c.bf16 %v2105, %v2105
        %v2108 = vperm.slane %v1605, 0
        %v2114 = vunpack.c.l.b16 %v1601
        %v2115 = vunpack.c.l.b16 %v1602
        %v2116 = vunpack.c.l.b16 %v1603
        %v2117 = vunpack.c.l.b16 %v1604
        %v2118 = vpack.c.b16 %v2115, %v2114
        %v2119 = vpack.c.b16 %v2117, %v2116
        %v2123 = vsel %vm1526, %v2106, 0
        %2125 = vmatpush.bf16.msra.mxu0 0
        %2126 = vmatpush.bf16.msra.mxu0 0
        %2127 = vmatpush.bf16.msra.mxu0 0
        %2128 = vmatpush.bf16.msra.mxu0 0
        %2129 = vmatpush.bf16.msra.mxu0 0
        %2130 = vmatpush.bf16.msra.mxu0 0
        %2131 = vmatpush.bf16.msra.mxu0 %v2119
        %2132 = vmatpush.bf16.msra.mxu0 %v2118
        %2133 = vmatmul.bf16.gmra.mxu0 %v2123
        %v2134 = vpop.f32.mrf.mxu0
        %v2135 = vadd.f32 %v2108, %v2134
        %v2136 = vpop.f32.mrf.mxu0
        %2137 = vdwg.mxu0
        %v2138 = vadd.f32 %v1525, %v2135
        %v2139 = vld [vmem:[#allocation14] sm:$0x1]
        %v2140 = vld [vmem:[#allocation15] sm:$0x1]
        %v2141 = vsel %vm1526, %v2138, 0.0
        %2142 = vadd.xlane.f32.xlu0 %v2141
        %v2143 = vpop.xlane.xlu0 %2142
        %v2144 = vmul.f32 %v2143, %v1536
        %v2145 = vsub.f32 %v2138, %v2144
        %v2146 = vmul.f32 %v2145, %v2145
        %v2147 = vsel %vm1526, %v2146, 0.0
        %2148 = vadd.xlane.f32.xlu0 %v2147
        %v2149 = vpop.xlane.xlu0 %2148
        %v2150 = vmul.f32 %v2149, %v1536
        %v2151 = vadd.f32 %v2150, 1e-05
        %v2152 = vrsqrt.pop %v2151
        %v2153 = vmul.f32 %v2152, %v2151
        %v2154 = vmul.f32 %v2153, %v2152
        %v2155 = vmul.f32 0.5, %v2154
        %v2156 = vsub.f32 1.5, %v2155
        %v2157 = vmul.f32 %v2152, %v2156
        %vm2158 = vweird.f32 %v2151
        %vm2159 = vweird.f32 %v2152
        %vm2160 = vmor %vm2158, %vm2159
        %v2161 = vsel %vm2160, %v2152, %v2157
        %v2162 = vmul.f32 %v2145, %v2161
        %v2164 = vperm.slane %v2139, 0
        %v2166 = vmul.f32 %v2162, %v2164
        %v2168 = vperm.slane %v2140, 0
        %v2170 = vadd.f32 %v2166, %v2168
        %v2171 = vpack.c.bf16 %v2170, %v2170
        %v2172 = vld [vmem:[%s12] sm:$0xf]
        %v2173 = vld [vmem:[%s12 + $0x4] sm:$0xf]
        %v2174 = vld [vmem:[%s12 + $0x8] sm:$0xf]
        %v2175 = vld [vmem:[%s12 + $0xc] sm:$0xf]
        %v2176 = vld [vmem:[#allocation17] sm:$0x1]
        %v2178 = vperm.slane %v2176, 0
        %v2184 = vunpack.c.l.b16 %v2172
        %v2185 = vunpack.c.l.b16 %v2173
        %v2186 = vunpack.c.l.b16 %v2174
        %v2187 = vunpack.c.l.b16 %v2175
        %v2188 = vpack.c.b16 %v2185, %v2184
        %v2189 = vpack.c.b16 %v2187, %v2186
        %v2193 = vsel %vm1526, %v2171, 0
        %2195 = vmatpush.bf16.msra.mxu0 0
        %2196 = vmatpush.bf16.msra.mxu0 0
        %2197 = vmatpush.bf16.msra.mxu0 0
        %2198 = vmatpush.bf16.msra.mxu0 0
        %2199 = vmatpush.bf16.msra.mxu0 0
        %2200 = vmatpush.bf16.msra.mxu0 0
        %2201 = vmatpush.bf16.msra.mxu0 %v2189
        %2202 = vmatpush.bf16.msra.mxu0 %v2188
        %2203 = vmatmul.bf16.gmra.mxu0 %v2193
        %v2204 = vpop.f32.mrf.mxu0
        %v2205 = vadd.f32 %v2178, %v2204
        %v2206 = vpop.f32.mrf.mxu0
        %2207 = vdwg.mxu0
        %v2208 = vld [vmem:[#allocation21] sm:$0xf]
        %v2209 = vld [vmem:[#allocation21 + $0x4] sm:$0xf]
        %v2210 = vld [vmem:[#allocation21 + $0x8] sm:$0xf]
        %v2211 = vld [vmem:[#allocation21 + $0xc] sm:$0xf]
        %v2212 = vld [vmem:[#allocation23] sm:$0x1]
        %v2213 = vmul.f32 %v2205, 0.35355338
        %2215 = vrot.lane.b32.xlu0 %v2213, 120
        %v2216 = vpop.permute.xlu0 %2215
        %2218 = vrot.lane.b32.xlu0 %v2213, 112
        %v2219 = vpop.permute.xlu0 %2218
        %2221 = vrot.lane.b32.xlu0 %v2213, 104
        %v2222 = vpop.permute.xlu0 %2221
        %v2224 = vrot.slane %v2219, 4
        %v2225 = vsel %vm1618, %v2224, %v2213
        %v2226 = vrot.slane %v2213, 4
        %v2227 = vsel %vm1618, %v2219, %v2226
        %v2229 = vunpack.c.l.s4 1983009808
        %v2230 = vunpack.c.0.s8 %v2229
        %v2231 = vperm.slane %v2225, %v2230
        %v2233 = vunpack.c.l.s4 1983009808
        %v2234 = vunpack.c.0.s8 %v2233
        %v2235 = vperm.slane %v2227, %v2234
        %v2236 = vrot.slane %v2222, 4
        %v2237 = vsel %vm1618, %v2236, %v2216
        %v2238 = vrot.slane %v2216, 4
        %v2239 = vsel %vm1618, %v2222, %v2238
        %v2241 = vunpack.c.l.s4 1983009808
        %v2242 = vunpack.c.0.s8 %v2241
        %v2243 = vperm.slane %v2237, %v2242
        %v2245 = vunpack.c.l.s4 1983009808
        %v2246 = vunpack.c.0.s8 %v2245
        %v2247 = vperm.slane %v2239, %v2246
        %v2248 = vrot.slane %v2243, 4
        %v2249 = vsel %vm1618, %v2248, %v2231
        %v2250 = vrot.slane %v2231, 4
        %v2251 = vsel %vm1618, %v2243, %v2250
        %v2253 = vunpack.c.l.s4 1934713408
        %v2254 = vunpack.c.0.s8 %v2253
        %v2255 = vperm.slane %v2249, %v2254
        %v2257 = vunpack.c.l.s4 1934713408
        %v2258 = vunpack.c.0.s8 %v2257
        %v2259 = vperm.slane %v2251, %v2258
        %v2260 = vrot.slane %v2247, 4
        %v2261 = vsel %vm1618, %v2260, %v2235
        %v2262 = vrot.slane %v2235, 4
        %v2263 = vsel %vm1618, %v2247, %v2262
        %v2265 = vunpack.c.l.s4 1934713408
        %v2266 = vunpack.c.0.s8 %v2265
        %v2267 = vperm.slane %v2261, %v2266
        %v2269 = vunpack.c.l.s4 1934713408
        %v2270 = vunpack.c.0.s8 %v2269
        %v2271 = vperm.slane %v2263, %v2270
        %v2272 = vrot.slane %v2255, 4
        %v2273 = vsel %vm1618, 0.0, %v2272
        %v2274 = vrot.slane %v2259, 4
        %v2275 = vsel %vm1618, 0.0, %v2274
        %v2276 = vrot.slane %v2267, 4
        %v2277 = vsel %vm1618, 0.0, %v2276
        %v2278 = vrot.slane %v2271, 4
        %v2279 = vsel %vm1618, 0.0, %v2278
        %v2280 = vsel %vm1618, %v2274, %v2255
        %v2282 = vunpack.c.l.s4 1983009808
        %v2283 = vunpack.c.0.s8 %v2282
        %v2284 = vperm.slane %v2280, %v2283
        %v2285 = vrot.slane %v2275, 4
        %v2286 = vsel %vm1618, %v2285, %v2273
        %v2288 = vunpack.c.l.s4 1983009808
        %v2289 = vunpack.c.0.s8 %v2288
        %v2290 = vperm.slane %v2286, %v2289
        %v2291 = vsel %vm1618, %v2278, %v2267
        %v2293 = vunpack.c.l.s4 1983009808
        %v2294 = vunpack.c.0.s8 %v2293
        %v2295 = vperm.slane %v2291, %v2294
        %v2296 = vrot.slane %v2279, 4
        %v2297 = vsel %vm1618, %v2296, %v2277
        %v2299 = vunpack.c.l.s4 1983009808
        %v2300 = vunpack.c.0.s8 %v2299
        %v2301 = vperm.slane %v2297, %v2300
        %v2302 = vrot.slane %v2290, 4
        %v2303 = vsel %vm1618, %v2302, %v2284
        %v2304 = vrot.slane %v2284, 4
        %v2305 = vsel %vm1618, %v2290, %v2304
        %v2307 = vunpack.c.l.s4 1934713408
        %v2308 = vunpack.c.0.s8 %v2307
        %v2309 = vperm.slane %v2303, %v2308
        %v2311 = vunpack.c.l.s4 1934713408
        %v2312 = vunpack.c.0.s8 %v2311
        %v2313 = vperm.slane %v2305, %v2312
        %v2314 = vrot.slane %v2301, 4
        %v2315 = vsel %vm1618, %v2314, %v2295
        %v2316 = vrot.slane %v2295, 4
        %v2317 = vsel %vm1618, %v2301, %v2316
        %v2319 = vunpack.c.l.s4 1934713408
        %v2320 = vunpack.c.0.s8 %v2319
        %v2321 = vperm.slane %v2315, %v2320
        %v2323 = vunpack.c.l.s4 1934713408
        %v2324 = vunpack.c.0.s8 %v2323
        %v2325 = vperm.slane %v2317, %v2324
        %v2326 = vrot.slane %v2321, 4
        %v2327 = vsel %vm1618, %v2326, %v2309
        %v2328 = vrot.slane %v2309, 4
        %v2329 = vsel %vm1618, %v2321, %v2328
        %v2330 = vrot.slane %v2325, 4
        %v2331 = vsel %vm1618, %v2330, %v2313
        %v2332 = vrot.slane %v2313, 4
        %v2333 = vsel %vm1618, %v2325, %v2332
        %v2334 = vpack.c.bf16 %v2327, %v2327
        %v2335 = vpack.c.bf16 %v2329, %v2329
        %v2336 = vpack.c.bf16 %v2331, %v2331
        %v2337 = vpack.c.bf16 %v2333, %v2333
        %v2338 = vld [vmem:[#allocation4] sm:$0xf]
        %v2339 = vld [vmem:[#allocation4 + $0x4] sm:$0xf]
        %v2340 = vld [vmem:[#allocation4 + $0x8] sm:$0xf]
        %v2341 = vld [vmem:[#allocation4 + $0xc] sm:$0xf]
        %v2342 = vld [vmem:[#allocation5] sm:$0xf]
        %v2343 = vld [vmem:[#allocation5 + $0x4] sm:$0xf]
        %v2344 = vld [vmem:[#allocation5 + $0x8] sm:$0xf]
        %v2345 = vld [vmem:[#allocation5 + $0xc] sm:$0xf]
        %vm2346 = vcmp.gt.f32.partialorder %v1519, 0.0
        %v2347 = vsel %vm2346, 0.0, -1e+09
        %v2349 = vperm.slane %v2347, 0
        %v2352 = vsel %vm1753, %v2334, 0
        %v2355 = vsel %vm1757, %v2338, 0
        %2357 = vmatpush.bf16.msra.mxu0 0
        %2358 = vmatpush.bf16.msra.mxu0 0
        %2359 = vmatpush.bf16.msra.mxu0 0
        %2360 = vmatpush.bf16.msra.mxu0 0
        %2361 = vmatpush.bf16.msra.mxu0 0
        %2362 = vmatpush.bf16.msra.mxu0 0
        %2363 = vmatpush.bf16.msra.mxu0 0
        %2364 = vmatpush.bf16.msra.mxu0 %v2355
        %2365 = vmatmul.bf16.gmra.mxu0 %v2352
        %v2366 = vpop.f32.mrf.mxu0
        %v2367 = vadd.f32 %v2349, %v2366
        %v2368 = vpop.f32.mrf.mxu0
        %2369 = vdwg.mxu0
        %v2371 = vsel %vm1753, %v2335, 0
        %v2374 = vsel %vm1757, %v2339, 0
        %2376 = vmatpush.bf16.msra.mxu0 0
        %2377 = vmatpush.bf16.msra.mxu0 0
        %2378 = vmatpush.bf16.msra.mxu0 0
        %2379 = vmatpush.bf16.msra.mxu0 0
        %2380 = vmatpush.bf16.msra.mxu0 0
        %2381 = vmatpush.bf16.msra.mxu0 0
        %2382 = vmatpush.bf16.msra.mxu0 0
        %2383 = vmatpush.bf16.msra.mxu0 %v2374
        %2384 = vmatmul.bf16.gmra.mxu0 %v2371
        %v2385 = vpop.f32.mrf.mxu0
        %v2386 = vadd.f32 %v2349, %v2385
        %v2387 = vpop.f32.mrf.mxu0
        %2388 = vdwg.mxu0
        %v2390 = vsel %vm1753, %v2336, 0
        %v2393 = vsel %vm1757, %v2340, 0
        %2395 = vmatpush.bf16.msra.mxu0 0
        %2396 = vmatpush.bf16.msra.mxu0 0
        %2397 = vmatpush.bf16.msra.mxu0 0
        %2398 = vmatpush.bf16.msra.mxu0 0
        %2399 = vmatpush.bf16.msra.mxu0 0
        %2400 = vmatpush.bf16.msra.mxu0 0
        %2401 = vmatpush.bf16.msra.mxu0 0
        %2402 = vmatpush.bf16.msra.mxu0 %v2393
        %2403 = vmatmul.bf16.gmra.mxu0 %v2390
        %v2404 = vpop.f32.mrf.mxu0
        %v2405 = vadd.f32 %v2349, %v2404
        %v2406 = vpop.f32.mrf.mxu0
        %2407 = vdwg.mxu0
        %v2409 = vsel %vm1753, %v2337, 0
        %v2412 = vsel %vm1757, %v2341, 0
        %2414 = vmatpush.bf16.msra.mxu0 0
        %2415 = vmatpush.bf16.msra.mxu0 0
        %2416 = vmatpush.bf16.msra.mxu0 0
        %2417 = vmatpush.bf16.msra.mxu0 0
        %2418 = vmatpush.bf16.msra.mxu0 0
        %2419 = vmatpush.bf16.msra.mxu0 0
        %2420 = vmatpush.bf16.msra.mxu0 0
        %2421 = vmatpush.bf16.msra.mxu0 %v2412
        %2422 = vmatmul.bf16.gmra.mxu0 %v2409
        %v2423 = vpop.f32.mrf.mxu0
        %v2424 = vadd.f32 %v2349, %v2423
        %v2425 = vpop.f32.mrf.mxu0
        %2426 = vdwg.mxu0
        %v2427 = vsel %vm1753, %v2367, -inf
        %2428 = vmax.xlane.f32.xlu0 %v2427
        %v2429 = vpop.xlane.xlu0 %2428
        %v2430 = vsel %vm1753, %v2386, -inf
        %2431 = vmax.xlane.f32.xlu0 %v2430
        %v2432 = vpop.xlane.xlu0 %2431
        %v2433 = vsel %vm1753, %v2405, -inf
        %2434 = vmax.xlane.f32.xlu0 %v2433
        %v2435 = vpop.xlane.xlu0 %2434
        %v2436 = vsel %vm1753, %v2424, -inf
        %2437 = vmax.xlane.f32.xlu0 %v2436
        %v2438 = vpop.xlane.xlu0 %2437
        %v2439 = vsub.f32 -inf, %v2429
        %v2440 = vsub.f32 -inf, %v2432
        %v2441 = vsub.f32 -inf, %v2435
        %v2442 = vsub.f32 -inf, %v2438
        %v2443 = vmul.f32 %v2439, 1.442695
        %v2444 = vpow.pop %v2443
        %v2445 = vmul.f32 %v2440, 1.442695
        %v2446 = vpow.pop %v2445
        %v2447 = vmul.f32 %v2441, 1.442695
        %v2448 = vpow.pop %v2447
        %v2449 = vmul.f32 %v2442, 1.442695
        %v2450 = vpow.pop %v2449
        %v2451 = vsub.f32 %v2367, %v2429
        %v2452 = vsub.f32 %v2386, %v2432
        %v2453 = vsub.f32 %v2405, %v2435
        %v2454 = vsub.f32 %v2424, %v2438
        %v2455 = vmul.f32 %v2451, 1.442695
        %v2456 = vpow.pop %v2455
        %v2457 = vmul.f32 %v2452, 1.442695
        %v2458 = vpow.pop %v2457
        %v2459 = vmul.f32 %v2453, 1.442695
        %v2460 = vpow.pop %v2459
        %v2461 = vmul.f32 %v2454, 1.442695
        %v2462 = vpow.pop %v2461
        %v2463 = vmul.f32 %v2444, 0.0
        %v2464 = vmul.f32 %v2446, 0.0
        %v2465 = vmul.f32 %v2448, 0.0
        %v2466 = vmul.f32 %v2450, 0.0
        %v2467 = vsel %vm1753, %v2456, 0.0
        %2468 = vadd.xlane.f32.xlu0 %v2467
        %v2469 = vpop.xlane.xlu0 %2468
        %v2470 = vsel %vm1753, %v2458, 0.0
        %2471 = vadd.xlane.f32.xlu0 %v2470
        %v2472 = vpop.xlane.xlu0 %2471
        %v2473 = vsel %vm1753, %v2460, 0.0
        %2474 = vadd.xlane.f32.xlu0 %v2473
        %v2475 = vpop.xlane.xlu0 %2474
        %v2476 = vsel %vm1753, %v2462, 0.0
        %2477 = vadd.xlane.f32.xlu0 %v2476
        %v2478 = vpop.xlane.xlu0 %2477
        %v2479 = vadd.f32 %v2463, %v2469
        %v2480 = vadd.f32 %v2464, %v2472
        %v2481 = vadd.f32 %v2465, %v2475
        %v2482 = vadd.f32 %v2466, %v2478
        %v2483 = vpack.c.bf16 %v2456, %v2456
        %v2484 = vpack.c.bf16 %v2458, %v2458
        %v2485 = vpack.c.bf16 %v2460, %v2460
        %v2486 = vpack.c.bf16 %v2462, %v2462
        %v2488 = vsel %vm1753, %v2483, 0
        %v2491 = vsel %vm1757, %v2342, 0
        %2493 = vmatpush.bf16.msra.mxu0 0
        %2494 = vmatpush.bf16.msra.mxu0 0
        %2495 = vmatpush.bf16.msra.mxu0 0
        %2496 = vmatpush.bf16.msra.mxu0 0
        %2497 = vmatpush.bf16.msra.mxu0 0
        %2498 = vmatpush.bf16.msra.mxu0 0
        %2499 = vmatpush.bf16.msra.mxu0 0
        %2500 = vmatpush.bf16.msra.mxu0 %v2491
        %2501 = vmatmul.bf16.gmra.mxu0 %v2488
        %v2502 = vpop.f32.mrf.mxu0
        %v2503 = vadd.f32 0.0, %v2502
        %v2504 = vpop.f32.mrf.mxu0
        %2505 = vdwg.mxu0
        %v2507 = vsel %vm1753, %v2484, 0
        %v2510 = vsel %vm1757, %v2343, 0
        %2512 = vmatpush.bf16.msra.mxu0 0
        %2513 = vmatpush.bf16.msra.mxu0 0
        %2514 = vmatpush.bf16.msra.mxu0 0
        %2515 = vmatpush.bf16.msra.mxu0 0
        %2516 = vmatpush.bf16.msra.mxu0 0
        %2517 = vmatpush.bf16.msra.mxu0 0
        %2518 = vmatpush.bf16.msra.mxu0 0
        %2519 = vmatpush.bf16.msra.mxu0 %v2510
        %2520 = vmatmul.bf16.gmra.mxu0 %v2507
        %v2521 = vpop.f32.mrf.mxu0
        %v2522 = vadd.f32 0.0, %v2521
        %v2523 = vpop.f32.mrf.mxu0
        %2524 = vdwg.mxu0
        %v2526 = vsel %vm1753, %v2485, 0
        %v2529 = vsel %vm1757, %v2344, 0
        %2531 = vmatpush.bf16.msra.mxu0 0
        %2532 = vmatpush.bf16.msra.mxu0 0
        %2533 = vmatpush.bf16.msra.mxu0 0
        %2534 = vmatpush.bf16.msra.mxu0 0
        %2535 = vmatpush.bf16.msra.mxu0 0
        %2536 = vmatpush.bf16.msra.mxu0 0
        %2537 = vmatpush.bf16.msra.mxu0 0
        %2538 = vmatpush.bf16.msra.mxu0 %v2529
        %2539 = vmatmul.bf16.gmra.mxu0 %v2526
        %v2540 = vpop.f32.mrf.mxu0
        %v2541 = vadd.f32 0.0, %v2540
        %v2542 = vpop.f32.mrf.mxu0
        %2543 = vdwg.mxu0
        %v2545 = vsel %vm1753, %v2486, 0
        %v2548 = vsel %vm1757, %v2345, 0
        %2550 = vmatpush.bf16.msra.mxu0 0
        %2551 = vmatpush.bf16.msra.mxu0 0
        %2552 = vmatpush.bf16.msra.mxu0 0
        %2553 = vmatpush.bf16.msra.mxu0 0
        %2554 = vmatpush.bf16.msra.mxu0 0
        %2555 = vmatpush.bf16.msra.mxu0 0
        %2556 = vmatpush.bf16.msra.mxu0 0
        %2557 = vmatpush.bf16.msra.mxu0 %v2548
        %2558 = vmatmul.bf16.gmra.mxu0 %v2545
        %v2559 = vpop.f32.mrf.mxu0
        %v2560 = vadd.f32 0.0, %v2559
        %v2561 = vpop.f32.mrf.mxu0
        %2562 = vdwg.mxu0
        %v2563 = vadd.f32 %v2463, %v2503
        %v2564 = vadd.f32 %v2464, %v2522
        %v2565 = vadd.f32 %v2465, %v2541
        %v2566 = vadd.f32 %v2466, %v2560
        %v2567 = vrcp.pop %v2479
        %v2568 = vrcp.pop %v2480
        %v2569 = vrcp.pop %v2481
        %v2570 = vrcp.pop %v2482
        %v2571 = vmul.f32 %v2563, %v2567
        %v2572 = vmul.f32 %v2564, %v2568
        %v2573 = vmul.f32 %v2565, %v2569
        %v2574 = vmul.f32 %v2566, %v2570
        %v2575 = vrot.slane %v2573, 4
        %v2576 = vsel %vm1618, %v2575, %v2571
        %v2577 = vrot.slane %v2571, 4
        %v2578 = vsel %vm1618, %v2573, %v2577
        %v2580 = vunpack.c.l.s4 1983009808
        %v2581 = vunpack.c.0.s8 %v2580
        %v2582 = vperm.slane %v2576, %v2581
        %v2584 = vunpack.c.l.s4 1983009808
        %v2585 = vunpack.c.0.s8 %v2584
        %v2586 = vperm.slane %v2578, %v2585
        %v2587 = vrot.slane %v2574, 4
        %v2588 = vsel %vm1618, %v2587, %v2572
        %v2589 = vrot.slane %v2572, 4
        %v2590 = vsel %vm1618, %v2574, %v2589
        %v2592 = vunpack.c.l.s4 1983009808
        %v2593 = vunpack.c.0.s8 %v2592
        %v2594 = vperm.slane %v2588, %v2593
        %v2596 = vunpack.c.l.s4 1983009808
        %v2597 = vunpack.c.0.s8 %v2596
        %v2598 = vperm.slane %v2590, %v2597
        %v2599 = vrot.slane %v2594, 4
        %v2600 = vsel %vm1618, %v2599, %v2582
        %v2601 = vrot.slane %v2582, 4
        %v2602 = vsel %vm1618, %v2594, %v2601
        %v2604 = vunpack.c.l.s4 1934713408
        %v2605 = vunpack.c.0.s8 %v2604
        %v2606 = vperm.slane %v2600, %v2605
        %v2608 = vunpack.c.l.s4 1934713408
        %v2609 = vunpack.c.0.s8 %v2608
        %v2610 = vperm.slane %v2602, %v2609
        %v2611 = vrot.slane %v2598, 4
        %v2612 = vsel %vm1618, %v2611, %v2586
        %v2613 = vrot.slane %v2586, 4
        %v2614 = vsel %vm1618, %v2598, %v2613
        %v2616 = vunpack.c.l.s4 1934713408
        %v2617 = vunpack.c.0.s8 %v2616
        %v2618 = vperm.slane %v2612, %v2617
        %v2620 = vunpack.c.l.s4 1934713408
        %v2621 = vunpack.c.0.s8 %v2620
        %v2622 = vperm.slane %v2614, %v2621
        %v2623 = vrot.slane %v2606, 4
        %v2624 = vsel %vm1618, 0.0, %v2623
        %v2625 = vrot.slane %v2610, 4
        %v2626 = vsel %vm1618, 0.0, %v2625
        %v2627 = vrot.slane %v2618, 4
        %v2628 = vsel %vm1618, 0.0, %v2627
        %v2629 = vrot.slane %v2622, 4
        %v2630 = vsel %vm1618, 0.0, %v2629
        %v2631 = vsel %vm1618, %v2625, %v2606
        %v2633 = vunpack.c.l.s4 1983009808
        %v2634 = vunpack.c.0.s8 %v2633
        %v2635 = vperm.slane %v2631, %v2634
        %v2636 = vrot.slane %v2626, 4
        %v2637 = vsel %vm1618, %v2636, %v2624
        %v2639 = vunpack.c.l.s4 1983009808
        %v2640 = vunpack.c.0.s8 %v2639
        %v2641 = vperm.slane %v2637, %v2640
        %v2642 = vsel %vm1618, %v2629, %v2618
        %v2644 = vunpack.c.l.s4 1983009808
        %v2645 = vunpack.c.0.s8 %v2644
        %v2646 = vperm.slane %v2642, %v2645
        %v2647 = vrot.slane %v2630, 4
        %v2648 = vsel %vm1618, %v2647, %v2628
        %v2650 = vunpack.c.l.s4 1983009808
        %v2651 = vunpack.c.0.s8 %v2650
        %v2652 = vperm.slane %v2648, %v2651
        %v2653 = vrot.slane %v2641, 4
        %v2654 = vsel %vm1618, %v2653, %v2635
        %v2655 = vrot.slane %v2635, 4
        %v2656 = vsel %vm1618, %v2641, %v2655
        %v2658 = vunpack.c.l.s4 1934713408
        %v2659 = vunpack.c.0.s8 %v2658
        %v2660 = vperm.slane %v2654, %v2659
        %v2662 = vunpack.c.l.s4 1934713408
        %v2663 = vunpack.c.0.s8 %v2662
        %v2664 = vperm.slane %v2656, %v2663
        %v2665 = vrot.slane %v2652, 4
        %v2666 = vsel %vm1618, %v2665, %v2646
        %v2667 = vrot.slane %v2646, 4
        %v2668 = vsel %vm1618, %v2652, %v2667
        %v2670 = vunpack.c.l.s4 1934713408
        %v2671 = vunpack.c.0.s8 %v2670
        %v2672 = vperm.slane %v2666, %v2671
        %v2674 = vunpack.c.l.s4 1934713408
        %v2675 = vunpack.c.0.s8 %v2674
        %v2676 = vperm.slane %v2668, %v2675
        %v2677 = vrot.slane %v2672, 4
        %v2678 = vsel %vm1618, %v2677, %v2660
        %v2679 = vrot.slane %v2660, 4
        %v2680 = vsel %vm1618, %v2672, %v2679
        %v2681 = vrot.slane %v2676, 4
        %v2682 = vsel %vm1618, %v2681, %v2664
        %v2683 = vrot.slane %v2664, 4
        %v2684 = vsel %vm1618, %v2676, %v2683
        %2686 = vrot.lane.b32.xlu0 %v2680, 8
        %v2687 = vpop.permute.xlu0 %2686
        %2690 = vrot.lane.b32.xlu0 %v2682, 16
        %v2691 = vpop.permute.xlu0 %2690
        %2694 = vrot.lane.b32.xlu0 %v2684, 24
        %v2695 = vpop.permute.xlu0 %2694
        %v2697 = vsel %vm1753, %v2678, %v2687
        %v2698 = vsel %vm2102, %v2697, %v2691
        %v2699 = vsel %vm2104, %v2698, %v2695
        %v2700 = vpack.c.bf16 %v2699, %v2699
        %v2702 = vperm.slane %v2212, 0
        %v2708 = vunpack.c.l.b16 %v2208
        %v2709 = vunpack.c.l.b16 %v2209
        %v2710 = vunpack.c.l.b16 %v2210
        %v2711 = vunpack.c.l.b16 %v2211
        %v2712 = vpack.c.b16 %v2709, %v2708
        %v2713 = vpack.c.b16 %v2711, %v2710
        %v2717 = vsel %vm1526, %v2700, 0
        %2719 = vmatpush.bf16.msra.mxu0 0
        %2720 = vmatpush.bf16.msra.mxu0 0
        %2721 = vmatpush.bf16.msra.mxu0 0
        %2722 = vmatpush.bf16.msra.mxu0 0
        %2723 = vmatpush.bf16.msra.mxu0 0
        %2724 = vmatpush.bf16.msra.mxu0 0
        %2725 = vmatpush.bf16.msra.mxu0 %v2713
        %2726 = vmatpush.bf16.msra.mxu0 %v2712
        %2727 = vmatmul.bf16.gmra.mxu0 %v2717
        %v2728 = vpop.f32.mrf.mxu0
        %v2729 = vadd.f32 %v2702, %v2728
        %v2730 = vpop.f32.mrf.mxu0
        %2731 = vdwg.mxu0
        %v2732 = vadd.f32 %v2138, %v2729
        %v2733 = vld [vmem:[#allocation24] sm:$0x1]
        %v2734 = vld [vmem:[#allocation26] sm:$0x1]
        %v2735 = vsel %vm1526, %v2732, 0.0
        %2736 = vadd.xlane.f32.xlu0 %v2735
        %v2737 = vpop.xlane.xlu0 %2736
        %v2738 = vmul.f32 %v2737, %v1536
        %v2739 = vsub.f32 %v2732, %v2738
        %v2740 = vmul.f32 %v2739, %v2739
        %v2741 = vsel %vm1526, %v2740, 0.0
        %2742 = vadd.xlane.f32.xlu0 %v2741
        %v2743 = vpop.xlane.xlu0 %2742
        %v2744 = vmul.f32 %v2743, %v1536
        %v2745 = vadd.f32 %v2744, 1e-05
        %v2746 = vrsqrt.pop %v2745
        %v2747 = vmul.f32 %v2746, %v2745
        %v2748 = vmul.f32 %v2747, %v2746
        %v2749 = vmul.f32 0.5, %v2748
        %v2750 = vsub.f32 1.5, %v2749
        %v2751 = vmul.f32 %v2746, %v2750
        %vm2752 = vweird.f32 %v2745
        %vm2753 = vweird.f32 %v2746
        %vm2754 = vmor %vm2752, %vm2753
        %v2755 = vsel %vm2754, %v2746, %v2751
        %v2756 = vmul.f32 %v2739, %v2755
        %v2758 = vperm.slane %v2733, 0
        %v2760 = vmul.f32 %v2756, %v2758
        %v2762 = vperm.slane %v2734, 0
        %v2764 = vadd.f32 %v2760, %v2762
        %v2765 = vpack.c.bf16 %v2764, %v2764
        %v2766 = vld [vmem:[#allocation27] sm:$0xf]
        %v2767 = vld [vmem:[#allocation27 + $0x4] sm:$0xf]
        %v2768 = vld [vmem:[#allocation27 + $0x8] sm:$0xf]
        %v2769 = vld [vmem:[#allocation27 + $0xc] sm:$0xf]
        %v2770 = vld [vmem:[#allocation29] sm:$0x1]
        %v2772 = vperm.slane %v2770, 0
        %v2778 = vunpack.c.l.b16 %v2766
        %v2779 = vunpack.c.l.b16 %v2767
        %v2780 = vunpack.c.l.b16 %v2768
        %v2781 = vunpack.c.l.b16 %v2769
        %v2782 = vpack.c.b16 %v2779, %v2778
        %v2783 = vpack.c.b16 %v2781, %v2780
        %v2787 = vsel %vm1526, %v2765, 0
        %2789 = vmatpush.bf16.msra.mxu0 0
        %2790 = vmatpush.bf16.msra.mxu0 0
        %2791 = vmatpush.bf16.msra.mxu0 0
        %2792 = vmatpush.bf16.msra.mxu0 0
        %2793 = vmatpush.bf16.msra.mxu0 0
        %2794 = vmatpush.bf16.msra.mxu0 0
        %2795 = vmatpush.bf16.msra.mxu0 %v2783
        %2796 = vmatpush.bf16.msra.mxu0 %v2782
        %2797 = vmatmul.bf16.gmra.mxu0 %v2787
        %v2798 = vpop.f32.mrf.mxu0
        %v2799 = vadd.f32 %v2772, %v2798
        %v2800 = vpop.f32.mrf.mxu0
        %2801 = vdwg.mxu0
        %v2802 = vmax.f32 %v2799, 0.0
        %v2803 = vpack.c.bf16 %v2802, %v2802
        %v2804 = vld [vmem:[%s22] sm:$0xf]
        %v2805 = vld [vmem:[%s22 + $0x4] sm:$0xf]
        %v2806 = vld [vmem:[%s22 + $0x8] sm:$0xf]
        %v2807 = vld [vmem:[%s22 + $0xc] sm:$0xf]
        %v2808 = vld [vmem:[%s22 + $0x10] sm:$0xf]
        %v2809 = vld [vmem:[%s22 + $0x14] sm:$0xf]
        %v2810 = vld [vmem:[%s22 + $0x18] sm:$0xf]
        %v2811 = vld [vmem:[%s22 + $0x1c] sm:$0xf]
        %v2812 = vld [vmem:[%s23] sm:$0x1]
        %v2814 = vperm.slane %v2812, 0
        %v2824 = vunpack.c.l.b16 %v2804
        %v2825 = vunpack.c.l.b16 %v2805
        %v2826 = vunpack.c.l.b16 %v2806
        %v2827 = vunpack.c.l.b16 %v2807
        %v2828 = vunpack.c.l.b16 %v2808
        %v2829 = vunpack.c.l.b16 %v2809
        %v2830 = vunpack.c.l.b16 %v2810
        %v2831 = vunpack.c.l.b16 %v2811
        %v2832 = vpack.c.b16 %v2825, %v2824
        %v2833 = vpack.c.b16 %v2827, %v2826
        %v2834 = vpack.c.b16 %v2829, %v2828
        %v2835 = vpack.c.b16 %v2831, %v2830
        %vm2840 = vcmask 523264
        %v2842 = vsel %vm2840, %v2803, 0
        %2844 = vmatpush.bf16.msra.mxu0 0
        %2845 = vmatpush.bf16.msra.mxu0 0
        %2846 = vmatpush.bf16.msra.mxu0 0
        %2847 = vmatpush.bf16.msra.mxu0 0
        %2848 = vmatpush.bf16.msra.mxu0 %v2835
        %2849 = vmatpush.bf16.msra.mxu0 %v2834
        %2850 = vmatpush.bf16.msra.mxu0 %v2833
        %2851 = vmatpush.bf16.msra.mxu0 %v2832
        %2852 = vmatmul.bf16.gmra.mxu0 %v2842
        %v2853 = vpop.f32.mrf.mxu0
        %v2854 = vadd.f32 %v2814, %v2853
        %v2855 = vpop.f32.mrf.mxu0
        %2856 = vdwg.mxu0
        %v2857 = vadd.f32 %v2732, %v2854
        %2858 = vst.msk [vmem:[%s1030] sm:$0xff] %vm1526, %v2857
        %s2859 = sand.u32 %s596, 1
        %s2860 = scalar_lea.sflag [#allocation8], %s2859
        %s2861 = sand.u32 %s596, 1
        %s2862 = smul.addr %s2861, 8
        %s2863 = scalar_lea.vmem [#allocation30], %s2862
        // Predicated region
        $region181: #{tpu_custom_call.1} parent=115 // pred_check
          %p2864 = pneg %p606
        $region182: #{tpu_custom_call.1} parent=115 // pred_check_branch
          %2866 = sbr.rel (%p2864) target = $region184
        $region183: #{tpu_custom_call.1} parent=115 // pred_region
          %2868 = vsyncadd %s2860, 0
          %s2869 = sadd.s32 %s55, %s54
          %s2870 = smul.addr %s2869, 8
          %s2871 = scalar_lea.hbm %s24, %s2870
          %s2873 = sshll.u32 %s2863, 4
          %s2874 = int_to_ptr.vmem [resolvable:$true] %s2873
          %s2875 = sshll.u32 %s2871, 4
          %s2876 = int_to_ptr.hbm [resolvable:$true] %s2875
          %2878 = dma.vmem_to_hbm [thread:$0]  %s2874, 128, %s2876, %s2860
        $region184: #{tpu_custom_call.1} parent=115 // pred_fallthru
          _
      $region116: #{tpu_custom_call.1} parent=5 // pred_fallthru
        _
      %p2879 = scmp.le.s32.totalorder 2, %s45
      // Predicated region
      $region185: #{tpu_custom_call.1} parent=5 // pred_check
        %p2880 = pneg %p2879
      $region186: #{tpu_custom_call.1} parent=5 // pred_check_branch
        %2882 = sbr.rel (%p2880) target = $region188
      $region187: #{tpu_custom_call.1} parent=5 // pred_region
        %s2883 = ssub.s32 %s45, 2
        // Predicated region
        $region189: #{tpu_custom_call.1} parent=187 // pred_check
          %p2884 = pneg %p612
        $region190: #{tpu_custom_call.1} parent=187 // pred_check_branch
          %2886 = sbr.rel (%p2884) target = $region192
        $region191: #{tpu_custom_call.1} parent=187 // pred_region
          %s2887 = sand.u32 %s597, 1
          %s2888 = scalar_lea.sflag [#allocation8], %s2887
          %s2889 = sand.u32 %s597, 1
          %s2890 = smul.addr %s2889, 8
          %s2891 = scalar_lea.vmem [#allocation30], %s2890
          %2893 = dma.done %s2888, 128
        $region192: #{tpu_custom_call.1} parent=187 // pred_fallthru
          _
      $region188: #{tpu_custom_call.1} parent=5 // pred_fallthru
        _
    $region6: #{tpu_custom_call.1} parent=1 // loop_footer
      %s49 = sadd.s32 1, %s45
    $region7: #{tpu_custom_call.1} parent=1 // loop_footer_branch
      %44 = sbr.rel target = $region3
    $region8: #{tpu_custom_call.1} parent=1 // loop_exit
      _
    %2894 = vsyncpa [#allocation7], 1
    %s2895 = scalar_lea.sflag [#allocation7], 1
    %2896 = vsyncpa %s2895, 1
    %2897 = vsyncpa [#allocation10], 1
    %s2898 = scalar_lea.sflag [#allocation10], 1
    %2899 = vsyncpa %s2898, 1
    %2900 = vsyncpa [#allocation13], 1
    %2901 = vsyncpa [#allocation16], 1
    %2902 = vsyncpa [#allocation19], 1
    %2903 = vsyncpa [#allocation22], 1
    %2904 = vsyncpa [#allocation25], 1
    %2905 = vsyncpa [#allocation28], 1
    %2906 = vsyncpa [#allocation8], 1
    %s2907 = scalar_lea.sflag [#allocation8], 1
    %2908 = vsyncpa %s2907, 1

</llo_original>
